<compile_context>
chip_gen: v5e
topology: v5e:2x2
jax: 0.10.0
libtpu: 0.0.40
codegen_flags: <defaults>
</compile_context>

<pallas_src>
import functools

import numpy as np
import jax
import jax.numpy as jnp
from jax.experimental import pallas as pl
from jax.experimental.pallas import tpu as pltpu


def _dw_valid_mask(H: int, W: int) -> np.ndarray:
    """(9, H*W) 0/1 masks: mask[a*3+b, p]=1 iff pixel p's (a-1, b-1) neighbour
    is inside the image (implements zero padding of the 3x3 depthwise conv)."""
    m = np.zeros((9, H * W), np.float32)
    idx = np.arange(H * W)
    r, c = idx // W, idx % W
    for a in range(3):
        for b in range(3):
            di, dj = a - 1, b - 1
            ok = (r + di >= 0) & (r + di < H) & (c + dj >= 0) & (c + dj < W)
            m[a * 3 + b] = ok.astype(np.float32)
    return m


def _attention_kernel(xq_ref, w1_ref, b1_ref, wdwt_ref, bdw_ref, mask_ref,
                      temp_ref, wproj_ref, bproj_ref, o_ref,
                      *, H: int, W: int, num_heads: int):
    # xq_ref  : (1, 2C, HW)   stacked [x ; q_in], spatial flattened into lanes
    # w1_ref  : (3C, 2C)      block-diag [W_kv 0 ; 0 W_q]
    # b1_ref  : (3C, 1)
    # wdwt_ref: (9, 3C, 1)    depthwise 3x3 tap weights, tap-major
    # bdw_ref : (3C, 1)
    # mask_ref: (9, 1, HW)    zero-padding masks per tap
    # temp_ref: (heads, 1, 1) per-head temperature
    # wproj   : (C, C), bproj: (C, 1)
    # o_ref   : (1, C, HW)
    HW = H * W
    C = wproj_ref.shape[0]
    ch = C // num_heads

    xq = xq_ref[0]                                              # (2C, HW)

    # Fused 1x1 convs: rows [0:2C) = kv(x), rows [2C:3C) = q(q_in).   (MXU)
    z = jnp.dot(w1_ref[...], xq,
                preferred_element_type=jnp.float32) + b1_ref[...]   # (3C, HW)

    # Fused 3x3 depthwise conv (padding=1) over all 3C channels:
    # 9 statically shifted lane-rolls, zero-fill via precomputed masks. (VPU)
    acc = jnp.zeros_like(z)
    for a in range(3):
        for bb in range(3):
            t = a * 3 + bb
            s = (a - 1) * W + (bb - 1)                  # flat source offset
            shifted = z if s == 0 else jnp.roll(z, -s, axis=1)
            acc = acc + wdwt_ref[t] * (shifted * mask_ref[t])
    z = acc + bdw_ref[...]                                       # (3C, HW)

    k = z[:C, :]
    v = z[C:2 * C, :]
    q = z[2 * C:, :]

    outs = []
    for h in range(num_heads):                                   # static unroll
        rows = slice(h * ch, (h + 1) * ch)
        qh, kh, vh = q[rows, :], k[rows, :], v[rows, :]

        # L2-normalize over the spatial (lane) dimension, eps=1e-12.
        qn = qh / jnp.maximum(
            jnp.sqrt(jnp.sum(qh * qh, axis=-1, keepdims=True)), 1e-12)
        kn = kh / jnp.maximum(
            jnp.sqrt(jnp.sum(kh * kh, axis=-1, keepdims=True)), 1e-12)

        # q @ k^T without any transpose: contract the last dims on the MXU.
        attn = jax.lax.dot_general(
            qn, kn, dimension_numbers=(((1,), (1,)), ((), ())),
            preferred_element_type=jnp.float32)                  # (ch, ch)
        attn = attn * temp_ref[h]                                # (1,1) bcast

        attn = attn - jnp.max(attn, axis=-1, keepdims=True)
        e = jnp.exp(attn)
        p = e / jnp.sum(e, axis=-1, keepdims=True)

        outs.append(jnp.dot(p, vh,
                            preferred_element_type=jnp.float32))  # (ch, HW)

    out = jnp.concatenate(outs, axis=0)                          # (C, HW)

    # Output 1x1 projection.                                      (MXU)
    out = jnp.dot(wproj_ref[...], out,
                  preferred_element_type=jnp.float32) + bproj_ref[...]
    o_ref[0] = out.astype(o_ref.dtype)


def attention_forward(x, q, params, num_heads):
    """x, q: (B, C, H, W) float32. Returns (B, C, H, W)."""
    B, C, H, W = x.shape
    HW = H * W
    f32 = jnp.float32

    # Lane-dense stacked input: [x ; q] along channels, spatial flattened.
    xq = jnp.concatenate([x.reshape(B, C, HW), q.reshape(B, C, HW)], axis=1)

    # Block-diagonal fused 1x1-conv weight / bias.
    w1 = jnp.zeros((3 * C, 2 * C), f32)
    w1 = w1.at[:2 * C, :C].set(params['w_kv'].astype(f32))
    w1 = w1.at[2 * C:, C:].set(params['w_q'].astype(f32))
    b1 = jnp.concatenate([params['b_kv'], params['b_q']]).astype(f32)[:, None]

    # Fused depthwise-conv weights, tap-major: (9, 3C, 1).
    wdw = jnp.concatenate([params['w_kv_dw'].reshape(2 * C, 9),
                           params['w_q_dw'].reshape(C, 9)], axis=0).astype(f32)
    wdw_taps = jnp.transpose(wdw, (1, 0))[:, :, None]
    bdw = jnp.concatenate([params['b_kv_dw'],
                           params['b_q_dw']]).astype(f32)[:, None]

    temp = params['temperature'].astype(f32).reshape(num_heads, 1, 1)
    wproj = params['w_proj'].astype(f32)
    bproj = params['b_proj'].astype(f32)[:, None]
    dwmask = jnp.asarray(_dw_valid_mask(H, W))[:, None, :]        # (9, 1, HW)

    kernel = functools.partial(_attention_kernel, H=H, W=W, num_heads=num_heads)

    out = pl.pallas_call(
        kernel,
        out_shape=jax.ShapeDtypeStruct((B, C, HW), x.dtype),
        grid_spec=pltpu.PrefetchScalarGridSpec(
            num_scalar_prefetch=0,
            grid=(B,),
            in_specs=[
                pl.BlockSpec((1, 2 * C, HW), lambda b: (b, 0, 0)),
                pl.BlockSpec((3 * C, 2 * C), lambda b: (0, 0)),
                pl.BlockSpec((3 * C, 1), lambda b: (0, 0)),
                pl.BlockSpec((9, 3 * C, 1), lambda b: (0, 0, 0)),
                pl.BlockSpec((3 * C, 1), lambda b: (0, 0)),
                pl.BlockSpec((9, 1, HW), lambda b: (0, 0, 0)),
                pl.BlockSpec((num_heads, 1, 1), lambda b: (0, 0, 0)),
                pl.BlockSpec((C, C), lambda b: (0, 0)),
                pl.BlockSpec((C, 1), lambda b: (0, 0)),
            ],
            out_specs=pl.BlockSpec((1, C, HW), lambda b: (b, 0, 0)),
        ),
        compiler_params=pltpu.CompilerParams(
            dimension_semantics=("parallel",)),
    )(xq, w1, b1, wdw_taps, bdw, dwmask, temp, wproj, bproj)

    return out.reshape(B, C, H, W)


def _reference(x, q_in, p, num_heads):
    """Pure-JAX reference mirroring the PyTorch forward exactly."""
    B, C, H, W = x.shape
    ch = C // num_heads
    HW = H * W

    def conv1x1(z, w, b):
        return jnp.einsum('oc,bchw->bohw', w, z) + b[None, :, None, None]

    def dwconv3x3(z, w, b):
        zp = jnp.pad(z, ((0, 0), (0, 0), (1, 1), (1, 1)))
        out = jnp.zeros_like(z)
        for a in range(3):
            for bb in range(3):
                out = out + w[None, :, a, bb, None, None] * zp[:, :, a:a + H, bb:bb + W]
        return out + b[None, :, None, None]

    kv = dwconv3x3(conv1x1(x, p['w_kv'], p['b_kv']), p['w_kv_dw'], p['b_kv_dw'])
    k, v = kv[:, :C], kv[:, C:]
    q = dwconv3x3(conv1x1(q_in, p['w_q'], p['b_q']), p['w_q_dw'], p['b_q_dw'])

    def heads(z):
        return z.reshape(B, num_heads, ch, HW)

    def l2norm(z):
        return z / jnp.maximum(jnp.linalg.norm(z, axis=-1, keepdims=True), 1e-12)

    qh, kh, vh = l2norm(heads(q)), l2norm(heads(k)), heads(v)
    attn = jnp.einsum('bhcs,bhds->bhcd', qh, kh)
    attn = attn * p['temperature'][None, :, None, None]
    attn = jax.nn.softmax(attn, axis=-1)
    out = jnp.einsum('bhcd,bhds->bhcs', attn, vh).reshape(B, C, H, W)
    return conv1x1(out, p['w_proj'], p['b_proj'])


if __name__ == "__main__":
    jax.config.update("jax_default_matmul_precision", "highest")

    B, C, H, W = 2, 16, 16, 16
    num_heads = 2

    key = jax.random.PRNGKey(0)
    keys = jax.random.split(key, 13)

    def u(k, shape, fan_in):
        bound = 1.0 / np.sqrt(fan_in)
        return jax.random.uniform(k, shape, jnp.float32, -bound, bound)

    x = jax.random.normal(keys[0], (B, C, H, W), jnp.float32)
    q = jax.random.normal(keys[1], (B, C, H, W), jnp.float32)

    params = dict(
        w_kv=u(keys[2], (2 * C, C), C),
        b_kv=u(keys[3], (2 * C,), C),
        w_kv_dw=u(keys[4], (2 * C, 3, 3), 9),
        b_kv_dw=u(keys[5], (2 * C,), 9),
        w_q=u(keys[6], (C, C), C),
        b_q=u(keys[7], (C,), C),
        w_q_dw=u(keys[8], (C, 3, 3), 9),
        b_q_dw=u(keys[9], (C,), 9),
        temperature=jax.random.uniform(keys[10], (num_heads,), jnp.float32,
                                       0.5, 1.5),
        w_proj=u(keys[11], (C, C), C),
        b_proj=u(keys[12], (C,), C),
    )

    out = attention_forward(x, q, params, num_heads)
    out = jax.block_until_ready(out)

    ref = jax.block_until_ready(_reference(x, q, params, num_heads))
    assert out.shape == (B, C, H, W)
    np.testing.assert_allclose(np.asarray(out), np.asarray(ref),
                               rtol=1e-4, atol=1e-4)
    print("KERNEL_OK")
</pallas_src>

<mosaic_0001>
module attributes {stable_mosaic.version = 11 : i64} {
  func.func @_attention_kernel(%arg0: i32, %arg1: memref<1x32x256xf32, #tpu.memory_space<vmem>>, %arg2: memref<48x32xf32, #tpu.memory_space<vmem>>, %arg3: memref<48x1xf32, #tpu.memory_space<vmem>>, %arg4: memref<9x48x1xf32, #tpu.memory_space<vmem>>, %arg5: memref<48x1xf32, #tpu.memory_space<vmem>>, %arg6: memref<9x1x256xf32, #tpu.memory_space<vmem>>, %arg7: memref<2x1x1xf32, #tpu.memory_space<vmem>>, %arg8: memref<16x16xf32, #tpu.memory_space<vmem>>, %arg9: memref<16x1xf32, #tpu.memory_space<vmem>>, %arg10: memref<1x16x256xf32, #tpu.memory_space<vmem>>) attributes {dimension_semantics = [#tpu.dimension_semantics<parallel>], iteration_bounds = array<i64: 2>, scalar_prefetch = 0 : i64, scratch_operands = 0 : i64, tpu.core_type = #tpu.core_type<tc>, window_params = [{transform_indices = @transform_0, window_bounds = array<i64: 1, 32, 256>}, {pipeline_mode = #tpu.pipeline_mode<synchronous>, transform_indices = @transform_1, window_bounds = array<i64: 48, 32>}, {pipeline_mode = #tpu.pipeline_mode<synchronous>, transform_indices = @transform_2, window_bounds = array<i64: 48, 1>}, {pipeline_mode = #tpu.pipeline_mode<synchronous>, transform_indices = @transform_3, window_bounds = array<i64: 9, 48, 1>}, {pipeline_mode = #tpu.pipeline_mode<synchronous>, transform_indices = @transform_4, window_bounds = array<i64: 48, 1>}, {pipeline_mode = #tpu.pipeline_mode<synchronous>, transform_indices = @transform_5, window_bounds = array<i64: 9, 1, 256>}, {pipeline_mode = #tpu.pipeline_mode<synchronous>, transform_indices = @transform_6, window_bounds = array<i64: 2, 1, 1>}, {pipeline_mode = #tpu.pipeline_mode<synchronous>, transform_indices = @transform_7, window_bounds = array<i64: 16, 16>}, {pipeline_mode = #tpu.pipeline_mode<synchronous>, transform_indices = @transform_8, window_bounds = array<i64: 16, 1>}, {transform_indices = @transform_9, window_bounds = array<i64: 1, 16, 256>}]} {
    %c0 = arith.constant 0 : index
    %c0_0 = arith.constant 0 : index
    %c0_1 = arith.constant 0 : index
    %0 = vector.load %arg1[%c0, %c0_0, %c0_1] : memref<1x32x256xf32, #tpu.memory_space<vmem>>, vector<1x32x256xf32>
    %1 = vector.shape_cast %0 : vector<1x32x256xf32> to vector<32x256xf32>
    %c0_2 = arith.constant 0 : index
    %c0_3 = arith.constant 0 : index
    %2 = vector.load %arg2[%c0_2, %c0_3] : memref<48x32xf32, #tpu.memory_space<vmem>>, vector<48x32xf32>
    %cst = arith.constant dense<0.000000e+00> : vector<48x256xf32>
    %3 = tpu.matmul %2, %1, %cst {dimension_numbers = #tpu.dot_dimension_numbers<[1], [0], [0], [1], [0, 0, 1, 1], [], []>, precision = #tpu.contract_precision<fp32>} : vector<48x32xf32>, vector<32x256xf32>, vector<48x256xf32> -> vector<48x256xf32>
    %c0_4 = arith.constant 0 : index
    %c0_5 = arith.constant 0 : index
    %4 = vector.load %arg3[%c0_4, %c0_5] : memref<48x1xf32, #tpu.memory_space<vmem>>, vector<48x1xf32>
    %5 = vector.broadcast %4 : vector<48x1xf32> to vector<48x256xf32>
    %6 = arith.addf %3, %5 : vector<48x256xf32>
    %cst_6 = arith.constant 0.000000e+00 : f32
    %7 = vector.broadcast %cst_6 : f32 to vector<48x256xf32>
    %8 = vector.extract_strided_slice %6 {offsets = [0, 239], sizes = [48, 17], strides = [1, 1]} : vector<48x256xf32> to vector<48x17xf32>
    %9 = vector.extract_strided_slice %6 {offsets = [0, 0], sizes = [48, 239], strides = [1, 1]} : vector<48x256xf32> to vector<48x239xf32>
    %10 = tpu.concatenate %8, %9 in 1 : vector<48x17xf32>, vector<48x239xf32> -> vector<48x256xf32>
    %c0_7 = arith.constant 0 : index
    %c0_8 = arith.constant 0 : index
    %c0_9 = arith.constant 0 : index
    %11 = vector.load %arg4[%c0_7, %c0_8, %c0_9] : memref<9x48x1xf32, #tpu.memory_space<vmem>>, vector<1x48x1xf32>
    %12 = vector.shape_cast %11 : vector<1x48x1xf32> to vector<48x1xf32>
    %c0_10 = arith.constant 0 : index
    %c0_11 = arith.constant 0 : index
    %c0_12 = arith.constant 0 : index
    %13 = vector.load %arg6[%c0_10, %c0_11, %c0_12] : memref<9x1x256xf32, #tpu.memory_space<vmem>>, vector<1x1x256xf32>
    %14 = vector.shape_cast %13 : vector<1x1x256xf32> to vector<1x256xf32>
    %15 = vector.broadcast %14 : vector<1x256xf32> to vector<48x256xf32>
    %16 = arith.mulf %10, %15 : vector<48x256xf32>
    %17 = vector.broadcast %12 : vector<48x1xf32> to vector<48x256xf32>
    %18 = arith.mulf %17, %16 : vector<48x256xf32>
    %19 = arith.addf %7, %18 : vector<48x256xf32>
    %20 = vector.extract_strided_slice %6 {offsets = [0, 240], sizes = [48, 16], strides = [1, 1]} : vector<48x256xf32> to vector<48x16xf32>
    %21 = vector.extract_strided_slice %6 {offsets = [0, 0], sizes = [48, 240], strides = [1, 1]} : vector<48x256xf32> to vector<48x240xf32>
    %22 = tpu.concatenate %20, %21 in 1 : vector<48x16xf32>, vector<48x240xf32> -> vector<48x256xf32>
    %c1 = arith.constant 1 : index
    %c0_13 = arith.constant 0 : index
    %c0_14 = arith.constant 0 : index
    %23 = vector.load %arg4[%c1, %c0_13, %c0_14] : memref<9x48x1xf32, #tpu.memory_space<vmem>>, vector<1x48x1xf32>
    %24 = vector.shape_cast %23 : vector<1x48x1xf32> to vector<48x1xf32>
    %c1_15 = arith.constant 1 : index
    %c0_16 = arith.constant 0 : index
    %c0_17 = arith.constant 0 : index
    %25 = vector.load %arg6[%c1_15, %c0_16, %c0_17] : memref<9x1x256xf32, #tpu.memory_space<vmem>>, vector<1x1x256xf32>
    %26 = vector.shape_cast %25 : vector<1x1x256xf32> to vector<1x256xf32>
    %27 = vector.broadcast %26 : vector<1x256xf32> to vector<48x256xf32>
    %28 = arith.mulf %22, %27 : vector<48x256xf32>
    %29 = vector.broadcast %24 : vector<48x1xf32> to vector<48x256xf32>
    %30 = arith.mulf %29, %28 : vector<48x256xf32>
    %31 = arith.addf %19, %30 : vector<48x256xf32>
    %32 = vector.extract_strided_slice %6 {offsets = [0, 241], sizes = [48, 15], strides = [1, 1]} : vector<48x256xf32> to vector<48x15xf32>
    %33 = vector.extract_strided_slice %6 {offsets = [0, 0], sizes = [48, 241], strides = [1, 1]} : vector<48x256xf32> to vector<48x241xf32>
    %34 = tpu.concatenate %32, %33 in 1 : vector<48x15xf32>, vector<48x241xf32> -> vector<48x256xf32>
    %c2 = arith.constant 2 : index
    %c0_18 = arith.constant 0 : index
    %c0_19 = arith.constant 0 : index
    %35 = vector.load %arg4[%c2, %c0_18, %c0_19] : memref<9x48x1xf32, #tpu.memory_space<vmem>>, vector<1x48x1xf32>
    %36 = vector.shape_cast %35 : vector<1x48x1xf32> to vector<48x1xf32>
    %c2_20 = arith.constant 2 : index
    %c0_21 = arith.constant 0 : index
    %c0_22 = arith.constant 0 : index
    %37 = vector.load %arg6[%c2_20, %c0_21, %c0_22] : memref<9x1x256xf32, #tpu.memory_space<vmem>>, vector<1x1x256xf32>
    %38 = vector.shape_cast %37 : vector<1x1x256xf32> to vector<1x256xf32>
    %39 = vector.broadcast %38 : vector<1x256xf32> to vector<48x256xf32>
    %40 = arith.mulf %34, %39 : vector<48x256xf32>
    %41 = vector.broadcast %36 : vector<48x1xf32> to vector<48x256xf32>
    %42 = arith.mulf %41, %40 : vector<48x256xf32>
    %43 = arith.addf %31, %42 : vector<48x256xf32>
    %44 = vector.extract_strided_slice %6 {offsets = [0, 255], sizes = [48, 1], strides = [1, 1]} : vector<48x256xf32> to vector<48x1xf32>
    %45 = vector.extract_strided_slice %6 {offsets = [0, 0], sizes = [48, 255], strides = [1, 1]} : vector<48x256xf32> to vector<48x255xf32>
    %46 = tpu.concatenate %44, %45 in 1 : vector<48x1xf32>, vector<48x255xf32> -> vector<48x256xf32>
    %c3 = arith.constant 3 : index
    %c0_23 = arith.constant 0 : index
    %c0_24 = arith.constant 0 : index
    %47 = vector.load %arg4[%c3, %c0_23, %c0_24] : memref<9x48x1xf32, #tpu.memory_space<vmem>>, vector<1x48x1xf32>
    %48 = vector.shape_cast %47 : vector<1x48x1xf32> to vector<48x1xf32>
    %c3_25 = arith.constant 3 : index
    %c0_26 = arith.constant 0 : index
    %c0_27 = arith.constant 0 : index
    %49 = vector.load %arg6[%c3_25, %c0_26, %c0_27] : memref<9x1x256xf32, #tpu.memory_space<vmem>>, vector<1x1x256xf32>
    %50 = vector.shape_cast %49 : vector<1x1x256xf32> to vector<1x256xf32>
    %51 = vector.broadcast %50 : vector<1x256xf32> to vector<48x256xf32>
    %52 = arith.mulf %46, %51 : vector<48x256xf32>
    %53 = vector.broadcast %48 : vector<48x1xf32> to vector<48x256xf32>
    %54 = arith.mulf %53, %52 : vector<48x256xf32>
    %55 = arith.addf %43, %54 : vector<48x256xf32>
    %c4 = arith.constant 4 : index
    %c0_28 = arith.constant 0 : index
    %c0_29 = arith.constant 0 : index
    %56 = vector.load %arg4[%c4, %c0_28, %c0_29] : memref<9x48x1xf32, #tpu.memory_space<vmem>>, vector<1x48x1xf32>
    %57 = vector.shape_cast %56 : vector<1x48x1xf32> to vector<48x1xf32>
    %c4_30 = arith.constant 4 : index
    %c0_31 = arith.constant 0 : index
    %c0_32 = arith.constant 0 : index
    %58 = vector.load %arg6[%c4_30, %c0_31, %c0_32] : memref<9x1x256xf32, #tpu.memory_space<vmem>>, vector<1x1x256xf32>
    %59 = vector.shape_cast %58 : vector<1x1x256xf32> to vector<1x256xf32>
    %60 = vector.broadcast %59 : vector<1x256xf32> to vector<48x256xf32>
    %61 = arith.mulf %6, %60 : vector<48x256xf32>
    %62 = vector.broadcast %57 : vector<48x1xf32> to vector<48x256xf32>
    %63 = arith.mulf %62, %61 : vector<48x256xf32>
    %64 = arith.addf %55, %63 : vector<48x256xf32>
    %65 = vector.extract_strided_slice %6 {offsets = [0, 1], sizes = [48, 255], strides = [1, 1]} : vector<48x256xf32> to vector<48x255xf32>
    %66 = vector.extract_strided_slice %6 {offsets = [0, 0], sizes = [48, 1], strides = [1, 1]} : vector<48x256xf32> to vector<48x1xf32>
    %67 = tpu.concatenate %65, %66 in 1 : vector<48x255xf32>, vector<48x1xf32> -> vector<48x256xf32>
    %c5 = arith.constant 5 : index
    %c0_33 = arith.constant 0 : index
    %c0_34 = arith.constant 0 : index
    %68 = vector.load %arg4[%c5, %c0_33, %c0_34] : memref<9x48x1xf32, #tpu.memory_space<vmem>>, vector<1x48x1xf32>
    %69 = vector.shape_cast %68 : vector<1x48x1xf32> to vector<48x1xf32>
    %c5_35 = arith.constant 5 : index
    %c0_36 = arith.constant 0 : index
    %c0_37 = arith.constant 0 : index
    %70 = vector.load %arg6[%c5_35, %c0_36, %c0_37] : memref<9x1x256xf32, #tpu.memory_space<vmem>>, vector<1x1x256xf32>
    %71 = vector.shape_cast %70 : vector<1x1x256xf32> to vector<1x256xf32>
    %72 = vector.broadcast %71 : vector<1x256xf32> to vector<48x256xf32>
    %73 = arith.mulf %67, %72 : vector<48x256xf32>
    %74 = vector.broadcast %69 : vector<48x1xf32> to vector<48x256xf32>
    %75 = arith.mulf %74, %73 : vector<48x256xf32>
    %76 = arith.addf %64, %75 : vector<48x256xf32>
    %77 = vector.extract_strided_slice %6 {offsets = [0, 15], sizes = [48, 241], strides = [1, 1]} : vector<48x256xf32> to vector<48x241xf32>
    %78 = vector.extract_strided_slice %6 {offsets = [0, 0], sizes = [48, 15], strides = [1, 1]} : vector<48x256xf32> to vector<48x15xf32>
    %79 = tpu.concatenate %77, %78 in 1 : vector<48x241xf32>, vector<48x15xf32> -> vector<48x256xf32>
    %c6 = arith.constant 6 : index
    %c0_38 = arith.constant 0 : index
    %c0_39 = arith.constant 0 : index
    %80 = vector.load %arg4[%c6, %c0_38, %c0_39] : memref<9x48x1xf32, #tpu.memory_space<vmem>>, vector<1x48x1xf32>
    %81 = vector.shape_cast %80 : vector<1x48x1xf32> to vector<48x1xf32>
    %c6_40 = arith.constant 6 : index
    %c0_41 = arith.constant 0 : index
    %c0_42 = arith.constant 0 : index
    %82 = vector.load %arg6[%c6_40, %c0_41, %c0_42] : memref<9x1x256xf32, #tpu.memory_space<vmem>>, vector<1x1x256xf32>
    %83 = vector.shape_cast %82 : vector<1x1x256xf32> to vector<1x256xf32>
    %84 = vector.broadcast %83 : vector<1x256xf32> to vector<48x256xf32>
    %85 = arith.mulf %79, %84 : vector<48x256xf32>
    %86 = vector.broadcast %81 : vector<48x1xf32> to vector<48x256xf32>
    %87 = arith.mulf %86, %85 : vector<48x256xf32>
    %88 = arith.addf %76, %87 : vector<48x256xf32>
    %89 = vector.extract_strided_slice %6 {offsets = [0, 16], sizes = [48, 240], strides = [1, 1]} : vector<48x256xf32> to vector<48x240xf32>
    %90 = vector.extract_strided_slice %6 {offsets = [0, 0], sizes = [48, 16], strides = [1, 1]} : vector<48x256xf32> to vector<48x16xf32>
    %91 = tpu.concatenate %89, %90 in 1 : vector<48x240xf32>, vector<48x16xf32> -> vector<48x256xf32>
    %c7 = arith.constant 7 : index
    %c0_43 = arith.constant 0 : index
    %c0_44 = arith.constant 0 : index
    %92 = vector.load %arg4[%c7, %c0_43, %c0_44] : memref<9x48x1xf32, #tpu.memory_space<vmem>>, vector<1x48x1xf32>
    %93 = vector.shape_cast %92 : vector<1x48x1xf32> to vector<48x1xf32>
    %c7_45 = arith.constant 7 : index
    %c0_46 = arith.constant 0 : index
    %c0_47 = arith.constant 0 : index
    %94 = vector.load %arg6[%c7_45, %c0_46, %c0_47] : memref<9x1x256xf32, #tpu.memory_space<vmem>>, vector<1x1x256xf32>
    %95 = vector.shape_cast %94 : vector<1x1x256xf32> to vector<1x256xf32>
    %96 = vector.broadcast %95 : vector<1x256xf32> to vector<48x256xf32>
    %97 = arith.mulf %91, %96 : vector<48x256xf32>
    %98 = vector.broadcast %93 : vector<48x1xf32> to vector<48x256xf32>
    %99 = arith.mulf %98, %97 : vector<48x256xf32>
    %100 = arith.addf %88, %99 : vector<48x256xf32>
    %101 = vector.extract_strided_slice %6 {offsets = [0, 17], sizes = [48, 239], strides = [1, 1]} : vector<48x256xf32> to vector<48x239xf32>
    %102 = vector.extract_strided_slice %6 {offsets = [0, 0], sizes = [48, 17], strides = [1, 1]} : vector<48x256xf32> to vector<48x17xf32>
    %103 = tpu.concatenate %101, %102 in 1 : vector<48x239xf32>, vector<48x17xf32> -> vector<48x256xf32>
    %c8 = arith.constant 8 : index
    %c0_48 = arith.constant 0 : index
    %c0_49 = arith.constant 0 : index
    %104 = vector.load %arg4[%c8, %c0_48, %c0_49] : memref<9x48x1xf32, #tpu.memory_space<vmem>>, vector<1x48x1xf32>
    %105 = vector.shape_cast %104 : vector<1x48x1xf32> to vector<48x1xf32>
    %c8_50 = arith.constant 8 : index
    %c0_51 = arith.constant 0 : index
    %c0_52 = arith.constant 0 : index
    %106 = vector.load %arg6[%c8_50, %c0_51, %c0_52] : memref<9x1x256xf32, #tpu.memory_space<vmem>>, vector<1x1x256xf32>
    %107 = vector.shape_cast %106 : vector<1x1x256xf32> to vector<1x256xf32>
    %108 = vector.broadcast %107 : vector<1x256xf32> to vector<48x256xf32>
    %109 = arith.mulf %103, %108 : vector<48x256xf32>
    %110 = vector.broadcast %105 : vector<48x1xf32> to vector<48x256xf32>
    %111 = arith.mulf %110, %109 : vector<48x256xf32>
    %112 = arith.addf %100, %111 : vector<48x256xf32>
    %c0_53 = arith.constant 0 : index
    %c0_54 = arith.constant 0 : index
    %113 = vector.load %arg5[%c0_53, %c0_54] : memref<48x1xf32, #tpu.memory_space<vmem>>, vector<48x1xf32>
    %114 = vector.broadcast %113 : vector<48x1xf32> to vector<48x256xf32>
    %115 = arith.addf %112, %114 : vector<48x256xf32>
    %116 = vector.extract_strided_slice %115 {offsets = [0, 0], sizes = [16, 256], strides = [1, 1]} : vector<48x256xf32> to vector<16x256xf32>
    %117 = vector.extract_strided_slice %115 {offsets = [16, 0], sizes = [16, 256], strides = [1, 1]} : vector<48x256xf32> to vector<16x256xf32>
    %118 = vector.extract_strided_slice %115 {offsets = [32, 0], sizes = [16, 256], strides = [1, 1]} : vector<48x256xf32> to vector<16x256xf32>
    %119 = vector.extract_strided_slice %118 {offsets = [0, 0], sizes = [8, 256], strides = [1, 1]} : vector<16x256xf32> to vector<8x256xf32>
    %120 = vector.extract_strided_slice %116 {offsets = [0, 0], sizes = [8, 256], strides = [1, 1]} : vector<16x256xf32> to vector<8x256xf32>
    %121 = vector.extract_strided_slice %117 {offsets = [0, 0], sizes = [8, 256], strides = [1, 1]} : vector<16x256xf32> to vector<8x256xf32>
    %122 = arith.mulf %119, %119 : vector<8x256xf32>
    %cst_55 = arith.constant dense<0.000000e+00> : vector<8xf32>
    %123 = vector.multi_reduction <add>, %122, %cst_55 [1] : vector<8x256xf32> to vector<8xf32>
    %124 = vector.shape_cast %123 : vector<8xf32> to vector<8x1xf32>
    %125 = math.sqrt %124 : vector<8x1xf32>
    %cst_56 = arith.constant 9.99999996E-13 : f32
    %126 = vector.broadcast %cst_56 : f32 to vector<8x1xf32>
    %127 = arith.maximumf %125, %126 : vector<8x1xf32>
    %128 = vector.broadcast %127 : vector<8x1xf32> to vector<8x256xf32>
    %129 = arith.divf %119, %128 : vector<8x256xf32>
    %130 = arith.mulf %120, %120 : vector<8x256xf32>
    %cst_57 = arith.constant dense<0.000000e+00> : vector<8xf32>
    %131 = vector.multi_reduction <add>, %130, %cst_57 [1] : vector<8x256xf32> to vector<8xf32>
    %132 = vector.shape_cast %131 : vector<8xf32> to vector<8x1xf32>
    %133 = math.sqrt %132 : vector<8x1xf32>
    %cst_58 = arith.constant 9.99999996E-13 : f32
    %134 = vector.broadcast %cst_58 : f32 to vector<8x1xf32>
    %135 = arith.maximumf %133, %134 : vector<8x1xf32>
    %136 = vector.broadcast %135 : vector<8x1xf32> to vector<8x256xf32>
    %137 = arith.divf %120, %136 : vector<8x256xf32>
    %cst_59 = arith.constant dense<0.000000e+00> : vector<8x8xf32>
    %138 = tpu.matmul %129, %137, %cst_59 {dimension_numbers = #tpu.dot_dimension_numbers<[1], [1], [0], [0], [0, 0, 1, 0], [], []>, precision = #tpu.contract_precision<fp32>} : vector<8x256xf32>, vector<8x256xf32>, vector<8x8xf32> -> vector<8x8xf32>
    %c0_60 = arith.constant 0 : index
    %c0_61 = arith.constant 0 : index
    %c0_62 = arith.constant 0 : index
    %139 = vector.load %arg7[%c0_60, %c0_61, %c0_62] : memref<2x1x1xf32, #tpu.memory_space<vmem>>, vector<1x1x1xf32>
    %140 = vector.shape_cast %139 : vector<1x1x1xf32> to vector<1x1xf32>
    %141 = vector.broadcast %140 : vector<1x1xf32> to vector<8x8xf32>
    %142 = arith.mulf %138, %141 : vector<8x8xf32>
    %cst_63 = arith.constant dense<0xFF800000> : vector<8xf32>
    %143 = vector.multi_reduction <maximumf>, %142, %cst_63 [1] : vector<8x8xf32> to vector<8xf32>
    %144 = vector.shape_cast %143 : vector<8xf32> to vector<8x1xf32>
    %145 = vector.broadcast %144 : vector<8x1xf32> to vector<8x8xf32>
    %146 = arith.subf %142, %145 : vector<8x8xf32>
    %147 = math.exp %146 : vector<8x8xf32>
    %cst_64 = arith.constant dense<0.000000e+00> : vector<8xf32>
    %148 = vector.multi_reduction <add>, %147, %cst_64 [1] : vector<8x8xf32> to vector<8xf32>
    %149 = vector.shape_cast %148 : vector<8xf32> to vector<8x1xf32>
    %150 = vector.broadcast %149 : vector<8x1xf32> to vector<8x8xf32>
    %151 = arith.divf %147, %150 : vector<8x8xf32>
    %cst_65 = arith.constant dense<0.000000e+00> : vector<8x256xf32>
    %152 = tpu.matmul %151, %121, %cst_65 {dimension_numbers = #tpu.dot_dimension_numbers<[1], [0], [0], [1], [0, 0, 1, 1], [], []>, precision = #tpu.contract_precision<fp32>} : vector<8x8xf32>, vector<8x256xf32>, vector<8x256xf32> -> vector<8x256xf32>
    %153 = vector.extract_strided_slice %118 {offsets = [8, 0], sizes = [8, 256], strides = [1, 1]} : vector<16x256xf32> to vector<8x256xf32>
    %154 = vector.extract_strided_slice %116 {offsets = [8, 0], sizes = [8, 256], strides = [1, 1]} : vector<16x256xf32> to vector<8x256xf32>
    %155 = vector.extract_strided_slice %117 {offsets = [8, 0], sizes = [8, 256], strides = [1, 1]} : vector<16x256xf32> to vector<8x256xf32>
    %156 = arith.mulf %153, %153 : vector<8x256xf32>
    %cst_66 = arith.constant dense<0.000000e+00> : vector<8xf32>
    %157 = vector.multi_reduction <add>, %156, %cst_66 [1] : vector<8x256xf32> to vector<8xf32>
    %158 = vector.shape_cast %157 : vector<8xf32> to vector<8x1xf32>
    %159 = math.sqrt %158 : vector<8x1xf32>
    %cst_67 = arith.constant 9.99999996E-13 : f32
    %160 = vector.broadcast %cst_67 : f32 to vector<8x1xf32>
    %161 = arith.maximumf %159, %160 : vector<8x1xf32>
    %162 = vector.broadcast %161 : vector<8x1xf32> to vector<8x256xf32>
    %163 = arith.divf %153, %162 : vector<8x256xf32>
    %164 = arith.mulf %154, %154 : vector<8x256xf32>
    %cst_68 = arith.constant dense<0.000000e+00> : vector<8xf32>
    %165 = vector.multi_reduction <add>, %164, %cst_68 [1] : vector<8x256xf32> to vector<8xf32>
    %166 = vector.shape_cast %165 : vector<8xf32> to vector<8x1xf32>
    %167 = math.sqrt %166 : vector<8x1xf32>
    %cst_69 = arith.constant 9.99999996E-13 : f32
    %168 = vector.broadcast %cst_69 : f32 to vector<8x1xf32>
    %169 = arith.maximumf %167, %168 : vector<8x1xf32>
    %170 = vector.broadcast %169 : vector<8x1xf32> to vector<8x256xf32>
    %171 = arith.divf %154, %170 : vector<8x256xf32>
    %cst_70 = arith.constant dense<0.000000e+00> : vector<8x8xf32>
    %172 = tpu.matmul %163, %171, %cst_70 {dimension_numbers = #tpu.dot_dimension_numbers<[1], [1], [0], [0], [0, 0, 1, 0], [], []>, precision = #tpu.contract_precision<fp32>} : vector<8x256xf32>, vector<8x256xf32>, vector<8x8xf32> -> vector<8x8xf32>
    %c1_71 = arith.constant 1 : index
    %c0_72 = arith.constant 0 : index
    %c0_73 = arith.constant 0 : index
    %173 = vector.load %arg7[%c1_71, %c0_72, %c0_73] : memref<2x1x1xf32, #tpu.memory_space<vmem>>, vector<1x1x1xf32>
    %174 = vector.shape_cast %173 : vector<1x1x1xf32> to vector<1x1xf32>
    %175 = vector.broadcast %174 : vector<1x1xf32> to vector<8x8xf32>
    %176 = arith.mulf %172, %175 : vector<8x8xf32>
    %cst_74 = arith.constant dense<0xFF800000> : vector<8xf32>
    %177 = vector.multi_reduction <maximumf>, %176, %cst_74 [1] : vector<8x8xf32> to vector<8xf32>
    %178 = vector.shape_cast %177 : vector<8xf32> to vector<8x1xf32>
    %179 = vector.broadcast %178 : vector<8x1xf32> to vector<8x8xf32>
    %180 = arith.subf %176, %179 : vector<8x8xf32>
    %181 = math.exp %180 : vector<8x8xf32>
    %cst_75 = arith.constant dense<0.000000e+00> : vector<8xf32>
    %182 = vector.multi_reduction <add>, %181, %cst_75 [1] : vector<8x8xf32> to vector<8xf32>
    %183 = vector.shape_cast %182 : vector<8xf32> to vector<8x1xf32>
    %184 = vector.broadcast %183 : vector<8x1xf32> to vector<8x8xf32>
    %185 = arith.divf %181, %184 : vector<8x8xf32>
    %cst_76 = arith.constant dense<0.000000e+00> : vector<8x256xf32>
    %186 = tpu.matmul %185, %155, %cst_76 {dimension_numbers = #tpu.dot_dimension_numbers<[1], [0], [0], [1], [0, 0, 1, 1], [], []>, precision = #tpu.contract_precision<fp32>} : vector<8x8xf32>, vector<8x256xf32>, vector<8x256xf32> -> vector<8x256xf32>
    %187 = tpu.concatenate %152, %186 in 0 : vector<8x256xf32>, vector<8x256xf32> -> vector<16x256xf32>
    %c0_77 = arith.constant 0 : index
    %c0_78 = arith.constant 0 : index
    %188 = vector.load %arg8[%c0_77, %c0_78] : memref<16x16xf32, #tpu.memory_space<vmem>>, vector<16x16xf32>
    %cst_79 = arith.constant dense<0.000000e+00> : vector<16x256xf32>
    %189 = tpu.matmul %188, %187, %cst_79 {dimension_numbers = #tpu.dot_dimension_numbers<[1], [0], [0], [1], [0, 0, 1, 1], [], []>, precision = #tpu.contract_precision<fp32>} : vector<16x16xf32>, vector<16x256xf32>, vector<16x256xf32> -> vector<16x256xf32>
    %c0_80 = arith.constant 0 : index
    %c0_81 = arith.constant 0 : index
    %190 = vector.load %arg9[%c0_80, %c0_81] : memref<16x1xf32, #tpu.memory_space<vmem>>, vector<16x1xf32>
    %191 = vector.broadcast %190 : vector<16x1xf32> to vector<16x256xf32>
    %192 = arith.addf %189, %191 : vector<16x256xf32>
    %c0_82 = arith.constant 0 : index
    %c0_83 = arith.constant 0 : index
    %c0_84 = arith.constant 0 : index
    %193 = vector.load %arg10[%c0_82, %c0_83, %c0_84] : memref<1x16x256xf32, #tpu.memory_space<vmem>>, vector<1x16x256xf32>
    %194 = vector.shape_cast %193 : vector<1x16x256xf32> to vector<16x256xf32>
    %195 = vector.shape_cast %192 : vector<16x256xf32> to vector<1x16x256xf32>
    tpu.vector_store %arg10[%c0_82, %c0_83, %c0_84], %195 {strides = array<i32>} : memref<1x16x256xf32, #tpu.memory_space<vmem>>, vector<1x16x256xf32>,
    return
  }
  func.func @transform_0(%arg0: i32) -> (i32, i32, i32) {
    %c0_i32 = arith.constant 0 : i32
    %c0_i32_0 = arith.constant 0 : i32
    %c0_i32_1 = arith.constant 0 : i32
    return %arg0, %c0_i32, %c0_i32_0 : i32, i32, i32
  }
  func.func @transform_1(%arg0: i32) -> (i32, i32) {
    %c0_i32 = arith.constant 0 : i32
    %c0_i32_0 = arith.constant 0 : i32
    %c0_i32_1 = arith.constant 0 : i32
    return %c0_i32, %c0_i32_0 : i32, i32
  }
  func.func @transform_2(%arg0: i32) -> (i32, i32) {
    %c0_i32 = arith.constant 0 : i32
    %c0_i32_0 = arith.constant 0 : i32
    %c0_i32_1 = arith.constant 0 : i32
    return %c0_i32, %c0_i32_0 : i32, i32
  }
  func.func @transform_3(%arg0: i32) -> (i32, i32, i32) {
    %c0_i32 = arith.constant 0 : i32
    %c0_i32_0 = arith.constant 0 : i32
    %c0_i32_1 = arith.constant 0 : i32
    %c0_i32_2 = arith.constant 0 : i32
    return %c0_i32, %c0_i32_0, %c0_i32_1 : i32, i32, i32
  }
  func.func @transform_4(%arg0: i32) -> (i32, i32) {
    %c0_i32 = arith.constant 0 : i32
    %c0_i32_0 = arith.constant 0 : i32
    %c0_i32_1 = arith.constant 0 : i32
    return %c0_i32, %c0_i32_0 : i32, i32
  }
  func.func @transform_5(%arg0: i32) -> (i32, i32, i32) {
    %c0_i32 = arith.constant 0 : i32
    %c0_i32_0 = arith.constant 0 : i32
    %c0_i32_1 = arith.constant 0 : i32
    %c0_i32_2 = arith.constant 0 : i32
    return %c0_i32, %c0_i32_0, %c0_i32_1 : i32, i32, i32
  }
  func.func @transform_6(%arg0: i32) -> (i32, i32, i32) {
    %c0_i32 = arith.constant 0 : i32
    %c0_i32_0 = arith.constant 0 : i32
    %c0_i32_1 = arith.constant 0 : i32
    %c0_i32_2 = arith.constant 0 : i32
    return %c0_i32, %c0_i32_0, %c0_i32_1 : i32, i32, i32
  }
  func.func @transform_7(%arg0: i32) -> (i32, i32) {
    %c0_i32 = arith.constant 0 : i32
    %c0_i32_0 = arith.constant 0 : i32
    %c0_i32_1 = arith.constant 0 : i32
    return %c0_i32, %c0_i32_0 : i32, i32
  }
  func.func @transform_8(%arg0: i32) -> (i32, i32) {
    %c0_i32 = arith.constant 0 : i32
    %c0_i32_0 = arith.constant 0 : i32
    %c0_i32_1 = arith.constant 0 : i32
    return %c0_i32, %c0_i32_0 : i32, i32
  }
  func.func @transform_9(%arg0: i32) -> (i32, i32, i32) {
    %c0_i32 = arith.constant 0 : i32
    %c0_i32_0 = arith.constant 0 : i32
    %c0_i32_1 = arith.constant 0 : i32
    return %arg0, %c0_i32, %c0_i32_0 : i32, i32, i32
  }
}

</mosaic_0001>

<llo_original>
// kernel: tpu_custom_call.1
$region0: #{tpu_custom_call.1}
  #allocation0 [shape = 'u32[]', space=smem, size = 0x4, offset = 0x4, fixed_abs, tag = 'smem constant byte address 0x4 - core index']
  #allocation1 [shape = 'u32[72,128]{1,0:T(1,128)}', space=vmem, size = 0x9000, scoped, tag = 'internal scratch']
  %s0 = inlined_call_operand.vmem [shape: f32[2,32,256], index: 0, kind: input, shape index: {}]
  %s1 = inlined_call_operand.vmem [shape: f32[48,32], index: 1, kind: input, shape index: {}]
  %s2 = inlined_call_operand.vmem [shape: f32[48,1], index: 2, kind: input, shape index: {}]
  %s3 = inlined_call_operand.vmem [shape: f32[9,48,1], index: 3, kind: input, shape index: {}]
  %s4 = inlined_call_operand.vmem [shape: f32[48,1], index: 4, kind: input, shape index: {}]
  %s5 = inlined_call_operand.vmem [shape: f32[9,1,256], index: 5, kind: input, shape index: {}]
  %s6 = inlined_call_operand.vmem [shape: f32[2,1,1], index: 6, kind: input, shape index: {}]
  %s7 = inlined_call_operand.vmem [shape: f32[16,16], index: 7, kind: input, shape index: {}]
  %s8 = inlined_call_operand.vmem [shape: f32[16,1], index: 8, kind: input, shape index: {}]
  %s9 = inlined_call_operand.hbm [shape: f32[2,16,256], index: 9, kind: output, shape index: {}]
  %s10 = sld [smem:[#allocation0]]
  $region69: #{tpu_custom_call.1} parent=0
    _
  %s12 = ssub.s32 1, %s10
  %s13 = scalar_select 0, %s12, %s10
  $region1: #{tpu_custom_call.1} parent=0
    #allocation2 [shape = 'u8[32768]{0}', space=vmem, size = 0x8000, scoped, tag = 'output window, operand 0']
    #allocation3 [shape = 's32[2]{0}', space=sflag, size = 0x8, scoped, tag = 'scoped memory for tpu_custom_call.1']
    %14 = vsyncpa [#allocation3], 0
    %s15 = scalar_lea.sflag [#allocation3], 1
    %16 = vsyncpa %s15, 0
    loop: start=0, step=1, limit=4
    $region2: #{tpu_custom_call.1} parent=1 // loop_pre_header
      _
    $region3: #{tpu_custom_call.1} parent=1 // loop_header
      %s18 = sphi 0, %s22
      %p19 = scmp.ge.s32.totalorder %s18, 4
      %s28 = sphi 0, %s30
      %s31 = sphi 0, %s28
      %s32 = sphi 0, %s31
      %s48 = sphi 0, %s32
      %s52 = sphi 0, %s52
      %s54 = sphi 0, %s52
      %s55 = sphi 0, %s54
      %s69 = sphi 0, %s55
      %s73 = sphi 0, %s73
      %s75 = sphi 0, %s73
      %s76 = sphi 0, %s75
      %s90 = sphi 0, %s76
      %s94 = sphi 0, %s94
      %s96 = sphi 0, %s94
      %s97 = sphi 0, %s96
      %s111 = sphi 0, %s97
      %s115 = sphi 0, %s115
      %s117 = sphi 0, %s115
      %s118 = sphi 0, %s117
      %s132 = sphi 0, %s118
      %s136 = sphi 0, %s136
      %s138 = sphi 0, %s136
      %s139 = sphi 0, %s138
      %s153 = sphi 0, %s139
      %s157 = sphi 0, %s157
      %s159 = sphi 0, %s157
      %s160 = sphi 0, %s159
      %s174 = sphi 0, %s160
      %s178 = sphi 0, %s178
      %s180 = sphi 0, %s178
      %s181 = sphi 0, %s180
      %s195 = sphi 0, %s181
      %s199 = sphi 0, %s199
      %s201 = sphi 0, %s199
      %s202 = sphi 0, %s201
      %s216 = sphi 0, %s202
      %s222 = sphi 0, %s224
      %s225 = sphi 0, %s222
      %s226 = sphi 0, %s225
      %s242 = sphi 0, %s226
    $region4: #{tpu_custom_call.1} parent=1 // loop_header_branch
      %21 = sbr.rel (%p19) target = $region8
    $region5: #{tpu_custom_call.1} parent=1 // loop_body
      %s23 = ssub.s32 %s18, 1
      %s24 = ssub.s32 %s18, 2
      %s25 = sadd.s32 %s18, 1
      %s26 = ssub.s32 %s18, %s25
      %p27 = scmp.eq.s32.totalorder %s26, 0
      %s29 = sadd.s32 %s28, 1
      %s30 = scalar_select %p27, %s28, %s29
      %p33 = pneg %p27
      %p34 = scmp.eq.s32.totalorder %s18, 1
      %p35 = por %p33, %p34
      %p36 = scmp.ne.s32.totalorder %s28, %s31
      %p37 = scmp.eq.s32.totalorder %s18, 0
      %p38 = por %p36, %p37
      %p39 = scmp.ne.s32.totalorder %s28, %s31
      %p40 = scmp.eq.s32.totalorder %s23, 1
      %p41 = por %p39, %p40
      %p42 = scmp.ne.s32.totalorder %s31, %s32
      %p43 = scmp.eq.s32.totalorder %s23, 0
      %p44 = por %p42, %p43
      %p45 = scmp.ne.s32.totalorder %s31, %s32
      %p46 = scmp.eq.s32.totalorder %s24, 1
      %p47 = por %p45, %p46
      %p49 = scmp.ne.s32.totalorder %s32, %s48
      %p50 = scmp.eq.s32.totalorder %s24, 0
      %p51 = por %p49, %p50
      %s53 = sadd.s32 %s52, 1
      %p56 = scmp.eq.s32.totalorder %s18, 1
      %p57 = scmp.ne.s32.totalorder %s52, %s54
      %p58 = scmp.eq.s32.totalorder %s18, 0
      %p59 = por %p57, %p58
      %p60 = scmp.ne.s32.totalorder %s52, %s54
      %p61 = scmp.eq.s32.totalorder %s23, 1
      %p62 = por %p60, %p61
      %p63 = scmp.ne.s32.totalorder %s54, %s55
      %p64 = scmp.eq.s32.totalorder %s23, 0
      %p65 = por %p63, %p64
      %p66 = scmp.ne.s32.totalorder %s54, %s55
      %p67 = scmp.eq.s32.totalorder %s24, 1
      %p68 = por %p66, %p67
      %p70 = scmp.ne.s32.totalorder %s55, %s69
      %p71 = scmp.eq.s32.totalorder %s24, 0
      %p72 = por %p70, %p71
      %s74 = sadd.s32 %s73, 1
      %p77 = scmp.eq.s32.totalorder %s18, 1
      %p78 = scmp.ne.s32.totalorder %s73, %s75
      %p79 = scmp.eq.s32.totalorder %s18, 0
      %p80 = por %p78, %p79
      %p81 = scmp.ne.s32.totalorder %s73, %s75
      %p82 = scmp.eq.s32.totalorder %s23, 1
      %p83 = por %p81, %p82
      %p84 = scmp.ne.s32.totalorder %s75, %s76
      %p85 = scmp.eq.s32.totalorder %s23, 0
      %p86 = por %p84, %p85
      %p87 = scmp.ne.s32.totalorder %s75, %s76
      %p88 = scmp.eq.s32.totalorder %s24, 1
      %p89 = por %p87, %p88
      %p91 = scmp.ne.s32.totalorder %s76, %s90
      %p92 = scmp.eq.s32.totalorder %s24, 0
      %p93 = por %p91, %p92
      %s95 = sadd.s32 %s94, 1
      %p98 = scmp.eq.s32.totalorder %s18, 1
      %p99 = scmp.ne.s32.totalorder %s94, %s96
      %p100 = scmp.eq.s32.totalorder %s18, 0
      %p101 = por %p99, %p100
      %p102 = scmp.ne.s32.totalorder %s94, %s96
      %p103 = scmp.eq.s32.totalorder %s23, 1
      %p104 = por %p102, %p103
      %p105 = scmp.ne.s32.totalorder %s96, %s97
      %p106 = scmp.eq.s32.totalorder %s23, 0
      %p107 = por %p105, %p106
      %p108 = scmp.ne.s32.totalorder %s96, %s97
      %p109 = scmp.eq.s32.totalorder %s24, 1
      %p110 = por %p108, %p109
      %p112 = scmp.ne.s32.totalorder %s97, %s111
      %p113 = scmp.eq.s32.totalorder %s24, 0
      %p114 = por %p112, %p113
      %s116 = sadd.s32 %s115, 1
      %p119 = scmp.eq.s32.totalorder %s18, 1
      %p120 = scmp.ne.s32.totalorder %s115, %s117
      %p121 = scmp.eq.s32.totalorder %s18, 0
      %p122 = por %p120, %p121
      %p123 = scmp.ne.s32.totalorder %s115, %s117
      %p124 = scmp.eq.s32.totalorder %s23, 1
      %p125 = por %p123, %p124
      %p126 = scmp.ne.s32.totalorder %s117, %s118
      %p127 = scmp.eq.s32.totalorder %s23, 0
      %p128 = por %p126, %p127
      %p129 = scmp.ne.s32.totalorder %s117, %s118
      %p130 = scmp.eq.s32.totalorder %s24, 1
      %p131 = por %p129, %p130
      %p133 = scmp.ne.s32.totalorder %s118, %s132
      %p134 = scmp.eq.s32.totalorder %s24, 0
      %p135 = por %p133, %p134
      %s137 = sadd.s32 %s136, 1
      %p140 = scmp.eq.s32.totalorder %s18, 1
      %p141 = scmp.ne.s32.totalorder %s136, %s138
      %p142 = scmp.eq.s32.totalorder %s18, 0
      %p143 = por %p141, %p142
      %p144 = scmp.ne.s32.totalorder %s136, %s138
      %p145 = scmp.eq.s32.totalorder %s23, 1
      %p146 = por %p144, %p145
      %p147 = scmp.ne.s32.totalorder %s138, %s139
      %p148 = scmp.eq.s32.totalorder %s23, 0
      %p149 = por %p147, %p148
      %p150 = scmp.ne.s32.totalorder %s138, %s139
      %p151 = scmp.eq.s32.totalorder %s24, 1
      %p152 = por %p150, %p151
      %p154 = scmp.ne.s32.totalorder %s139, %s153
      %p155 = scmp.eq.s32.totalorder %s24, 0
      %p156 = por %p154, %p155
      %s158 = sadd.s32 %s157, 1
      %p161 = scmp.eq.s32.totalorder %s18, 1
      %p162 = scmp.ne.s32.totalorder %s157, %s159
      %p163 = scmp.eq.s32.totalorder %s18, 0
      %p164 = por %p162, %p163
      %p165 = scmp.ne.s32.totalorder %s157, %s159
      %p166 = scmp.eq.s32.totalorder %s23, 1
      %p167 = por %p165, %p166
      %p168 = scmp.ne.s32.totalorder %s159, %s160
      %p169 = scmp.eq.s32.totalorder %s23, 0
      %p170 = por %p168, %p169
      %p171 = scmp.ne.s32.totalorder %s159, %s160
      %p172 = scmp.eq.s32.totalorder %s24, 1
      %p173 = por %p171, %p172
      %p175 = scmp.ne.s32.totalorder %s160, %s174
      %p176 = scmp.eq.s32.totalorder %s24, 0
      %p177 = por %p175, %p176
      %s179 = sadd.s32 %s178, 1
      %p182 = scmp.eq.s32.totalorder %s18, 1
      %p183 = scmp.ne.s32.totalorder %s178, %s180
      %p184 = scmp.eq.s32.totalorder %s18, 0
      %p185 = por %p183, %p184
      %p186 = scmp.ne.s32.totalorder %s178, %s180
      %p187 = scmp.eq.s32.totalorder %s23, 1
      %p188 = por %p186, %p187
      %p189 = scmp.ne.s32.totalorder %s180, %s181
      %p190 = scmp.eq.s32.totalorder %s23, 0
      %p191 = por %p189, %p190
      %p192 = scmp.ne.s32.totalorder %s180, %s181
      %p193 = scmp.eq.s32.totalorder %s24, 1
      %p194 = por %p192, %p193
      %p196 = scmp.ne.s32.totalorder %s181, %s195
      %p197 = scmp.eq.s32.totalorder %s24, 0
      %p198 = por %p196, %p197
      %s200 = sadd.s32 %s199, 1
      %p203 = scmp.eq.s32.totalorder %s18, 1
      %p204 = scmp.ne.s32.totalorder %s199, %s201
      %p205 = scmp.eq.s32.totalorder %s18, 0
      %p206 = por %p204, %p205
      %p207 = scmp.ne.s32.totalorder %s199, %s201
      %p208 = scmp.eq.s32.totalorder %s23, 1
      %p209 = por %p207, %p208
      %p210 = scmp.ne.s32.totalorder %s201, %s202
      %p211 = scmp.eq.s32.totalorder %s23, 0
      %p212 = por %p210, %p211
      %p213 = scmp.ne.s32.totalorder %s201, %s202
      %p214 = scmp.eq.s32.totalorder %s24, 1
      %p215 = por %p213, %p214
      %p217 = scmp.ne.s32.totalorder %s202, %s216
      %p218 = scmp.eq.s32.totalorder %s24, 0
      %p219 = por %p217, %p218
      %s220 = ssub.s32 %s18, %s25
      %p221 = scmp.eq.s32.totalorder %s220, 0
      %s223 = sadd.s32 %s222, 1
      %s224 = scalar_select %p221, %s222, %s223
      %p227 = pneg %p221
      %p228 = scmp.eq.s32.totalorder %s18, 1
      %p229 = por %p227, %p228
      %p230 = scmp.ne.s32.totalorder %s222, %s225
      %p231 = scmp.eq.s32.totalorder %s18, 0
      %p232 = por %p230, %p231
      %p233 = scmp.ne.s32.totalorder %s222, %s225
      %p234 = scmp.eq.s32.totalorder %s23, 1
      %p235 = por %p233, %p234
      %p236 = scmp.ne.s32.totalorder %s225, %s226
      %p237 = scmp.eq.s32.totalorder %s23, 0
      %p238 = por %p236, %p237
      %p239 = scmp.ne.s32.totalorder %s225, %s226
      %p240 = scmp.eq.s32.totalorder %s24, 1
      %p241 = por %p239, %p240
      %p243 = scmp.ne.s32.totalorder %s226, %s242
      %p244 = scmp.eq.s32.totalorder %s24, 0
      %p245 = por %p243, %p244
      %p246 = scmp.le.s32.totalorder 1, %s18
      %p247 = scmp.lt.s32.totalorder %s18, 3
      %p248 = pnand %p246, %p247
      %p249 = pneg %p248
      // Predicated region
      $region9: #{tpu_custom_call.1} parent=5 // pred_check
        _
      $region10: #{tpu_custom_call.1} parent=5 // pred_check_branch
        %251 = sbr.rel (%p248) target = $region12
      $region11: #{tpu_custom_call.1} parent=5 // pred_region
        %s252 = ssub.s32 %s18, 1
        // Predicated region
        $region13: #{tpu_custom_call.1} parent=11 // pred_check
          %p253 = pneg %p65
        $region14: #{tpu_custom_call.1} parent=11 // pred_check_branch
          %255 = sbr.rel (%p253) target = $region16
        $region15: #{tpu_custom_call.1} parent=11 // pred_region
          _
        $region16: #{tpu_custom_call.1} parent=11 // pred_fallthru
          _
        // Predicated region
        $region17: #{tpu_custom_call.1} parent=11 // pred_check
          %p256 = pneg %p86
        $region18: #{tpu_custom_call.1} parent=11 // pred_check_branch
          %258 = sbr.rel (%p256) target = $region20
        $region19: #{tpu_custom_call.1} parent=11 // pred_region
          _
        $region20: #{tpu_custom_call.1} parent=11 // pred_fallthru
          _
        // Predicated region
        $region21: #{tpu_custom_call.1} parent=11 // pred_check
          %p259 = pneg %p107
        $region22: #{tpu_custom_call.1} parent=11 // pred_check_branch
          %261 = sbr.rel (%p259) target = $region24
        $region23: #{tpu_custom_call.1} parent=11 // pred_region
          _
        $region24: #{tpu_custom_call.1} parent=11 // pred_fallthru
          _
        // Predicated region
        $region25: #{tpu_custom_call.1} parent=11 // pred_check
          %p262 = pneg %p128
        $region26: #{tpu_custom_call.1} parent=11 // pred_check_branch
          %264 = sbr.rel (%p262) target = $region28
        $region27: #{tpu_custom_call.1} parent=11 // pred_region
          _
        $region28: #{tpu_custom_call.1} parent=11 // pred_fallthru
          _
        // Predicated region
        $region29: #{tpu_custom_call.1} parent=11 // pred_check
          %p265 = pneg %p149
        $region30: #{tpu_custom_call.1} parent=11 // pred_check_branch
          %267 = sbr.rel (%p265) target = $region32
        $region31: #{tpu_custom_call.1} parent=11 // pred_region
          _
        $region32: #{tpu_custom_call.1} parent=11 // pred_fallthru
          _
        // Predicated region
        $region33: #{tpu_custom_call.1} parent=11 // pred_check
          %p268 = pneg %p170
        $region34: #{tpu_custom_call.1} parent=11 // pred_check_branch
          %270 = sbr.rel (%p268) target = $region36
        $region35: #{tpu_custom_call.1} parent=11 // pred_region
          _
        $region36: #{tpu_custom_call.1} parent=11 // pred_fallthru
          _
        // Predicated region
        $region37: #{tpu_custom_call.1} parent=11 // pred_check
          %p271 = pneg %p191
        $region38: #{tpu_custom_call.1} parent=11 // pred_check_branch
          %273 = sbr.rel (%p271) target = $region40
        $region39: #{tpu_custom_call.1} parent=11 // pred_region
          _
        $region40: #{tpu_custom_call.1} parent=11 // pred_fallthru
          _
        // Predicated region
        $region41: #{tpu_custom_call.1} parent=11 // pred_check
          %p274 = pneg %p212
        $region42: #{tpu_custom_call.1} parent=11 // pred_check_branch
          %276 = sbr.rel (%p274) target = $region44
        $region43: #{tpu_custom_call.1} parent=11 // pred_region
          _
        $region44: #{tpu_custom_call.1} parent=11 // pred_fallthru
          _
      $region12: #{tpu_custom_call.1} parent=5 // pred_fallthru
        _
      %p277 = scmp.lt.s32.totalorder %s18, 2
      // Predicated region
      $region45: #{tpu_custom_call.1} parent=5 // pred_check
        %p278 = pneg %p277
      $region46: #{tpu_custom_call.1} parent=5 // pred_check_branch
        %280 = sbr.rel (%p278) target = $region48
      $region47: #{tpu_custom_call.1} parent=5 // pred_region
        // Predicated region
        $region49: #{tpu_custom_call.1} parent=47 // pred_check
          %p281 = pneg %p38
        $region50: #{tpu_custom_call.1} parent=47 // pred_check_branch
          %283 = sbr.rel (%p281) target = $region52
        $region51: #{tpu_custom_call.1} parent=47 // pred_region
          %p284 = scmp.lt.s32.totalorder %s18, 1
          %s285 = scalar_select %p284, %s18, 1
          %s286 = smul.addr %s285, 8
          %s287 = smul.addr %s286, 8
          %s288 = scalar_lea.vmem %s0, %s287
        $region52: #{tpu_custom_call.1} parent=47 // pred_fallthru
          _
      $region48: #{tpu_custom_call.1} parent=5 // pred_fallthru
        _
      %p289 = scmp.le.s32.totalorder 1, %s18
      %p290 = scmp.lt.s32.totalorder %s18, 3
      %p291 = pnand %p289, %p290
      %p292 = pneg %p291
      // Predicated region
      $region53: #{tpu_custom_call.1} parent=5 // pred_check
        _
      $region54: #{tpu_custom_call.1} parent=5 // pred_check_branch
        %294 = sbr.rel (%p291) target = $region56
      $region55: #{tpu_custom_call.1} parent=5 // pred_region
        %s295 = ssub.s32 %s18, 1
        %p296 = scmp.lt.s32.totalorder %s23, 1
        %s297 = scalar_select %p296, %s23, 1
        %s298 = smul.addr %s297, 8
        %s299 = smul.addr %s298, 8
        %s300 = scalar_lea.vmem %s0, %s299
        %p301 = pneg %p44
        %p302 = pneg %p41
        %p303 = pneg %p65
        %p304 = pneg %p62
        %p305 = pneg %p86
        %p306 = pneg %p83
        %p307 = pneg %p107
        %p308 = pneg %p104
        %p309 = pneg %p128
        %p310 = pneg %p125
        %p311 = pneg %p149
        %p312 = pneg %p146
        %p313 = pneg %p170
        %p314 = pneg %p167
        %p315 = pneg %p191
        %p316 = pneg %p188
        %p317 = pneg %p212
        %p318 = pneg %p209
        %p319 = pneg %p238
        %p320 = pneg %p235
        %s321 = sand.u32 %s225, 1
        %s322 = scalar_lea.sflag [#allocation3], %s321
        %s323 = sand.u32 %s225, 1
        %s324 = smul.addr %s323, 32
        %s325 = scalar_lea.vmem [#allocation2], %s324
        %p326 = scmp.lt.s32.totalorder %s23, 1
        %s327 = scalar_select %p326, %s23, 1
        %s328 = smul.addr %s327, 8
        %s329 = smul.addr %s328, 8
        %s330 = scalar_lea.vmem %s0, %s329
        %v331 = vld [vmem:[%s330] sm:$0xff]
        %v332 = vld [vmem:[%s330 + $0x8] sm:$0xff]
        %v333 = vld [vmem:[%s330 + $0x10] sm:$0xff]
        %v334 = vld [vmem:[%s330 + $0x18] sm:$0xff]
        %v335 = vld [vmem:[%s330 + $0x20] sm:$0xff]
        %v336 = vld [vmem:[%s330 + $0x28] sm:$0xff]
        %v337 = vld [vmem:[%s330 + $0x30] sm:$0xff]
        %v338 = vld [vmem:[%s330 + $0x38] sm:$0xff]
        %v339 = vld [vmem:[%s1] sm:$0xff]
        %v340 = vld [vmem:[%s1 + $0x8] sm:$0xff]
        %v341 = vld [vmem:[%s1 + $0x10] sm:$0xff]
        %v342 = vld [vmem:[%s1 + $0x18] sm:$0xff]
        %v343 = vld [vmem:[%s1 + $0x20] sm:$0xff]
        %v344 = vld [vmem:[%s1 + $0x28] sm:$0xff]
        %v345 = vld [vmem:[%s2] sm:$0xff]
        %v346 = vld [vmem:[%s2 + $0x8] sm:$0xff]
        %v347 = vld [vmem:[%s2 + $0x10] sm:$0xff]
        %v348 = vld [vmem:[%s2 + $0x18] sm:$0xff]
        %v349 = vld [vmem:[%s2 + $0x20] sm:$0xff]
        %v350 = vld [vmem:[%s2 + $0x28] sm:$0xff]
        %352 = vset.pattern.permute.xlu0 0
        %353 = vperm.xlu0 %352, %v345
        %v354 = vpop.permute.xlu0 %353
        %357 = vset.pattern.permute.xlu0 0
        %358 = vperm.xlu0 %357, %v346
        %v359 = vpop.permute.xlu0 %358
        %362 = vset.pattern.permute.xlu0 0
        %363 = vperm.xlu0 %362, %v347
        %v364 = vpop.permute.xlu0 %363
        %367 = vset.pattern.permute.xlu0 0
        %368 = vperm.xlu0 %367, %v348
        %v369 = vpop.permute.xlu0 %368
        %372 = vset.pattern.permute.xlu0 0
        %373 = vperm.xlu0 %372, %v349
        %v374 = vpop.permute.xlu0 %373
        %377 = vset.pattern.permute.xlu0 0
        %378 = vperm.xlu0 %377, %v350
        %v379 = vpop.permute.xlu0 %378
        %vm381 = vcmask 261120
        %v383 = vsel %vm381, %v339, 0
        %v386 = vsel %vm381, %v340, 0
        %v389 = vsel %vm381, %v341, 0
        %v392 = vsel %vm381, %v342, 0
        %v395 = vsel %vm381, %v343, 0
        %v398 = vsel %vm381, %v344, 0
        %400 = vmatpush.msra.mxu0 0.0
        %401 = vmatpush.msra.mxu0 0.0
        %402 = vmatpush.msra.mxu0 0.0
        %403 = vmatpush.msra.mxu0 0.0
        %404 = vmatpush.msra.mxu0 0.0
        %405 = vmatpush.msra.mxu0 0.0
        %406 = vmatpush.msra.mxu0 0.0
        %407 = vmatpush.msra.mxu0 0.0
        %408 = vmatpush.msra.mxu0 0.0
        %409 = vmatpush.msra.mxu0 0.0
        %410 = vmatpush.msra.mxu0 0.0
        %411 = vmatpush.msra.mxu0 0.0
        %v412 = vand.u32 %v337, 4294901760
        %413 = vmatpush.msra.mxu0 %v412
        %v414 = vand.u32 %v335, 4294901760
        %415 = vmatpush.msra.mxu0 %v414
        %v416 = vand.u32 %v333, 4294901760
        %417 = vmatpush.msra.mxu0 %v416
        %v418 = vand.u32 %v331, 4294901760
        %419 = vmatpush.msra.mxu0 %v418
        %v420 = vand.u32 %v383, 4294901760
        %v421 = vsub.f32 %v383, %v420
        %v422 = vand.u32 %v421, 4294901760
        %v423 = vsub.f32 %v421, %v422
        %v424 = vand.u32 %v423, 4294901760
        %425 = vmatmul.f32.gmra.mxu0 %v424
        %v426 = vpop.f32.mrf.mxu0
        %v427 = vadd.f32 %v354, %v426
        %v428 = vand.u32 %v386, 4294901760
        %v429 = vsub.f32 %v386, %v428
        %v430 = vand.u32 %v429, 4294901760
        %v431 = vsub.f32 %v429, %v430
        %v432 = vand.u32 %v431, 4294901760
        %433 = vmatmul.f32.gmra.mxu0 %v432
        %v434 = vpop.f32.mrf.mxu0
        %v435 = vadd.f32 %v359, %v434
        %v436 = vand.u32 %v389, 4294901760
        %v437 = vsub.f32 %v389, %v436
        %v438 = vand.u32 %v437, 4294901760
        %v439 = vsub.f32 %v437, %v438
        %v440 = vand.u32 %v439, 4294901760
        %441 = vmatmul.f32.gmra.mxu0 %v440
        %v442 = vpop.f32.mrf.mxu0
        %v443 = vadd.f32 %v364, %v442
        %v444 = vand.u32 %v392, 4294901760
        %v445 = vsub.f32 %v392, %v444
        %v446 = vand.u32 %v445, 4294901760
        %v447 = vsub.f32 %v445, %v446
        %v448 = vand.u32 %v447, 4294901760
        %449 = vmatmul.f32.gmra.mxu0 %v448
        %v450 = vpop.f32.mrf.mxu0
        %v451 = vadd.f32 %v369, %v450
        %v452 = vand.u32 %v395, 4294901760
        %v453 = vsub.f32 %v395, %v452
        %v454 = vand.u32 %v453, 4294901760
        %v455 = vsub.f32 %v453, %v454
        %v456 = vand.u32 %v455, 4294901760
        %457 = vmatmul.f32.gmra.mxu0 %v456
        %v458 = vpop.f32.mrf.mxu0
        %v459 = vadd.f32 %v374, %v458
        %v460 = vand.u32 %v398, 4294901760
        %v461 = vsub.f32 %v398, %v460
        %v462 = vand.u32 %v461, 4294901760
        %v463 = vsub.f32 %v461, %v462
        %v464 = vand.u32 %v463, 4294901760
        %465 = vmatmul.f32.gmra.mxu0 %v464
        %v466 = vpop.f32.mrf.mxu0
        %v467 = vadd.f32 %v379, %v466
        %468 = vdwg.mxu0
        %469 = vmatpush.msra.mxu0 0.0
        %470 = vmatpush.msra.mxu0 0.0
        %471 = vmatpush.msra.mxu0 0.0
        %472 = vmatpush.msra.mxu0 0.0
        %473 = vmatpush.msra.mxu0 0.0
        %474 = vmatpush.msra.mxu0 0.0
        %475 = vmatpush.msra.mxu0 0.0
        %476 = vmatpush.msra.mxu0 0.0
        %477 = vmatpush.msra.mxu0 0.0
        %478 = vmatpush.msra.mxu0 0.0
        %479 = vmatpush.msra.mxu0 0.0
        %480 = vmatpush.msra.mxu0 0.0
        %v481 = vand.u32 %v337, 4294901760
        %v482 = vsub.f32 %v337, %v481
        %v483 = vand.u32 %v482, 4294901760
        %v484 = vsub.f32 %v482, %v483
        %v485 = vand.u32 %v484, 4294901760
        %486 = vmatpush.msra.mxu0 %v485
        %v487 = vand.u32 %v335, 4294901760
        %v488 = vsub.f32 %v335, %v487
        %v489 = vand.u32 %v488, 4294901760
        %v490 = vsub.f32 %v488, %v489
        %v491 = vand.u32 %v490, 4294901760
        %492 = vmatpush.msra.mxu0 %v491
        %v493 = vand.u32 %v333, 4294901760
        %v494 = vsub.f32 %v333, %v493
        %v495 = vand.u32 %v494, 4294901760
        %v496 = vsub.f32 %v494, %v495
        %v497 = vand.u32 %v496, 4294901760
        %498 = vmatpush.msra.mxu0 %v497
        %v499 = vand.u32 %v331, 4294901760
        %v500 = vsub.f32 %v331, %v499
        %v501 = vand.u32 %v500, 4294901760
        %v502 = vsub.f32 %v500, %v501
        %v503 = vand.u32 %v502, 4294901760
        %504 = vmatpush.msra.mxu0 %v503
        %v505 = vand.u32 %v383, 4294901760
        %506 = vmatmul.f32.gmra.mxu0 %v505
        %v507 = vpop.f32.mrf.mxu0
        %v508 = vadd.f32 %v427, %v507
        %v509 = vand.u32 %v386, 4294901760
        %510 = vmatmul.f32.gmra.mxu0 %v509
        %v511 = vpop.f32.mrf.mxu0
        %v512 = vadd.f32 %v435, %v511
        %v513 = vand.u32 %v389, 4294901760
        %514 = vmatmul.f32.gmra.mxu0 %v513
        %v515 = vpop.f32.mrf.mxu0
        %v516 = vadd.f32 %v443, %v515
        %v517 = vand.u32 %v392, 4294901760
        %518 = vmatmul.f32.gmra.mxu0 %v517
        %v519 = vpop.f32.mrf.mxu0
        %v520 = vadd.f32 %v451, %v519
        %v521 = vand.u32 %v395, 4294901760
        %522 = vmatmul.f32.gmra.mxu0 %v521
        %v523 = vpop.f32.mrf.mxu0
        %v524 = vadd.f32 %v459, %v523
        %v525 = vand.u32 %v398, 4294901760
        %526 = vmatmul.f32.gmra.mxu0 %v525
        %v527 = vpop.f32.mrf.mxu0
        %v528 = vadd.f32 %v467, %v527
        %529 = vdwg.mxu0
        %530 = vmatpush.msra.mxu0 0.0
        %531 = vmatpush.msra.mxu0 0.0
        %532 = vmatpush.msra.mxu0 0.0
        %533 = vmatpush.msra.mxu0 0.0
        %534 = vmatpush.msra.mxu0 0.0
        %535 = vmatpush.msra.mxu0 0.0
        %536 = vmatpush.msra.mxu0 0.0
        %537 = vmatpush.msra.mxu0 0.0
        %538 = vmatpush.msra.mxu0 0.0
        %539 = vmatpush.msra.mxu0 0.0
        %540 = vmatpush.msra.mxu0 0.0
        %541 = vmatpush.msra.mxu0 0.0
        %v542 = vand.u32 %v337, 4294901760
        %v543 = vsub.f32 %v337, %v542
        %544 = vmatpush.msra.mxu0 %v543
        %v545 = vand.u32 %v335, 4294901760
        %v546 = vsub.f32 %v335, %v545
        %547 = vmatpush.msra.mxu0 %v546
        %v548 = vand.u32 %v333, 4294901760
        %v549 = vsub.f32 %v333, %v548
        %550 = vmatpush.msra.mxu0 %v549
        %v551 = vand.u32 %v331, 4294901760
        %v552 = vsub.f32 %v331, %v551
        %553 = vmatpush.msra.mxu0 %v552
        %v554 = vand.u32 %v383, 4294901760
        %v555 = vsub.f32 %v383, %v554
        %556 = vmatmul.f32.gmra.mxu0 %v555
        %v557 = vpop.f32.mrf.mxu0
        %v558 = vadd.f32 %v508, %v557
        %v559 = vand.u32 %v386, 4294901760
        %v560 = vsub.f32 %v386, %v559
        %561 = vmatmul.f32.gmra.mxu0 %v560
        %v562 = vpop.f32.mrf.mxu0
        %v563 = vadd.f32 %v512, %v562
        %v564 = vand.u32 %v389, 4294901760
        %v565 = vsub.f32 %v389, %v564
        %566 = vmatmul.f32.gmra.mxu0 %v565
        %v567 = vpop.f32.mrf.mxu0
        %v568 = vadd.f32 %v516, %v567
        %v569 = vand.u32 %v392, 4294901760
        %v570 = vsub.f32 %v392, %v569
        %571 = vmatmul.f32.gmra.mxu0 %v570
        %v572 = vpop.f32.mrf.mxu0
        %v573 = vadd.f32 %v520, %v572
        %v574 = vand.u32 %v395, 4294901760
        %v575 = vsub.f32 %v395, %v574
        %576 = vmatmul.f32.gmra.mxu0 %v575
        %v577 = vpop.f32.mrf.mxu0
        %v578 = vadd.f32 %v524, %v577
        %v579 = vand.u32 %v398, 4294901760
        %v580 = vsub.f32 %v398, %v579
        %581 = vmatmul.f32.gmra.mxu0 %v580
        %v582 = vpop.f32.mrf.mxu0
        %v583 = vadd.f32 %v528, %v582
        %584 = vdwg.mxu0
        %585 = vmatpush.msra.mxu0 0.0
        %586 = vmatpush.msra.mxu0 0.0
        %587 = vmatpush.msra.mxu0 0.0
        %588 = vmatpush.msra.mxu0 0.0
        %589 = vmatpush.msra.mxu0 0.0
        %590 = vmatpush.msra.mxu0 0.0
        %591 = vmatpush.msra.mxu0 0.0
        %592 = vmatpush.msra.mxu0 0.0
        %593 = vmatpush.msra.mxu0 0.0
        %594 = vmatpush.msra.mxu0 0.0
        %595 = vmatpush.msra.mxu0 0.0
        %596 = vmatpush.msra.mxu0 0.0
        %v597 = vand.u32 %v337, 4294901760
        %598 = vmatpush.msra.mxu0 %v597
        %v599 = vand.u32 %v335, 4294901760
        %600 = vmatpush.msra.mxu0 %v599
        %v601 = vand.u32 %v333, 4294901760
        %602 = vmatpush.msra.mxu0 %v601
        %v603 = vand.u32 %v331, 4294901760
        %604 = vmatpush.msra.mxu0 %v603
        %v605 = vand.u32 %v383, 4294901760
        %v606 = vsub.f32 %v383, %v605
        %v607 = vand.u32 %v606, 4294901760
        %608 = vmatmul.f32.gmra.mxu0 %v607
        %v609 = vpop.f32.mrf.mxu0
        %v610 = vadd.f32 %v558, %v609
        %v611 = vand.u32 %v386, 4294901760
        %v612 = vsub.f32 %v386, %v611
        %v613 = vand.u32 %v612, 4294901760
        %614 = vmatmul.f32.gmra.mxu0 %v613
        %v615 = vpop.f32.mrf.mxu0
        %v616 = vadd.f32 %v563, %v615
        %v617 = vand.u32 %v389, 4294901760
        %v618 = vsub.f32 %v389, %v617
        %v619 = vand.u32 %v618, 4294901760
        %620 = vmatmul.f32.gmra.mxu0 %v619
        %v621 = vpop.f32.mrf.mxu0
        %v622 = vadd.f32 %v568, %v621
        %v623 = vand.u32 %v392, 4294901760
        %v624 = vsub.f32 %v392, %v623
        %v625 = vand.u32 %v624, 4294901760
        %626 = vmatmul.f32.gmra.mxu0 %v625
        %v627 = vpop.f32.mrf.mxu0
        %v628 = vadd.f32 %v573, %v627
        %v629 = vand.u32 %v395, 4294901760
        %v630 = vsub.f32 %v395, %v629
        %v631 = vand.u32 %v630, 4294901760
        %632 = vmatmul.f32.gmra.mxu0 %v631
        %v633 = vpop.f32.mrf.mxu0
        %v634 = vadd.f32 %v578, %v633
        %v635 = vand.u32 %v398, 4294901760
        %v636 = vsub.f32 %v398, %v635
        %v637 = vand.u32 %v636, 4294901760
        %638 = vmatmul.f32.gmra.mxu0 %v637
        %v639 = vpop.f32.mrf.mxu0
        %v640 = vadd.f32 %v583, %v639
        %641 = vdwg.mxu0
        %642 = vmatpush.msra.mxu0 0.0
        %643 = vmatpush.msra.mxu0 0.0
        %644 = vmatpush.msra.mxu0 0.0
        %645 = vmatpush.msra.mxu0 0.0
        %646 = vmatpush.msra.mxu0 0.0
        %647 = vmatpush.msra.mxu0 0.0
        %648 = vmatpush.msra.mxu0 0.0
        %649 = vmatpush.msra.mxu0 0.0
        %650 = vmatpush.msra.mxu0 0.0
        %651 = vmatpush.msra.mxu0 0.0
        %652 = vmatpush.msra.mxu0 0.0
        %653 = vmatpush.msra.mxu0 0.0
        %v654 = vand.u32 %v337, 4294901760
        %v655 = vsub.f32 %v337, %v654
        %v656 = vand.u32 %v655, 4294901760
        %657 = vmatpush.msra.mxu0 %v656
        %v658 = vand.u32 %v335, 4294901760
        %v659 = vsub.f32 %v335, %v658
        %v660 = vand.u32 %v659, 4294901760
        %661 = vmatpush.msra.mxu0 %v660
        %v662 = vand.u32 %v333, 4294901760
        %v663 = vsub.f32 %v333, %v662
        %v664 = vand.u32 %v663, 4294901760
        %665 = vmatpush.msra.mxu0 %v664
        %v666 = vand.u32 %v331, 4294901760
        %v667 = vsub.f32 %v331, %v666
        %v668 = vand.u32 %v667, 4294901760
        %669 = vmatpush.msra.mxu0 %v668
        %v670 = vand.u32 %v383, 4294901760
        %671 = vmatmul.f32.gmra.mxu0 %v670
        %v672 = vpop.f32.mrf.mxu0
        %v673 = vadd.f32 %v610, %v672
        %v674 = vand.u32 %v386, 4294901760
        %675 = vmatmul.f32.gmra.mxu0 %v674
        %v676 = vpop.f32.mrf.mxu0
        %v677 = vadd.f32 %v616, %v676
        %v678 = vand.u32 %v389, 4294901760
        %679 = vmatmul.f32.gmra.mxu0 %v678
        %v680 = vpop.f32.mrf.mxu0
        %v681 = vadd.f32 %v622, %v680
        %v682 = vand.u32 %v392, 4294901760
        %683 = vmatmul.f32.gmra.mxu0 %v682
        %v684 = vpop.f32.mrf.mxu0
        %v685 = vadd.f32 %v628, %v684
        %v686 = vand.u32 %v395, 4294901760
        %687 = vmatmul.f32.gmra.mxu0 %v686
        %v688 = vpop.f32.mrf.mxu0
        %v689 = vadd.f32 %v634, %v688
        %v690 = vand.u32 %v398, 4294901760
        %691 = vmatmul.f32.gmra.mxu0 %v690
        %v692 = vpop.f32.mrf.mxu0
        %v693 = vadd.f32 %v640, %v692
        %694 = vdwg.mxu0
        %695 = vmatpush.msra.mxu0 0.0
        %696 = vmatpush.msra.mxu0 0.0
        %697 = vmatpush.msra.mxu0 0.0
        %698 = vmatpush.msra.mxu0 0.0
        %699 = vmatpush.msra.mxu0 0.0
        %700 = vmatpush.msra.mxu0 0.0
        %701 = vmatpush.msra.mxu0 0.0
        %702 = vmatpush.msra.mxu0 0.0
        %703 = vmatpush.msra.mxu0 0.0
        %704 = vmatpush.msra.mxu0 0.0
        %705 = vmatpush.msra.mxu0 0.0
        %706 = vmatpush.msra.mxu0 0.0
        %v707 = vand.u32 %v337, 4294901760
        %708 = vmatpush.msra.mxu0 %v707
        %v709 = vand.u32 %v335, 4294901760
        %710 = vmatpush.msra.mxu0 %v709
        %v711 = vand.u32 %v333, 4294901760
        %712 = vmatpush.msra.mxu0 %v711
        %v713 = vand.u32 %v331, 4294901760
        %714 = vmatpush.msra.mxu0 %v713
        %v715 = vand.u32 %v383, 4294901760
        %716 = vmatmul.f32.gmra.mxu0 %v715
        %v717 = vpop.f32.mrf.mxu0
        %v718 = vadd.f32 %v673, %v717
        %v719 = vand.u32 %v386, 4294901760
        %720 = vmatmul.f32.gmra.mxu0 %v719
        %v721 = vpop.f32.mrf.mxu0
        %v722 = vadd.f32 %v677, %v721
        %v723 = vand.u32 %v389, 4294901760
        %724 = vmatmul.f32.gmra.mxu0 %v723
        %v725 = vpop.f32.mrf.mxu0
        %v726 = vadd.f32 %v681, %v725
        %v727 = vand.u32 %v392, 4294901760
        %728 = vmatmul.f32.gmra.mxu0 %v727
        %v729 = vpop.f32.mrf.mxu0
        %v730 = vadd.f32 %v685, %v729
        %v731 = vand.u32 %v395, 4294901760
        %732 = vmatmul.f32.gmra.mxu0 %v731
        %v733 = vpop.f32.mrf.mxu0
        %v734 = vadd.f32 %v689, %v733
        %v735 = vand.u32 %v398, 4294901760
        %736 = vmatmul.f32.gmra.mxu0 %v735
        %v737 = vpop.f32.mrf.mxu0
        %v738 = vadd.f32 %v693, %v737
        %739 = vdwg.mxu0
        %740 = vmatpush.msra.mxu0 0.0
        %741 = vmatpush.msra.mxu0 0.0
        %742 = vmatpush.msra.mxu0 0.0
        %743 = vmatpush.msra.mxu0 0.0
        %744 = vmatpush.msra.mxu0 0.0
        %745 = vmatpush.msra.mxu0 0.0
        %746 = vmatpush.msra.mxu0 0.0
        %747 = vmatpush.msra.mxu0 0.0
        %748 = vmatpush.msra.mxu0 0.0
        %749 = vmatpush.msra.mxu0 0.0
        %750 = vmatpush.msra.mxu0 0.0
        %751 = vmatpush.msra.mxu0 0.0
        %v752 = vand.u32 %v338, 4294901760
        %753 = vmatpush.msra.mxu0 %v752
        %v754 = vand.u32 %v336, 4294901760
        %755 = vmatpush.msra.mxu0 %v754
        %v756 = vand.u32 %v334, 4294901760
        %757 = vmatpush.msra.mxu0 %v756
        %v758 = vand.u32 %v332, 4294901760
        %759 = vmatpush.msra.mxu0 %v758
        %v760 = vand.u32 %v383, 4294901760
        %v761 = vsub.f32 %v383, %v760
        %v762 = vand.u32 %v761, 4294901760
        %v763 = vsub.f32 %v761, %v762
        %v764 = vand.u32 %v763, 4294901760
        %765 = vmatmul.f32.gmra.mxu0 %v764
        %v766 = vpop.f32.mrf.mxu0
        %v767 = vadd.f32 %v354, %v766
        %v768 = vand.u32 %v386, 4294901760
        %v769 = vsub.f32 %v386, %v768
        %v770 = vand.u32 %v769, 4294901760
        %v771 = vsub.f32 %v769, %v770
        %v772 = vand.u32 %v771, 4294901760
        %773 = vmatmul.f32.gmra.mxu0 %v772
        %v774 = vpop.f32.mrf.mxu0
        %v775 = vadd.f32 %v359, %v774
        %v776 = vand.u32 %v389, 4294901760
        %v777 = vsub.f32 %v389, %v776
        %v778 = vand.u32 %v777, 4294901760
        %v779 = vsub.f32 %v777, %v778
        %v780 = vand.u32 %v779, 4294901760
        %781 = vmatmul.f32.gmra.mxu0 %v780
        %v782 = vpop.f32.mrf.mxu0
        %v783 = vadd.f32 %v364, %v782
        %v784 = vand.u32 %v392, 4294901760
        %v785 = vsub.f32 %v392, %v784
        %v786 = vand.u32 %v785, 4294901760
        %v787 = vsub.f32 %v785, %v786
        %v788 = vand.u32 %v787, 4294901760
        %789 = vmatmul.f32.gmra.mxu0 %v788
        %v790 = vpop.f32.mrf.mxu0
        %v791 = vadd.f32 %v369, %v790
        %v792 = vand.u32 %v395, 4294901760
        %v793 = vsub.f32 %v395, %v792
        %v794 = vand.u32 %v793, 4294901760
        %v795 = vsub.f32 %v793, %v794
        %v796 = vand.u32 %v795, 4294901760
        %797 = vmatmul.f32.gmra.mxu0 %v796
        %v798 = vpop.f32.mrf.mxu0
        %v799 = vadd.f32 %v374, %v798
        %v800 = vand.u32 %v398, 4294901760
        %v801 = vsub.f32 %v398, %v800
        %v802 = vand.u32 %v801, 4294901760
        %v803 = vsub.f32 %v801, %v802
        %v804 = vand.u32 %v803, 4294901760
        %805 = vmatmul.f32.gmra.mxu0 %v804
        %v806 = vpop.f32.mrf.mxu0
        %v807 = vadd.f32 %v379, %v806
        %808 = vdwg.mxu0
        %809 = vmatpush.msra.mxu0 0.0
        %810 = vmatpush.msra.mxu0 0.0
        %811 = vmatpush.msra.mxu0 0.0
        %812 = vmatpush.msra.mxu0 0.0
        %813 = vmatpush.msra.mxu0 0.0
        %814 = vmatpush.msra.mxu0 0.0
        %815 = vmatpush.msra.mxu0 0.0
        %816 = vmatpush.msra.mxu0 0.0
        %817 = vmatpush.msra.mxu0 0.0
        %818 = vmatpush.msra.mxu0 0.0
        %819 = vmatpush.msra.mxu0 0.0
        %820 = vmatpush.msra.mxu0 0.0
        %v821 = vand.u32 %v338, 4294901760
        %v822 = vsub.f32 %v338, %v821
        %v823 = vand.u32 %v822, 4294901760
        %v824 = vsub.f32 %v822, %v823
        %v825 = vand.u32 %v824, 4294901760
        %826 = vmatpush.msra.mxu0 %v825
        %v827 = vand.u32 %v336, 4294901760
        %v828 = vsub.f32 %v336, %v827
        %v829 = vand.u32 %v828, 4294901760
        %v830 = vsub.f32 %v828, %v829
        %v831 = vand.u32 %v830, 4294901760
        %832 = vmatpush.msra.mxu0 %v831
        %v833 = vand.u32 %v334, 4294901760
        %v834 = vsub.f32 %v334, %v833
        %v835 = vand.u32 %v834, 4294901760
        %v836 = vsub.f32 %v834, %v835
        %v837 = vand.u32 %v836, 4294901760
        %838 = vmatpush.msra.mxu0 %v837
        %v839 = vand.u32 %v332, 4294901760
        %v840 = vsub.f32 %v332, %v839
        %v841 = vand.u32 %v840, 4294901760
        %v842 = vsub.f32 %v840, %v841
        %v843 = vand.u32 %v842, 4294901760
        %844 = vmatpush.msra.mxu0 %v843
        %v845 = vand.u32 %v383, 4294901760
        %846 = vmatmul.f32.gmra.mxu0 %v845
        %v847 = vpop.f32.mrf.mxu0
        %v848 = vadd.f32 %v767, %v847
        %v849 = vand.u32 %v386, 4294901760
        %850 = vmatmul.f32.gmra.mxu0 %v849
        %v851 = vpop.f32.mrf.mxu0
        %v852 = vadd.f32 %v775, %v851
        %v853 = vand.u32 %v389, 4294901760
        %854 = vmatmul.f32.gmra.mxu0 %v853
        %v855 = vpop.f32.mrf.mxu0
        %v856 = vadd.f32 %v783, %v855
        %v857 = vand.u32 %v392, 4294901760
        %858 = vmatmul.f32.gmra.mxu0 %v857
        %v859 = vpop.f32.mrf.mxu0
        %v860 = vadd.f32 %v791, %v859
        %v861 = vand.u32 %v395, 4294901760
        %862 = vmatmul.f32.gmra.mxu0 %v861
        %v863 = vpop.f32.mrf.mxu0
        %v864 = vadd.f32 %v799, %v863
        %v865 = vand.u32 %v398, 4294901760
        %866 = vmatmul.f32.gmra.mxu0 %v865
        %v867 = vpop.f32.mrf.mxu0
        %v868 = vadd.f32 %v807, %v867
        %869 = vdwg.mxu0
        %870 = vmatpush.msra.mxu0 0.0
        %871 = vmatpush.msra.mxu0 0.0
        %872 = vmatpush.msra.mxu0 0.0
        %873 = vmatpush.msra.mxu0 0.0
        %874 = vmatpush.msra.mxu0 0.0
        %875 = vmatpush.msra.mxu0 0.0
        %876 = vmatpush.msra.mxu0 0.0
        %877 = vmatpush.msra.mxu0 0.0
        %878 = vmatpush.msra.mxu0 0.0
        %879 = vmatpush.msra.mxu0 0.0
        %880 = vmatpush.msra.mxu0 0.0
        %881 = vmatpush.msra.mxu0 0.0
        %v882 = vand.u32 %v338, 4294901760
        %v883 = vsub.f32 %v338, %v882
        %884 = vmatpush.msra.mxu0 %v883
        %v885 = vand.u32 %v336, 4294901760
        %v886 = vsub.f32 %v336, %v885
        %887 = vmatpush.msra.mxu0 %v886
        %v888 = vand.u32 %v334, 4294901760
        %v889 = vsub.f32 %v334, %v888
        %890 = vmatpush.msra.mxu0 %v889
        %v891 = vand.u32 %v332, 4294901760
        %v892 = vsub.f32 %v332, %v891
        %893 = vmatpush.msra.mxu0 %v892
        %v894 = vand.u32 %v383, 4294901760
        %v895 = vsub.f32 %v383, %v894
        %896 = vmatmul.f32.gmra.mxu0 %v895
        %v897 = vpop.f32.mrf.mxu0
        %v898 = vadd.f32 %v848, %v897
        %v899 = vand.u32 %v386, 4294901760
        %v900 = vsub.f32 %v386, %v899
        %901 = vmatmul.f32.gmra.mxu0 %v900
        %v902 = vpop.f32.mrf.mxu0
        %v903 = vadd.f32 %v852, %v902
        %v904 = vand.u32 %v389, 4294901760
        %v905 = vsub.f32 %v389, %v904
        %906 = vmatmul.f32.gmra.mxu0 %v905
        %v907 = vpop.f32.mrf.mxu0
        %v908 = vadd.f32 %v856, %v907
        %v909 = vand.u32 %v392, 4294901760
        %v910 = vsub.f32 %v392, %v909
        %911 = vmatmul.f32.gmra.mxu0 %v910
        %v912 = vpop.f32.mrf.mxu0
        %v913 = vadd.f32 %v860, %v912
        %v914 = vand.u32 %v395, 4294901760
        %v915 = vsub.f32 %v395, %v914
        %916 = vmatmul.f32.gmra.mxu0 %v915
        %v917 = vpop.f32.mrf.mxu0
        %v918 = vadd.f32 %v864, %v917
        %v919 = vand.u32 %v398, 4294901760
        %v920 = vsub.f32 %v398, %v919
        %921 = vmatmul.f32.gmra.mxu0 %v920
        %v922 = vpop.f32.mrf.mxu0
        %v923 = vadd.f32 %v868, %v922
        %924 = vdwg.mxu0
        %925 = vmatpush.msra.mxu0 0.0
        %926 = vmatpush.msra.mxu0 0.0
        %927 = vmatpush.msra.mxu0 0.0
        %928 = vmatpush.msra.mxu0 0.0
        %929 = vmatpush.msra.mxu0 0.0
        %930 = vmatpush.msra.mxu0 0.0
        %931 = vmatpush.msra.mxu0 0.0
        %932 = vmatpush.msra.mxu0 0.0
        %933 = vmatpush.msra.mxu0 0.0
        %934 = vmatpush.msra.mxu0 0.0
        %935 = vmatpush.msra.mxu0 0.0
        %936 = vmatpush.msra.mxu0 0.0
        %v937 = vand.u32 %v338, 4294901760
        %938 = vmatpush.msra.mxu0 %v937
        %v939 = vand.u32 %v336, 4294901760
        %940 = vmatpush.msra.mxu0 %v939
        %v941 = vand.u32 %v334, 4294901760
        %942 = vmatpush.msra.mxu0 %v941
        %v943 = vand.u32 %v332, 4294901760
        %944 = vmatpush.msra.mxu0 %v943
        %v945 = vand.u32 %v383, 4294901760
        %v946 = vsub.f32 %v383, %v945
        %v947 = vand.u32 %v946, 4294901760
        %948 = vmatmul.f32.gmra.mxu0 %v947
        %v949 = vpop.f32.mrf.mxu0
        %v950 = vadd.f32 %v898, %v949
        %v951 = vand.u32 %v386, 4294901760
        %v952 = vsub.f32 %v386, %v951
        %v953 = vand.u32 %v952, 4294901760
        %954 = vmatmul.f32.gmra.mxu0 %v953
        %v955 = vpop.f32.mrf.mxu0
        %v956 = vadd.f32 %v903, %v955
        %v957 = vand.u32 %v389, 4294901760
        %v958 = vsub.f32 %v389, %v957
        %v959 = vand.u32 %v958, 4294901760
        %960 = vmatmul.f32.gmra.mxu0 %v959
        %v961 = vpop.f32.mrf.mxu0
        %v962 = vadd.f32 %v908, %v961
        %v963 = vand.u32 %v392, 4294901760
        %v964 = vsub.f32 %v392, %v963
        %v965 = vand.u32 %v964, 4294901760
        %966 = vmatmul.f32.gmra.mxu0 %v965
        %v967 = vpop.f32.mrf.mxu0
        %v968 = vadd.f32 %v913, %v967
        %v969 = vand.u32 %v395, 4294901760
        %v970 = vsub.f32 %v395, %v969
        %v971 = vand.u32 %v970, 4294901760
        %972 = vmatmul.f32.gmra.mxu0 %v971
        %v973 = vpop.f32.mrf.mxu0
        %v974 = vadd.f32 %v918, %v973
        %v975 = vand.u32 %v398, 4294901760
        %v976 = vsub.f32 %v398, %v975
        %v977 = vand.u32 %v976, 4294901760
        %978 = vmatmul.f32.gmra.mxu0 %v977
        %v979 = vpop.f32.mrf.mxu0
        %v980 = vadd.f32 %v923, %v979
        %981 = vdwg.mxu0
        %982 = vmatpush.msra.mxu0 0.0
        %983 = vmatpush.msra.mxu0 0.0
        %984 = vmatpush.msra.mxu0 0.0
        %985 = vmatpush.msra.mxu0 0.0
        %986 = vmatpush.msra.mxu0 0.0
        %987 = vmatpush.msra.mxu0 0.0
        %988 = vmatpush.msra.mxu0 0.0
        %989 = vmatpush.msra.mxu0 0.0
        %990 = vmatpush.msra.mxu0 0.0
        %991 = vmatpush.msra.mxu0 0.0
        %992 = vmatpush.msra.mxu0 0.0
        %993 = vmatpush.msra.mxu0 0.0
        %v994 = vand.u32 %v338, 4294901760
        %v995 = vsub.f32 %v338, %v994
        %v996 = vand.u32 %v995, 4294901760
        %997 = vmatpush.msra.mxu0 %v996
        %v998 = vand.u32 %v336, 4294901760
        %v999 = vsub.f32 %v336, %v998
        %v1000 = vand.u32 %v999, 4294901760
        %1001 = vmatpush.msra.mxu0 %v1000
        %v1002 = vand.u32 %v334, 4294901760
        %v1003 = vsub.f32 %v334, %v1002
        %v1004 = vand.u32 %v1003, 4294901760
        %1005 = vmatpush.msra.mxu0 %v1004
        %v1006 = vand.u32 %v332, 4294901760
        %v1007 = vsub.f32 %v332, %v1006
        %v1008 = vand.u32 %v1007, 4294901760
        %1009 = vmatpush.msra.mxu0 %v1008
        %v1010 = vand.u32 %v383, 4294901760
        %1011 = vmatmul.f32.gmra.mxu0 %v1010
        %v1012 = vpop.f32.mrf.mxu0
        %v1013 = vadd.f32 %v950, %v1012
        %v1014 = vand.u32 %v386, 4294901760
        %1015 = vmatmul.f32.gmra.mxu0 %v1014
        %v1016 = vpop.f32.mrf.mxu0
        %v1017 = vadd.f32 %v956, %v1016
        %v1018 = vand.u32 %v389, 4294901760
        %1019 = vmatmul.f32.gmra.mxu0 %v1018
        %v1020 = vpop.f32.mrf.mxu0
        %v1021 = vadd.f32 %v962, %v1020
        %v1022 = vand.u32 %v392, 4294901760
        %1023 = vmatmul.f32.gmra.mxu0 %v1022
        %v1024 = vpop.f32.mrf.mxu0
        %v1025 = vadd.f32 %v968, %v1024
        %v1026 = vand.u32 %v395, 4294901760
        %1027 = vmatmul.f32.gmra.mxu0 %v1026
        %v1028 = vpop.f32.mrf.mxu0
        %v1029 = vadd.f32 %v974, %v1028
        %v1030 = vand.u32 %v398, 4294901760
        %1031 = vmatmul.f32.gmra.mxu0 %v1030
        %v1032 = vpop.f32.mrf.mxu0
        %v1033 = vadd.f32 %v980, %v1032
        %1034 = vdwg.mxu0
        %1035 = vmatpush.msra.mxu0 0.0
        %1036 = vmatpush.msra.mxu0 0.0
        %1037 = vmatpush.msra.mxu0 0.0
        %1038 = vmatpush.msra.mxu0 0.0
        %1039 = vmatpush.msra.mxu0 0.0
        %1040 = vmatpush.msra.mxu0 0.0
        %1041 = vmatpush.msra.mxu0 0.0
        %1042 = vmatpush.msra.mxu0 0.0
        %1043 = vmatpush.msra.mxu0 0.0
        %1044 = vmatpush.msra.mxu0 0.0
        %1045 = vmatpush.msra.mxu0 0.0
        %1046 = vmatpush.msra.mxu0 0.0
        %v1047 = vand.u32 %v338, 4294901760
        %1048 = vmatpush.msra.mxu0 %v1047
        %v1049 = vand.u32 %v336, 4294901760
        %1050 = vmatpush.msra.mxu0 %v1049
        %v1051 = vand.u32 %v334, 4294901760
        %1052 = vmatpush.msra.mxu0 %v1051
        %v1053 = vand.u32 %v332, 4294901760
        %1054 = vmatpush.msra.mxu0 %v1053
        %v1055 = vand.u32 %v383, 4294901760
        %1056 = vmatmul.f32.gmra.mxu0 %v1055
        %v1057 = vpop.f32.mrf.mxu0
        %v1058 = vadd.f32 %v1013, %v1057
        %v1059 = vand.u32 %v386, 4294901760
        %1060 = vmatmul.f32.gmra.mxu0 %v1059
        %v1061 = vpop.f32.mrf.mxu0
        %v1062 = vadd.f32 %v1017, %v1061
        %v1063 = vand.u32 %v389, 4294901760
        %1064 = vmatmul.f32.gmra.mxu0 %v1063
        %v1065 = vpop.f32.mrf.mxu0
        %v1066 = vadd.f32 %v1021, %v1065
        %v1067 = vand.u32 %v392, 4294901760
        %1068 = vmatmul.f32.gmra.mxu0 %v1067
        %v1069 = vpop.f32.mrf.mxu0
        %v1070 = vadd.f32 %v1025, %v1069
        %v1071 = vand.u32 %v395, 4294901760
        %1072 = vmatmul.f32.gmra.mxu0 %v1071
        %v1073 = vpop.f32.mrf.mxu0
        %v1074 = vadd.f32 %v1029, %v1073
        %v1075 = vand.u32 %v398, 4294901760
        %1076 = vmatmul.f32.gmra.mxu0 %v1075
        %v1077 = vpop.f32.mrf.mxu0
        %v1078 = vadd.f32 %v1033, %v1077
        %1079 = vdwg.mxu0
        %1086 = vrot.lane.b32.xlu0 %v1058, 17
        %v1087 = vpop.permute.xlu0 %1086
        %1088 = vrot.lane.b32.xlu0 %v1062, 17
        %v1089 = vpop.permute.xlu0 %1088
        %1090 = vrot.lane.b32.xlu0 %v1066, 17
        %v1091 = vpop.permute.xlu0 %1090
        %1092 = vrot.lane.b32.xlu0 %v1070, 17
        %v1093 = vpop.permute.xlu0 %1092
        %1094 = vrot.lane.b32.xlu0 %v1074, 17
        %v1095 = vpop.permute.xlu0 %1094
        %1096 = vrot.lane.b32.xlu0 %v1078, 17
        %v1097 = vpop.permute.xlu0 %1096
        %1110 = vrot.lane.b32.xlu0 %v718, 17
        %v1111 = vpop.permute.xlu0 %1110
        %1112 = vrot.lane.b32.xlu0 %v722, 17
        %v1113 = vpop.permute.xlu0 %1112
        %1114 = vrot.lane.b32.xlu0 %v726, 17
        %v1115 = vpop.permute.xlu0 %1114
        %1116 = vrot.lane.b32.xlu0 %v730, 17
        %v1117 = vpop.permute.xlu0 %1116
        %1118 = vrot.lane.b32.xlu0 %v734, 17
        %v1119 = vpop.permute.xlu0 %1118
        %1120 = vrot.lane.b32.xlu0 %v738, 17
        %v1121 = vpop.permute.xlu0 %1120
        %vm1122 = vcmask 138240
        %v1123 = vsel %vm1122, %v1111, %v1087
        %v1124 = vsel %vm1122, %v1113, %v1089
        %v1125 = vsel %vm1122, %v1115, %v1091
        %v1126 = vsel %vm1122, %v1117, %v1093
        %v1127 = vsel %vm1122, %v1119, %v1095
        %v1128 = vsel %vm1122, %v1121, %v1097
        %v1141 = vsel %vm1122, %v1087, %v1111
        %v1142 = vsel %vm1122, %v1089, %v1113
        %v1143 = vsel %vm1122, %v1091, %v1115
        %v1144 = vsel %vm1122, %v1093, %v1117
        %v1145 = vsel %vm1122, %v1095, %v1119
        %v1146 = vsel %vm1122, %v1097, %v1121
        %v1147 = vld [vmem:[%s3] sm:$0xff]
        %v1148 = vld [vmem:[%s3 + $0x8] sm:$0xff]
        %v1149 = vld [vmem:[%s3 + $0x10] sm:$0xff]
        %v1150 = vld [vmem:[%s3 + $0x18] sm:$0xff]
        %v1151 = vld [vmem:[%s3 + $0x20] sm:$0xff]
        %v1152 = vld [vmem:[%s3 + $0x28] sm:$0xff]
        %v1153 = vld [vmem:[%s5] sm:$0x3]
        %v1155 = vperm.slane %v1153, 0
        %v1156 = vperm.slane %v1153, 1
        %v1159 = vmul.f32 %v1141, %v1155
        %v1160 = vmul.f32 %v1123, %v1156
        %v1161 = vmul.f32 %v1142, %v1155
        %v1162 = vmul.f32 %v1124, %v1156
        %v1163 = vmul.f32 %v1143, %v1155
        %v1164 = vmul.f32 %v1125, %v1156
        %v1165 = vmul.f32 %v1144, %v1155
        %v1166 = vmul.f32 %v1126, %v1156
        %v1167 = vmul.f32 %v1145, %v1155
        %v1168 = vmul.f32 %v1127, %v1156
        %v1169 = vmul.f32 %v1146, %v1155
        %v1170 = vmul.f32 %v1128, %v1156
        %1172 = vset.pattern.permute.xlu0 0
        %1173 = vperm.xlu0 %1172, %v1147
        %v1174 = vpop.permute.xlu0 %1173
        %1177 = vset.pattern.permute.xlu0 0
        %1178 = vperm.xlu0 %1177, %v1148
        %v1179 = vpop.permute.xlu0 %1178
        %1182 = vset.pattern.permute.xlu0 0
        %1183 = vperm.xlu0 %1182, %v1149
        %v1184 = vpop.permute.xlu0 %1183
        %1187 = vset.pattern.permute.xlu0 0
        %1188 = vperm.xlu0 %1187, %v1150
        %v1189 = vpop.permute.xlu0 %1188
        %1192 = vset.pattern.permute.xlu0 0
        %1193 = vperm.xlu0 %1192, %v1151
        %v1194 = vpop.permute.xlu0 %1193
        %1197 = vset.pattern.permute.xlu0 0
        %1198 = vperm.xlu0 %1197, %v1152
        %v1199 = vpop.permute.xlu0 %1198
        %v1201 = vmul.f32 %v1174, %v1159
        %v1202 = vmul.f32 %v1174, %v1160
        %v1203 = vmul.f32 %v1179, %v1161
        %v1204 = vmul.f32 %v1179, %v1162
        %v1205 = vmul.f32 %v1184, %v1163
        %v1206 = vmul.f32 %v1184, %v1164
        %v1207 = vmul.f32 %v1189, %v1165
        %v1208 = vmul.f32 %v1189, %v1166
        %v1209 = vmul.f32 %v1194, %v1167
        %v1210 = vmul.f32 %v1194, %v1168
        %v1211 = vmul.f32 %v1199, %v1169
        %v1212 = vmul.f32 %v1199, %v1170
        %v1213 = vadd.f32 %v1201, 0.0
        %v1214 = vadd.f32 %v1202, 0.0
        %v1215 = vadd.f32 %v1203, 0.0
        %v1216 = vadd.f32 %v1204, 0.0
        %v1217 = vadd.f32 %v1205, 0.0
        %v1218 = vadd.f32 %v1206, 0.0
        %v1219 = vadd.f32 %v1207, 0.0
        %v1220 = vadd.f32 %v1208, 0.0
        %v1221 = vadd.f32 %v1209, 0.0
        %v1222 = vadd.f32 %v1210, 0.0
        %v1223 = vadd.f32 %v1211, 0.0
        %v1224 = vadd.f32 %v1212, 0.0
        %1225 = vrot.lane.b32.xlu0 %v1058, 16
        %v1226 = vpop.permute.xlu0 %1225
        %1227 = vrot.lane.b32.xlu0 %v1062, 16
        %v1228 = vpop.permute.xlu0 %1227
        %1229 = vrot.lane.b32.xlu0 %v1066, 16
        %v1230 = vpop.permute.xlu0 %1229
        %1231 = vrot.lane.b32.xlu0 %v1070, 16
        %v1232 = vpop.permute.xlu0 %1231
        %1233 = vrot.lane.b32.xlu0 %v1074, 16
        %v1234 = vpop.permute.xlu0 %1233
        %1235 = vrot.lane.b32.xlu0 %v1078, 16
        %v1236 = vpop.permute.xlu0 %1235
        %1243 = vrot.lane.b32.xlu0 %v718, 16
        %v1244 = vpop.permute.xlu0 %1243
        %1245 = vrot.lane.b32.xlu0 %v722, 16
        %v1246 = vpop.permute.xlu0 %1245
        %1247 = vrot.lane.b32.xlu0 %v726, 16
        %v1248 = vpop.permute.xlu0 %1247
        %1249 = vrot.lane.b32.xlu0 %v730, 16
        %v1250 = vpop.permute.xlu0 %1249
        %1251 = vrot.lane.b32.xlu0 %v734, 16
        %v1252 = vpop.permute.xlu0 %1251
        %1253 = vrot.lane.b32.xlu0 %v738, 16
        %v1254 = vpop.permute.xlu0 %1253
        %vm1255 = vcmask 130048
        %v1256 = vsel %vm1255, %v1244, %v1226
        %v1257 = vsel %vm1255, %v1246, %v1228
        %v1258 = vsel %vm1255, %v1248, %v1230
        %v1259 = vsel %vm1255, %v1250, %v1232
        %v1260 = vsel %vm1255, %v1252, %v1234
        %v1261 = vsel %vm1255, %v1254, %v1236
        %v1274 = vsel %vm1255, %v1226, %v1244
        %v1275 = vsel %vm1255, %v1228, %v1246
        %v1276 = vsel %vm1255, %v1230, %v1248
        %v1277 = vsel %vm1255, %v1232, %v1250
        %v1278 = vsel %vm1255, %v1234, %v1252
        %v1279 = vsel %vm1255, %v1236, %v1254
        %s1280 = scalar_lea.vmem %s3, 48
        %v1281 = vld [vmem:[%s1280] sm:$0xff]
        %v1282 = vld [vmem:[%s1280 + $0x8] sm:$0xff]
        %v1283 = vld [vmem:[%s1280 + $0x10] sm:$0xff]
        %v1284 = vld [vmem:[%s1280 + $0x18] sm:$0xff]
        %v1285 = vld [vmem:[%s1280 + $0x20] sm:$0xff]
        %v1286 = vld [vmem:[%s1280 + $0x28] sm:$0xff]
        %s1287 = scalar_lea.vmem %s5, 2
        %v1288 = vld [vmem:[%s1287] sm:$0x3]
        %v1290 = vperm.slane %v1288, 0
        %v1291 = vperm.slane %v1288, 1
        %v1294 = vmul.f32 %v1274, %v1290
        %v1295 = vmul.f32 %v1256, %v1291
        %v1296 = vmul.f32 %v1275, %v1290
        %v1297 = vmul.f32 %v1257, %v1291
        %v1298 = vmul.f32 %v1276, %v1290
        %v1299 = vmul.f32 %v1258, %v1291
        %v1300 = vmul.f32 %v1277, %v1290
        %v1301 = vmul.f32 %v1259, %v1291
        %v1302 = vmul.f32 %v1278, %v1290
        %v1303 = vmul.f32 %v1260, %v1291
        %v1304 = vmul.f32 %v1279, %v1290
        %v1305 = vmul.f32 %v1261, %v1291
        %1307 = vset.pattern.permute.xlu0 0
        %1308 = vperm.xlu0 %1307, %v1281
        %v1309 = vpop.permute.xlu0 %1308
        %1312 = vset.pattern.permute.xlu0 0
        %1313 = vperm.xlu0 %1312, %v1282
        %v1314 = vpop.permute.xlu0 %1313
        %1317 = vset.pattern.permute.xlu0 0
        %1318 = vperm.xlu0 %1317, %v1283
        %v1319 = vpop.permute.xlu0 %1318
        %1322 = vset.pattern.permute.xlu0 0
        %1323 = vperm.xlu0 %1322, %v1284
        %v1324 = vpop.permute.xlu0 %1323
        %1327 = vset.pattern.permute.xlu0 0
        %1328 = vperm.xlu0 %1327, %v1285
        %v1329 = vpop.permute.xlu0 %1328
        %1332 = vset.pattern.permute.xlu0 0
        %1333 = vperm.xlu0 %1332, %v1286
        %v1334 = vpop.permute.xlu0 %1333
        %v1336 = vmul.f32 %v1309, %v1294
        %v1337 = vmul.f32 %v1309, %v1295
        %v1338 = vmul.f32 %v1314, %v1296
        %v1339 = vmul.f32 %v1314, %v1297
        %v1340 = vmul.f32 %v1319, %v1298
        %v1341 = vmul.f32 %v1319, %v1299
        %v1342 = vmul.f32 %v1324, %v1300
        %v1343 = vmul.f32 %v1324, %v1301
        %v1344 = vmul.f32 %v1329, %v1302
        %v1345 = vmul.f32 %v1329, %v1303
        %v1346 = vmul.f32 %v1334, %v1304
        %v1347 = vmul.f32 %v1334, %v1305
        %v1348 = vadd.f32 %v1213, %v1336
        %v1349 = vadd.f32 %v1214, %v1337
        %v1350 = vadd.f32 %v1215, %v1338
        %v1351 = vadd.f32 %v1216, %v1339
        %v1352 = vadd.f32 %v1217, %v1340
        %v1353 = vadd.f32 %v1218, %v1341
        %v1354 = vadd.f32 %v1219, %v1342
        %v1355 = vadd.f32 %v1220, %v1343
        %v1356 = vadd.f32 %v1221, %v1344
        %v1357 = vadd.f32 %v1222, %v1345
        %v1358 = vadd.f32 %v1223, %v1346
        %v1359 = vadd.f32 %v1224, %v1347
        %1360 = vrot.lane.b32.xlu0 %v1058, 15
        %v1361 = vpop.permute.xlu0 %1360
        %1362 = vrot.lane.b32.xlu0 %v1062, 15
        %v1363 = vpop.permute.xlu0 %1362
        %1364 = vrot.lane.b32.xlu0 %v1066, 15
        %v1365 = vpop.permute.xlu0 %1364
        %1366 = vrot.lane.b32.xlu0 %v1070, 15
        %v1367 = vpop.permute.xlu0 %1366
        %1368 = vrot.lane.b32.xlu0 %v1074, 15
        %v1369 = vpop.permute.xlu0 %1368
        %1370 = vrot.lane.b32.xlu0 %v1078, 15
        %v1371 = vpop.permute.xlu0 %1370
        %1378 = vrot.lane.b32.xlu0 %v718, 15
        %v1379 = vpop.permute.xlu0 %1378
        %1380 = vrot.lane.b32.xlu0 %v722, 15
        %v1381 = vpop.permute.xlu0 %1380
        %1382 = vrot.lane.b32.xlu0 %v726, 15
        %v1383 = vpop.permute.xlu0 %1382
        %1384 = vrot.lane.b32.xlu0 %v730, 15
        %v1385 = vpop.permute.xlu0 %1384
        %1386 = vrot.lane.b32.xlu0 %v734, 15
        %v1387 = vpop.permute.xlu0 %1386
        %1388 = vrot.lane.b32.xlu0 %v738, 15
        %v1389 = vpop.permute.xlu0 %1388
        %vm1390 = vcmask 121856
        %v1391 = vsel %vm1390, %v1379, %v1361
        %v1392 = vsel %vm1390, %v1381, %v1363
        %v1393 = vsel %vm1390, %v1383, %v1365
        %v1394 = vsel %vm1390, %v1385, %v1367
        %v1395 = vsel %vm1390, %v1387, %v1369
        %v1396 = vsel %vm1390, %v1389, %v1371
        %v1409 = vsel %vm1390, %v1361, %v1379
        %v1410 = vsel %vm1390, %v1363, %v1381
        %v1411 = vsel %vm1390, %v1365, %v1383
        %v1412 = vsel %vm1390, %v1367, %v1385
        %v1413 = vsel %vm1390, %v1369, %v1387
        %v1414 = vsel %vm1390, %v1371, %v1389
        %s1415 = scalar_lea.vmem %s3, 96
        %v1416 = vld [vmem:[%s1415] sm:$0xff]
        %v1417 = vld [vmem:[%s1415 + $0x8] sm:$0xff]
        %v1418 = vld [vmem:[%s1415 + $0x10] sm:$0xff]
        %v1419 = vld [vmem:[%s1415 + $0x18] sm:$0xff]
        %v1420 = vld [vmem:[%s1415 + $0x20] sm:$0xff]
        %v1421 = vld [vmem:[%s1415 + $0x28] sm:$0xff]
        %s1422 = scalar_lea.vmem %s5, 4
        %v1423 = vld [vmem:[%s1422] sm:$0x3]
        %v1425 = vperm.slane %v1423, 0
        %v1426 = vperm.slane %v1423, 1
        %v1429 = vmul.f32 %v1409, %v1425
        %v1430 = vmul.f32 %v1391, %v1426
        %v1431 = vmul.f32 %v1410, %v1425
        %v1432 = vmul.f32 %v1392, %v1426
        %v1433 = vmul.f32 %v1411, %v1425
        %v1434 = vmul.f32 %v1393, %v1426
        %v1435 = vmul.f32 %v1412, %v1425
        %v1436 = vmul.f32 %v1394, %v1426
        %v1437 = vmul.f32 %v1413, %v1425
        %v1438 = vmul.f32 %v1395, %v1426
        %v1439 = vmul.f32 %v1414, %v1425
        %v1440 = vmul.f32 %v1396, %v1426
        %1442 = vset.pattern.permute.xlu0 0
        %1443 = vperm.xlu0 %1442, %v1416
        %v1444 = vpop.permute.xlu0 %1443
        %1447 = vset.pattern.permute.xlu0 0
        %1448 = vperm.xlu0 %1447, %v1417
        %v1449 = vpop.permute.xlu0 %1448
        %1452 = vset.pattern.permute.xlu0 0
        %1453 = vperm.xlu0 %1452, %v1418
        %v1454 = vpop.permute.xlu0 %1453
        %1457 = vset.pattern.permute.xlu0 0
        %1458 = vperm.xlu0 %1457, %v1419
        %v1459 = vpop.permute.xlu0 %1458
        %1462 = vset.pattern.permute.xlu0 0
        %1463 = vperm.xlu0 %1462, %v1420
        %v1464 = vpop.permute.xlu0 %1463
        %1467 = vset.pattern.permute.xlu0 0
        %1468 = vperm.xlu0 %1467, %v1421
        %v1469 = vpop.permute.xlu0 %1468
        %v1471 = vmul.f32 %v1444, %v1429
        %v1472 = vmul.f32 %v1444, %v1430
        %v1473 = vmul.f32 %v1449, %v1431
        %v1474 = vmul.f32 %v1449, %v1432
        %v1475 = vmul.f32 %v1454, %v1433
        %v1476 = vmul.f32 %v1454, %v1434
        %v1477 = vmul.f32 %v1459, %v1435
        %v1478 = vmul.f32 %v1459, %v1436
        %v1479 = vmul.f32 %v1464, %v1437
        %v1480 = vmul.f32 %v1464, %v1438
        %v1481 = vmul.f32 %v1469, %v1439
        %v1482 = vmul.f32 %v1469, %v1440
        %v1483 = vadd.f32 %v1348, %v1471
        %v1484 = vadd.f32 %v1349, %v1472
        %v1485 = vadd.f32 %v1350, %v1473
        %v1486 = vadd.f32 %v1351, %v1474
        %v1487 = vadd.f32 %v1352, %v1475
        %v1488 = vadd.f32 %v1353, %v1476
        %v1489 = vadd.f32 %v1354, %v1477
        %v1490 = vadd.f32 %v1355, %v1478
        %v1491 = vadd.f32 %v1356, %v1479
        %v1492 = vadd.f32 %v1357, %v1480
        %v1493 = vadd.f32 %v1358, %v1481
        %v1494 = vadd.f32 %v1359, %v1482
        %1495 = vrot.lane.b32.xlu0 %v1058, 1
        %v1496 = vpop.permute.xlu0 %1495
        %1497 = vrot.lane.b32.xlu0 %v1062, 1
        %v1498 = vpop.permute.xlu0 %1497
        %1499 = vrot.lane.b32.xlu0 %v1066, 1
        %v1500 = vpop.permute.xlu0 %1499
        %1501 = vrot.lane.b32.xlu0 %v1070, 1
        %v1502 = vpop.permute.xlu0 %1501
        %1503 = vrot.lane.b32.xlu0 %v1074, 1
        %v1504 = vpop.permute.xlu0 %1503
        %1505 = vrot.lane.b32.xlu0 %v1078, 1
        %v1506 = vpop.permute.xlu0 %1505
        %1513 = vrot.lane.b32.xlu0 %v718, 1
        %v1514 = vpop.permute.xlu0 %1513
        %1515 = vrot.lane.b32.xlu0 %v722, 1
        %v1516 = vpop.permute.xlu0 %1515
        %1517 = vrot.lane.b32.xlu0 %v726, 1
        %v1518 = vpop.permute.xlu0 %1517
        %1519 = vrot.lane.b32.xlu0 %v730, 1
        %v1520 = vpop.permute.xlu0 %1519
        %1521 = vrot.lane.b32.xlu0 %v734, 1
        %v1522 = vpop.permute.xlu0 %1521
        %1523 = vrot.lane.b32.xlu0 %v738, 1
        %v1524 = vpop.permute.xlu0 %1523
        %vm1525 = vcmask 7168
        %v1526 = vsel %vm1525, %v1514, %v1496
        %v1527 = vsel %vm1525, %v1516, %v1498
        %v1528 = vsel %vm1525, %v1518, %v1500
        %v1529 = vsel %vm1525, %v1520, %v1502
        %v1530 = vsel %vm1525, %v1522, %v1504
        %v1531 = vsel %vm1525, %v1524, %v1506
        %v1544 = vsel %vm1525, %v1496, %v1514
        %v1545 = vsel %vm1525, %v1498, %v1516
        %v1546 = vsel %vm1525, %v1500, %v1518
        %v1547 = vsel %vm1525, %v1502, %v1520
        %v1548 = vsel %vm1525, %v1504, %v1522
        %v1549 = vsel %vm1525, %v1506, %v1524
        %s1550 = scalar_lea.vmem %s3, 144
        %v1551 = vld [vmem:[%s1550] sm:$0xff]
        %v1552 = vld [vmem:[%s1550 + $0x8] sm:$0xff]
        %v1553 = vld [vmem:[%s1550 + $0x10] sm:$0xff]
        %v1554 = vld [vmem:[%s1550 + $0x18] sm:$0xff]
        %v1555 = vld [vmem:[%s1550 + $0x20] sm:$0xff]
        %v1556 = vld [vmem:[%s1550 + $0x28] sm:$0xff]
        %s1557 = scalar_lea.vmem %s5, 6
        %v1558 = vld [vmem:[%s1557] sm:$0x3]
        %v1560 = vperm.slane %v1558, 0
        %v1561 = vperm.slane %v1558, 1
        %v1564 = vmul.f32 %v1544, %v1560
        %v1565 = vmul.f32 %v1526, %v1561
        %v1566 = vmul.f32 %v1545, %v1560
        %v1567 = vmul.f32 %v1527, %v1561
        %v1568 = vmul.f32 %v1546, %v1560
        %v1569 = vmul.f32 %v1528, %v1561
        %v1570 = vmul.f32 %v1547, %v1560
        %v1571 = vmul.f32 %v1529, %v1561
        %v1572 = vmul.f32 %v1548, %v1560
        %v1573 = vmul.f32 %v1530, %v1561
        %v1574 = vmul.f32 %v1549, %v1560
        %v1575 = vmul.f32 %v1531, %v1561
        %1577 = vset.pattern.permute.xlu0 0
        %1578 = vperm.xlu0 %1577, %v1551
        %v1579 = vpop.permute.xlu0 %1578
        %1582 = vset.pattern.permute.xlu0 0
        %1583 = vperm.xlu0 %1582, %v1552
        %v1584 = vpop.permute.xlu0 %1583
        %1587 = vset.pattern.permute.xlu0 0
        %1588 = vperm.xlu0 %1587, %v1553
        %v1589 = vpop.permute.xlu0 %1588
        %1592 = vset.pattern.permute.xlu0 0
        %1593 = vperm.xlu0 %1592, %v1554
        %v1594 = vpop.permute.xlu0 %1593
        %1597 = vset.pattern.permute.xlu0 0
        %1598 = vperm.xlu0 %1597, %v1555
        %v1599 = vpop.permute.xlu0 %1598
        %1602 = vset.pattern.permute.xlu0 0
        %1603 = vperm.xlu0 %1602, %v1556
        %v1604 = vpop.permute.xlu0 %1603
        %v1606 = vmul.f32 %v1579, %v1564
        %v1607 = vmul.f32 %v1579, %v1565
        %v1608 = vmul.f32 %v1584, %v1566
        %v1609 = vmul.f32 %v1584, %v1567
        %v1610 = vmul.f32 %v1589, %v1568
        %v1611 = vmul.f32 %v1589, %v1569
        %v1612 = vmul.f32 %v1594, %v1570
        %v1613 = vmul.f32 %v1594, %v1571
        %v1614 = vmul.f32 %v1599, %v1572
        %v1615 = vmul.f32 %v1599, %v1573
        %v1616 = vmul.f32 %v1604, %v1574
        %v1617 = vmul.f32 %v1604, %v1575
        %v1618 = vadd.f32 %v1483, %v1606
        %v1619 = vadd.f32 %v1484, %v1607
        %v1620 = vadd.f32 %v1485, %v1608
        %v1621 = vadd.f32 %v1486, %v1609
        %v1622 = vadd.f32 %v1487, %v1610
        %v1623 = vadd.f32 %v1488, %v1611
        %v1624 = vadd.f32 %v1489, %v1612
        %v1625 = vadd.f32 %v1490, %v1613
        %v1626 = vadd.f32 %v1491, %v1614
        %v1627 = vadd.f32 %v1492, %v1615
        %v1628 = vadd.f32 %v1493, %v1616
        %v1629 = vadd.f32 %v1494, %v1617
        %s1630 = scalar_lea.vmem %s3, 192
        %v1631 = vld [vmem:[%s1630] sm:$0xff]
        %v1632 = vld [vmem:[%s1630 + $0x8] sm:$0xff]
        %v1633 = vld [vmem:[%s1630 + $0x10] sm:$0xff]
        %v1634 = vld [vmem:[%s1630 + $0x18] sm:$0xff]
        %v1635 = vld [vmem:[%s1630 + $0x20] sm:$0xff]
        %v1636 = vld [vmem:[%s1630 + $0x28] sm:$0xff]
        %s1637 = scalar_lea.vmem %s5, 8
        %v1638 = vld [vmem:[%s1637] sm:$0x3]
        %v1640 = vperm.slane %v1638, 0
        %v1641 = vperm.slane %v1638, 1
        %v1644 = vmul.f32 %v718, %v1640
        %v1645 = vmul.f32 %v1058, %v1641
        %v1646 = vmul.f32 %v722, %v1640
        %v1647 = vmul.f32 %v1062, %v1641
        %v1648 = vmul.f32 %v726, %v1640
        %v1649 = vmul.f32 %v1066, %v1641
        %v1650 = vmul.f32 %v730, %v1640
        %v1651 = vmul.f32 %v1070, %v1641
        %v1652 = vmul.f32 %v734, %v1640
        %v1653 = vmul.f32 %v1074, %v1641
        %v1654 = vmul.f32 %v738, %v1640
        %v1655 = vmul.f32 %v1078, %v1641
        %1657 = vset.pattern.permute.xlu0 0
        %1658 = vperm.xlu0 %1657, %v1631
        %v1659 = vpop.permute.xlu0 %1658
        %1662 = vset.pattern.permute.xlu0 0
        %1663 = vperm.xlu0 %1662, %v1632
        %v1664 = vpop.permute.xlu0 %1663
        %1667 = vset.pattern.permute.xlu0 0
        %1668 = vperm.xlu0 %1667, %v1633
        %v1669 = vpop.permute.xlu0 %1668
        %1672 = vset.pattern.permute.xlu0 0
        %1673 = vperm.xlu0 %1672, %v1634
        %v1674 = vpop.permute.xlu0 %1673
        %1677 = vset.pattern.permute.xlu0 0
        %1678 = vperm.xlu0 %1677, %v1635
        %v1679 = vpop.permute.xlu0 %1678
        %1682 = vset.pattern.permute.xlu0 0
        %1683 = vperm.xlu0 %1682, %v1636
        %v1684 = vpop.permute.xlu0 %1683
        %v1686 = vmul.f32 %v1659, %v1644
        %v1687 = vmul.f32 %v1659, %v1645
        %v1688 = vmul.f32 %v1664, %v1646
        %v1689 = vmul.f32 %v1664, %v1647
        %v1690 = vmul.f32 %v1669, %v1648
        %v1691 = vmul.f32 %v1669, %v1649
        %v1692 = vmul.f32 %v1674, %v1650
        %v1693 = vmul.f32 %v1674, %v1651
        %v1694 = vmul.f32 %v1679, %v1652
        %v1695 = vmul.f32 %v1679, %v1653
        %v1696 = vmul.f32 %v1684, %v1654
        %v1697 = vmul.f32 %v1684, %v1655
        %v1698 = vadd.f32 %v1618, %v1686
        %v1699 = vadd.f32 %v1619, %v1687
        %v1700 = vadd.f32 %v1620, %v1688
        %v1701 = vadd.f32 %v1621, %v1689
        %v1702 = vadd.f32 %v1622, %v1690
        %v1703 = vadd.f32 %v1623, %v1691
        %v1704 = vadd.f32 %v1624, %v1692
        %v1705 = vadd.f32 %v1625, %v1693
        %v1706 = vadd.f32 %v1626, %v1694
        %v1707 = vadd.f32 %v1627, %v1695
        %v1708 = vadd.f32 %v1628, %v1696
        %v1709 = vadd.f32 %v1629, %v1697
        %1710 = vrot.lane.b32.xlu0 %v718, 127
        %v1711 = vpop.permute.xlu0 %1710
        %1712 = vrot.lane.b32.xlu0 %v1058, 127
        %v1713 = vpop.permute.xlu0 %1712
        %1714 = vrot.lane.b32.xlu0 %v722, 127
        %v1715 = vpop.permute.xlu0 %1714
        %1716 = vrot.lane.b32.xlu0 %v1062, 127
        %v1717 = vpop.permute.xlu0 %1716
        %1718 = vrot.lane.b32.xlu0 %v726, 127
        %v1719 = vpop.permute.xlu0 %1718
        %1720 = vrot.lane.b32.xlu0 %v1066, 127
        %v1721 = vpop.permute.xlu0 %1720
        %1722 = vrot.lane.b32.xlu0 %v730, 127
        %v1723 = vpop.permute.xlu0 %1722
        %1724 = vrot.lane.b32.xlu0 %v1070, 127
        %v1725 = vpop.permute.xlu0 %1724
        %1726 = vrot.lane.b32.xlu0 %v734, 127
        %v1727 = vpop.permute.xlu0 %1726
        %1728 = vrot.lane.b32.xlu0 %v1074, 127
        %v1729 = vpop.permute.xlu0 %1728
        %1730 = vrot.lane.b32.xlu0 %v738, 127
        %v1731 = vpop.permute.xlu0 %1730
        %1732 = vrot.lane.b32.xlu0 %v1078, 127
        %v1733 = vpop.permute.xlu0 %1732
        %vm1734 = vcmask 1039360
        %v1735 = vsel %vm1734, %v1711, %v1713
        %v1736 = vsel %vm1734, %v1715, %v1717
        %v1737 = vsel %vm1734, %v1719, %v1721
        %v1738 = vsel %vm1734, %v1723, %v1725
        %v1739 = vsel %vm1734, %v1727, %v1729
        %v1740 = vsel %vm1734, %v1731, %v1733
        %v1759 = vsel %vm1734, %v1713, %v1711
        %v1760 = vsel %vm1734, %v1717, %v1715
        %v1761 = vsel %vm1734, %v1721, %v1719
        %v1762 = vsel %vm1734, %v1725, %v1723
        %v1763 = vsel %vm1734, %v1729, %v1727
        %v1764 = vsel %vm1734, %v1733, %v1731
        %s1765 = scalar_lea.vmem %s3, 240
        %v1766 = vld [vmem:[%s1765] sm:$0xff]
        %v1767 = vld [vmem:[%s1765 + $0x8] sm:$0xff]
        %v1768 = vld [vmem:[%s1765 + $0x10] sm:$0xff]
        %v1769 = vld [vmem:[%s1765 + $0x18] sm:$0xff]
        %v1770 = vld [vmem:[%s1765 + $0x20] sm:$0xff]
        %v1771 = vld [vmem:[%s1765 + $0x28] sm:$0xff]
        %s1772 = scalar_lea.vmem %s5, 10
        %v1773 = vld [vmem:[%s1772] sm:$0x3]
        %v1775 = vperm.slane %v1773, 0
        %v1776 = vperm.slane %v1773, 1
        %v1779 = vmul.f32 %v1735, %v1775
        %v1780 = vmul.f32 %v1759, %v1776
        %v1781 = vmul.f32 %v1736, %v1775
        %v1782 = vmul.f32 %v1760, %v1776
        %v1783 = vmul.f32 %v1737, %v1775
        %v1784 = vmul.f32 %v1761, %v1776
        %v1785 = vmul.f32 %v1738, %v1775
        %v1786 = vmul.f32 %v1762, %v1776
        %v1787 = vmul.f32 %v1739, %v1775
        %v1788 = vmul.f32 %v1763, %v1776
        %v1789 = vmul.f32 %v1740, %v1775
        %v1790 = vmul.f32 %v1764, %v1776
        %1792 = vset.pattern.permute.xlu0 0
        %1793 = vperm.xlu0 %1792, %v1766
        %v1794 = vpop.permute.xlu0 %1793
        %1797 = vset.pattern.permute.xlu0 0
        %1798 = vperm.xlu0 %1797, %v1767
        %v1799 = vpop.permute.xlu0 %1798
        %1802 = vset.pattern.permute.xlu0 0
        %1803 = vperm.xlu0 %1802, %v1768
        %v1804 = vpop.permute.xlu0 %1803
        %1807 = vset.pattern.permute.xlu0 0
        %1808 = vperm.xlu0 %1807, %v1769
        %v1809 = vpop.permute.xlu0 %1808
        %1812 = vset.pattern.permute.xlu0 0
        %1813 = vperm.xlu0 %1812, %v1770
        %v1814 = vpop.permute.xlu0 %1813
        %1817 = vset.pattern.permute.xlu0 0
        %1818 = vperm.xlu0 %1817, %v1771
        %v1819 = vpop.permute.xlu0 %1818
        %v1821 = vmul.f32 %v1794, %v1779
        %v1822 = vmul.f32 %v1794, %v1780
        %v1823 = vmul.f32 %v1799, %v1781
        %v1824 = vmul.f32 %v1799, %v1782
        %v1825 = vmul.f32 %v1804, %v1783
        %v1826 = vmul.f32 %v1804, %v1784
        %v1827 = vmul.f32 %v1809, %v1785
        %v1828 = vmul.f32 %v1809, %v1786
        %v1829 = vmul.f32 %v1814, %v1787
        %v1830 = vmul.f32 %v1814, %v1788
        %v1831 = vmul.f32 %v1819, %v1789
        %v1832 = vmul.f32 %v1819, %v1790
        %v1833 = vadd.f32 %v1698, %v1821
        %v1834 = vadd.f32 %v1699, %v1822
        %v1835 = vadd.f32 %v1700, %v1823
        %v1836 = vadd.f32 %v1701, %v1824
        %v1837 = vadd.f32 %v1702, %v1825
        %v1838 = vadd.f32 %v1703, %v1826
        %v1839 = vadd.f32 %v1704, %v1827
        %v1840 = vadd.f32 %v1705, %v1828
        %v1841 = vadd.f32 %v1706, %v1829
        %v1842 = vadd.f32 %v1707, %v1830
        %v1843 = vadd.f32 %v1708, %v1831
        %v1844 = vadd.f32 %v1709, %v1832
        %1845 = vrot.lane.b32.xlu0 %v718, 113
        %v1846 = vpop.permute.xlu0 %1845
        %1847 = vrot.lane.b32.xlu0 %v1058, 113
        %v1848 = vpop.permute.xlu0 %1847
        %1849 = vrot.lane.b32.xlu0 %v722, 113
        %v1850 = vpop.permute.xlu0 %1849
        %1851 = vrot.lane.b32.xlu0 %v1062, 113
        %v1852 = vpop.permute.xlu0 %1851
        %1853 = vrot.lane.b32.xlu0 %v726, 113
        %v1854 = vpop.permute.xlu0 %1853
        %1855 = vrot.lane.b32.xlu0 %v1066, 113
        %v1856 = vpop.permute.xlu0 %1855
        %1857 = vrot.lane.b32.xlu0 %v730, 113
        %v1858 = vpop.permute.xlu0 %1857
        %1859 = vrot.lane.b32.xlu0 %v1070, 113
        %v1860 = vpop.permute.xlu0 %1859
        %1861 = vrot.lane.b32.xlu0 %v734, 113
        %v1862 = vpop.permute.xlu0 %1861
        %1863 = vrot.lane.b32.xlu0 %v1074, 113
        %v1864 = vpop.permute.xlu0 %1863
        %1865 = vrot.lane.b32.xlu0 %v738, 113
        %v1866 = vpop.permute.xlu0 %1865
        %1867 = vrot.lane.b32.xlu0 %v1078, 113
        %v1868 = vpop.permute.xlu0 %1867
        %vm1869 = vcmask 924672
        %v1870 = vsel %vm1869, %v1846, %v1848
        %v1871 = vsel %vm1869, %v1850, %v1852
        %v1872 = vsel %vm1869, %v1854, %v1856
        %v1873 = vsel %vm1869, %v1858, %v1860
        %v1874 = vsel %vm1869, %v1862, %v1864
        %v1875 = vsel %vm1869, %v1866, %v1868
        %v1894 = vsel %vm1869, %v1848, %v1846
        %v1895 = vsel %vm1869, %v1852, %v1850
        %v1896 = vsel %vm1869, %v1856, %v1854
        %v1897 = vsel %vm1869, %v1860, %v1858
        %v1898 = vsel %vm1869, %v1864, %v1862
        %v1899 = vsel %vm1869, %v1868, %v1866
        %s1900 = scalar_lea.vmem %s3, 288
        %v1901 = vld [vmem:[%s1900] sm:$0xff]
        %v1902 = vld [vmem:[%s1900 + $0x8] sm:$0xff]
        %v1903 = vld [vmem:[%s1900 + $0x10] sm:$0xff]
        %v1904 = vld [vmem:[%s1900 + $0x18] sm:$0xff]
        %v1905 = vld [vmem:[%s1900 + $0x20] sm:$0xff]
        %v1906 = vld [vmem:[%s1900 + $0x28] sm:$0xff]
        %s1907 = scalar_lea.vmem %s5, 12
        %v1908 = vld [vmem:[%s1907] sm:$0x3]
        %v1910 = vperm.slane %v1908, 0
        %v1911 = vperm.slane %v1908, 1
        %v1914 = vmul.f32 %v1870, %v1910
        %v1915 = vmul.f32 %v1894, %v1911
        %v1916 = vmul.f32 %v1871, %v1910
        %v1917 = vmul.f32 %v1895, %v1911
        %v1918 = vmul.f32 %v1872, %v1910
        %v1919 = vmul.f32 %v1896, %v1911
        %v1920 = vmul.f32 %v1873, %v1910
        %v1921 = vmul.f32 %v1897, %v1911
        %v1922 = vmul.f32 %v1874, %v1910
        %v1923 = vmul.f32 %v1898, %v1911
        %v1924 = vmul.f32 %v1875, %v1910
        %v1925 = vmul.f32 %v1899, %v1911
        %1927 = vset.pattern.permute.xlu0 0
        %1928 = vperm.xlu0 %1927, %v1901
        %v1929 = vpop.permute.xlu0 %1928
        %1932 = vset.pattern.permute.xlu0 0
        %1933 = vperm.xlu0 %1932, %v1902
        %v1934 = vpop.permute.xlu0 %1933
        %1937 = vset.pattern.permute.xlu0 0
        %1938 = vperm.xlu0 %1937, %v1903
        %v1939 = vpop.permute.xlu0 %1938
        %1942 = vset.pattern.permute.xlu0 0
        %1943 = vperm.xlu0 %1942, %v1904
        %v1944 = vpop.permute.xlu0 %1943
        %1947 = vset.pattern.permute.xlu0 0
        %1948 = vperm.xlu0 %1947, %v1905
        %v1949 = vpop.permute.xlu0 %1948
        %1952 = vset.pattern.permute.xlu0 0
        %1953 = vperm.xlu0 %1952, %v1906
        %v1954 = vpop.permute.xlu0 %1953
        %v1956 = vmul.f32 %v1929, %v1914
        %v1957 = vmul.f32 %v1929, %v1915
        %v1958 = vmul.f32 %v1934, %v1916
        %v1959 = vmul.f32 %v1934, %v1917
        %v1960 = vmul.f32 %v1939, %v1918
        %v1961 = vmul.f32 %v1939, %v1919
        %v1962 = vmul.f32 %v1944, %v1920
        %v1963 = vmul.f32 %v1944, %v1921
        %v1964 = vmul.f32 %v1949, %v1922
        %v1965 = vmul.f32 %v1949, %v1923
        %v1966 = vmul.f32 %v1954, %v1924
        %v1967 = vmul.f32 %v1954, %v1925
        %v1968 = vadd.f32 %v1833, %v1956
        %v1969 = vadd.f32 %v1834, %v1957
        %v1970 = vadd.f32 %v1835, %v1958
        %v1971 = vadd.f32 %v1836, %v1959
        %v1972 = vadd.f32 %v1837, %v1960
        %v1973 = vadd.f32 %v1838, %v1961
        %v1974 = vadd.f32 %v1839, %v1962
        %v1975 = vadd.f32 %v1840, %v1963
        %v1976 = vadd.f32 %v1841, %v1964
        %v1977 = vadd.f32 %v1842, %v1965
        %v1978 = vadd.f32 %v1843, %v1966
        %v1979 = vadd.f32 %v1844, %v1967
        %1980 = vrot.lane.b32.xlu0 %v718, 112
        %v1981 = vpop.permute.xlu0 %1980
        %1982 = vrot.lane.b32.xlu0 %v1058, 112
        %v1983 = vpop.permute.xlu0 %1982
        %1984 = vrot.lane.b32.xlu0 %v722, 112
        %v1985 = vpop.permute.xlu0 %1984
        %1986 = vrot.lane.b32.xlu0 %v1062, 112
        %v1987 = vpop.permute.xlu0 %1986
        %1988 = vrot.lane.b32.xlu0 %v726, 112
        %v1989 = vpop.permute.xlu0 %1988
        %1990 = vrot.lane.b32.xlu0 %v1066, 112
        %v1991 = vpop.permute.xlu0 %1990
        %1992 = vrot.lane.b32.xlu0 %v730, 112
        %v1993 = vpop.permute.xlu0 %1992
        %1994 = vrot.lane.b32.xlu0 %v1070, 112
        %v1995 = vpop.permute.xlu0 %1994
        %1996 = vrot.lane.b32.xlu0 %v734, 112
        %v1997 = vpop.permute.xlu0 %1996
        %1998 = vrot.lane.b32.xlu0 %v1074, 112
        %v1999 = vpop.permute.xlu0 %1998
        %2000 = vrot.lane.b32.xlu0 %v738, 112
        %v2001 = vpop.permute.xlu0 %2000
        %2002 = vrot.lane.b32.xlu0 %v1078, 112
        %v2003 = vpop.permute.xlu0 %2002
        %vm2004 = vcmask 916480
        %v2005 = vsel %vm2004, %v1981, %v1983
        %v2006 = vsel %vm2004, %v1985, %v1987
        %v2007 = vsel %vm2004, %v1989, %v1991
        %v2008 = vsel %vm2004, %v1993, %v1995
        %v2009 = vsel %vm2004, %v1997, %v1999
        %v2010 = vsel %vm2004, %v2001, %v2003
        %v2029 = vsel %vm2004, %v1983, %v1981
        %v2030 = vsel %vm2004, %v1987, %v1985
        %v2031 = vsel %vm2004, %v1991, %v1989
        %v2032 = vsel %vm2004, %v1995, %v1993
        %v2033 = vsel %vm2004, %v1999, %v1997
        %v2034 = vsel %vm2004, %v2003, %v2001
        %s2035 = scalar_lea.vmem %s3, 336
        %v2036 = vld [vmem:[%s2035] sm:$0xff]
        %v2037 = vld [vmem:[%s2035 + $0x8] sm:$0xff]
        %v2038 = vld [vmem:[%s2035 + $0x10] sm:$0xff]
        %v2039 = vld [vmem:[%s2035 + $0x18] sm:$0xff]
        %v2040 = vld [vmem:[%s2035 + $0x20] sm:$0xff]
        %v2041 = vld [vmem:[%s2035 + $0x28] sm:$0xff]
        %s2042 = scalar_lea.vmem %s5, 14
        %v2043 = vld [vmem:[%s2042] sm:$0x3]
        %v2045 = vperm.slane %v2043, 0
        %v2046 = vperm.slane %v2043, 1
        %v2049 = vmul.f32 %v2005, %v2045
        %v2050 = vmul.f32 %v2029, %v2046
        %v2051 = vmul.f32 %v2006, %v2045
        %v2052 = vmul.f32 %v2030, %v2046
        %v2053 = vmul.f32 %v2007, %v2045
        %v2054 = vmul.f32 %v2031, %v2046
        %v2055 = vmul.f32 %v2008, %v2045
        %v2056 = vmul.f32 %v2032, %v2046
        %v2057 = vmul.f32 %v2009, %v2045
        %v2058 = vmul.f32 %v2033, %v2046
        %v2059 = vmul.f32 %v2010, %v2045
        %v2060 = vmul.f32 %v2034, %v2046
        %2062 = vset.pattern.permute.xlu0 0
        %2063 = vperm.xlu0 %2062, %v2036
        %v2064 = vpop.permute.xlu0 %2063
        %2067 = vset.pattern.permute.xlu0 0
        %2068 = vperm.xlu0 %2067, %v2037
        %v2069 = vpop.permute.xlu0 %2068
        %2072 = vset.pattern.permute.xlu0 0
        %2073 = vperm.xlu0 %2072, %v2038
        %v2074 = vpop.permute.xlu0 %2073
        %2077 = vset.pattern.permute.xlu0 0
        %2078 = vperm.xlu0 %2077, %v2039
        %v2079 = vpop.permute.xlu0 %2078
        %2082 = vset.pattern.permute.xlu0 0
        %2083 = vperm.xlu0 %2082, %v2040
        %v2084 = vpop.permute.xlu0 %2083
        %2087 = vset.pattern.permute.xlu0 0
        %2088 = vperm.xlu0 %2087, %v2041
        %v2089 = vpop.permute.xlu0 %2088
        %v2091 = vmul.f32 %v2064, %v2049
        %v2092 = vmul.f32 %v2064, %v2050
        %v2093 = vmul.f32 %v2069, %v2051
        %v2094 = vmul.f32 %v2069, %v2052
        %v2095 = vmul.f32 %v2074, %v2053
        %v2096 = vmul.f32 %v2074, %v2054
        %v2097 = vmul.f32 %v2079, %v2055
        %v2098 = vmul.f32 %v2079, %v2056
        %v2099 = vmul.f32 %v2084, %v2057
        %v2100 = vmul.f32 %v2084, %v2058
        %v2101 = vmul.f32 %v2089, %v2059
        %v2102 = vmul.f32 %v2089, %v2060
        %v2103 = vadd.f32 %v1968, %v2091
        %v2104 = vadd.f32 %v1969, %v2092
        %v2105 = vadd.f32 %v1970, %v2093
        %v2106 = vadd.f32 %v1971, %v2094
        %v2107 = vadd.f32 %v1972, %v2095
        %v2108 = vadd.f32 %v1973, %v2096
        %v2109 = vadd.f32 %v1974, %v2097
        %v2110 = vadd.f32 %v1975, %v2098
        %v2111 = vadd.f32 %v1976, %v2099
        %v2112 = vadd.f32 %v1977, %v2100
        %v2113 = vadd.f32 %v1978, %v2101
        %v2114 = vadd.f32 %v1979, %v2102
        %2115 = vrot.lane.b32.xlu0 %v718, 111
        %v2116 = vpop.permute.xlu0 %2115
        %2117 = vrot.lane.b32.xlu0 %v1058, 111
        %v2118 = vpop.permute.xlu0 %2117
        %2119 = vrot.lane.b32.xlu0 %v722, 111
        %v2120 = vpop.permute.xlu0 %2119
        %2121 = vrot.lane.b32.xlu0 %v1062, 111
        %v2122 = vpop.permute.xlu0 %2121
        %2123 = vrot.lane.b32.xlu0 %v726, 111
        %v2124 = vpop.permute.xlu0 %2123
        %2125 = vrot.lane.b32.xlu0 %v1066, 111
        %v2126 = vpop.permute.xlu0 %2125
        %2127 = vrot.lane.b32.xlu0 %v730, 111
        %v2128 = vpop.permute.xlu0 %2127
        %2129 = vrot.lane.b32.xlu0 %v1070, 111
        %v2130 = vpop.permute.xlu0 %2129
        %2131 = vrot.lane.b32.xlu0 %v734, 111
        %v2132 = vpop.permute.xlu0 %2131
        %2133 = vrot.lane.b32.xlu0 %v1074, 111
        %v2134 = vpop.permute.xlu0 %2133
        %2135 = vrot.lane.b32.xlu0 %v738, 111
        %v2136 = vpop.permute.xlu0 %2135
        %2137 = vrot.lane.b32.xlu0 %v1078, 111
        %v2138 = vpop.permute.xlu0 %2137
        %vm2139 = vcmask 908288
        %v2140 = vsel %vm2139, %v2116, %v2118
        %v2141 = vsel %vm2139, %v2120, %v2122
        %v2142 = vsel %vm2139, %v2124, %v2126
        %v2143 = vsel %vm2139, %v2128, %v2130
        %v2144 = vsel %vm2139, %v2132, %v2134
        %v2145 = vsel %vm2139, %v2136, %v2138
        %v2164 = vsel %vm2139, %v2118, %v2116
        %v2165 = vsel %vm2139, %v2122, %v2120
        %v2166 = vsel %vm2139, %v2126, %v2124
        %v2167 = vsel %vm2139, %v2130, %v2128
        %v2168 = vsel %vm2139, %v2134, %v2132
        %v2169 = vsel %vm2139, %v2138, %v2136
        %s2170 = scalar_lea.vmem %s3, 384
        %v2171 = vld [vmem:[%s2170] sm:$0xff]
        %v2172 = vld [vmem:[%s2170 + $0x8] sm:$0xff]
        %v2173 = vld [vmem:[%s2170 + $0x10] sm:$0xff]
        %v2174 = vld [vmem:[%s2170 + $0x18] sm:$0xff]
        %v2175 = vld [vmem:[%s2170 + $0x20] sm:$0xff]
        %v2176 = vld [vmem:[%s2170 + $0x28] sm:$0xff]
        %s2177 = scalar_lea.vmem %s5, 16
        %v2178 = vld [vmem:[%s2177] sm:$0x3]
        %v2180 = vperm.slane %v2178, 0
        %v2181 = vperm.slane %v2178, 1
        %v2184 = vmul.f32 %v2140, %v2180
        %v2185 = vmul.f32 %v2164, %v2181
        %v2186 = vmul.f32 %v2141, %v2180
        %v2187 = vmul.f32 %v2165, %v2181
        %v2188 = vmul.f32 %v2142, %v2180
        %v2189 = vmul.f32 %v2166, %v2181
        %v2190 = vmul.f32 %v2143, %v2180
        %v2191 = vmul.f32 %v2167, %v2181
        %v2192 = vmul.f32 %v2144, %v2180
        %v2193 = vmul.f32 %v2168, %v2181
        %v2194 = vmul.f32 %v2145, %v2180
        %v2195 = vmul.f32 %v2169, %v2181
        %2197 = vset.pattern.permute.xlu0 0
        %2198 = vperm.xlu0 %2197, %v2171
        %v2199 = vpop.permute.xlu0 %2198
        %2202 = vset.pattern.permute.xlu0 0
        %2203 = vperm.xlu0 %2202, %v2172
        %v2204 = vpop.permute.xlu0 %2203
        %2207 = vset.pattern.permute.xlu0 0
        %2208 = vperm.xlu0 %2207, %v2173
        %v2209 = vpop.permute.xlu0 %2208
        %2212 = vset.pattern.permute.xlu0 0
        %2213 = vperm.xlu0 %2212, %v2174
        %v2214 = vpop.permute.xlu0 %2213
        %2217 = vset.pattern.permute.xlu0 0
        %2218 = vperm.xlu0 %2217, %v2175
        %v2219 = vpop.permute.xlu0 %2218
        %2222 = vset.pattern.permute.xlu0 0
        %2223 = vperm.xlu0 %2222, %v2176
        %v2224 = vpop.permute.xlu0 %2223
        %v2226 = vmul.f32 %v2199, %v2184
        %v2227 = vmul.f32 %v2199, %v2185
        %v2228 = vmul.f32 %v2204, %v2186
        %v2229 = vmul.f32 %v2204, %v2187
        %v2230 = vmul.f32 %v2209, %v2188
        %v2231 = vmul.f32 %v2209, %v2189
        %v2232 = vmul.f32 %v2214, %v2190
        %v2233 = vmul.f32 %v2214, %v2191
        %v2234 = vmul.f32 %v2219, %v2192
        %v2235 = vmul.f32 %v2219, %v2193
        %v2236 = vmul.f32 %v2224, %v2194
        %v2237 = vmul.f32 %v2224, %v2195
        %v2238 = vadd.f32 %v2103, %v2226
        %v2239 = vadd.f32 %v2104, %v2227
        %v2240 = vadd.f32 %v2105, %v2228
        %v2241 = vadd.f32 %v2106, %v2229
        %v2242 = vadd.f32 %v2107, %v2230
        %v2243 = vadd.f32 %v2108, %v2231
        %v2244 = vadd.f32 %v2109, %v2232
        %v2245 = vadd.f32 %v2110, %v2233
        %v2246 = vadd.f32 %v2111, %v2234
        %v2247 = vadd.f32 %v2112, %v2235
        %v2248 = vadd.f32 %v2113, %v2236
        %v2249 = vadd.f32 %v2114, %v2237
        %v2250 = vld [vmem:[%s4] sm:$0xff]
        %v2251 = vld [vmem:[%s4 + $0x8] sm:$0xff]
        %v2252 = vld [vmem:[%s4 + $0x10] sm:$0xff]
        %v2253 = vld [vmem:[%s4 + $0x18] sm:$0xff]
        %v2254 = vld [vmem:[%s4 + $0x20] sm:$0xff]
        %v2255 = vld [vmem:[%s4 + $0x28] sm:$0xff]
        %2257 = vset.pattern.permute.xlu0 0
        %2258 = vperm.xlu0 %2257, %v2250
        %v2259 = vpop.permute.xlu0 %2258
        %2262 = vset.pattern.permute.xlu0 0
        %2263 = vperm.xlu0 %2262, %v2251
        %v2264 = vpop.permute.xlu0 %2263
        %2267 = vset.pattern.permute.xlu0 0
        %2268 = vperm.xlu0 %2267, %v2252
        %v2269 = vpop.permute.xlu0 %2268
        %2272 = vset.pattern.permute.xlu0 0
        %2273 = vperm.xlu0 %2272, %v2253
        %v2274 = vpop.permute.xlu0 %2273
        %2277 = vset.pattern.permute.xlu0 0
        %2278 = vperm.xlu0 %2277, %v2254
        %v2279 = vpop.permute.xlu0 %2278
        %2282 = vset.pattern.permute.xlu0 0
        %2283 = vperm.xlu0 %2282, %v2255
        %v2284 = vpop.permute.xlu0 %2283
        %v2286 = vadd.f32 %v2238, %v2259
        %v2287 = vadd.f32 %v2239, %v2259
        %v2288 = vadd.f32 %v2240, %v2264
        %v2289 = vadd.f32 %v2241, %v2264
        %v2290 = vadd.f32 %v2242, %v2269
        %v2291 = vadd.f32 %v2243, %v2269
        %v2292 = vadd.f32 %v2244, %v2274
        %v2293 = vadd.f32 %v2245, %v2274
        %v2294 = vadd.f32 %v2246, %v2279
        %v2295 = vadd.f32 %v2247, %v2279
        %v2296 = vadd.f32 %v2248, %v2284
        %v2297 = vadd.f32 %v2249, %v2284
        %v2298 = vmul.f32 %v2294, %v2294
        %v2299 = vmul.f32 %v2295, %v2295
        %v2300 = vadd.f32 %v2298, %v2299
        %2301 = vadd.xlane.f32.xlu0 %v2300
        %v2302 = vpop.xlane.xlu0 %2301
        %v2303 = vrsqrt.pop %v2302
        %v2304 = vmul.f32 %v2303, %v2302
        %v2305 = vmul.f32 %v2304, %v2303
        %v2306 = vmul.f32 0.5, %v2305
        %v2307 = vsub.f32 1.5, %v2306
        %v2308 = vmul.f32 %v2303, %v2307
        %v2309 = vmul.f32 %v2302, %v2308
        %vm2310 = vcmp.eq.f32.partialorder %v2302, inf
        %v2311 = vsel %vm2310, %v2302, %v2309
        %vm2312 = vcmp.eq.f32.partialorder %v2302, 0.0
        %v2313 = vand.u32 %v2302, 2147483648
        %v2314 = vsel %vm2312, %v2313, %v2311
        %v2315 = vmax.f32 %v2314, 1e-12
        %v2316 = vrcp.pop %v2315
        %v2317 = vmul.f32 %v2315, %v2316
        %v2318 = vsub.f32 1.0, %v2317
        %v2319 = vmul.f32 %v2316, %v2318
        %v2320 = vadd.f32 %v2316, %v2319
        %vm2321 = vweird.f32 %v2315
        %vm2322 = vweird.f32 %v2316
        %vm2323 = vmor %vm2321, %vm2322
        %v2324 = vsel %vm2323, %v2316, %v2320
        %v2325 = vand.u32 2147483647, %v2315
        %vm2326 = vcmp.eq.f32.partialorder %v2325, 8.507059e+37
        %v2327 = vand.u32 %v2315, 2147483648
        %v2328 = vor.u32 1.1754944e-38, %v2327
        %v2329 = vsel %vm2326, %v2328, %v2324
        %v2330 = vmul.f32 %v2294, %v2329
        %v2331 = vmul.f32 %v2295, %v2329
        %v2332 = vmul.f32 %v2286, %v2286
        %v2333 = vmul.f32 %v2287, %v2287
        %v2334 = vadd.f32 %v2332, %v2333
        %2335 = vadd.xlane.f32.xlu0 %v2334
        %v2336 = vpop.xlane.xlu0 %2335
        %v2337 = vrsqrt.pop %v2336
        %v2338 = vmul.f32 %v2337, %v2336
        %v2339 = vmul.f32 %v2338, %v2337
        %v2340 = vmul.f32 0.5, %v2339
        %v2341 = vsub.f32 1.5, %v2340
        %v2342 = vmul.f32 %v2337, %v2341
        %v2343 = vmul.f32 %v2336, %v2342
        %vm2344 = vcmp.eq.f32.partialorder %v2336, inf
        %v2345 = vsel %vm2344, %v2336, %v2343
        %vm2346 = vcmp.eq.f32.partialorder %v2336, 0.0
        %v2347 = vand.u32 %v2336, 2147483648
        %v2348 = vsel %vm2346, %v2347, %v2345
        %v2349 = vmax.f32 %v2348, 1e-12
        %v2350 = vrcp.pop %v2349
        %v2351 = vmul.f32 %v2349, %v2350
        %v2352 = vsub.f32 1.0, %v2351
        %v2353 = vmul.f32 %v2350, %v2352
        %v2354 = vadd.f32 %v2350, %v2353
        %vm2355 = vweird.f32 %v2349
        %vm2356 = vweird.f32 %v2350
        %vm2357 = vmor %vm2355, %vm2356
        %v2358 = vsel %vm2357, %v2350, %v2354
        %v2359 = vand.u32 2147483647, %v2349
        %vm2360 = vcmp.eq.f32.partialorder %v2359, 8.507059e+37
        %v2361 = vand.u32 %v2349, 2147483648
        %v2362 = vor.u32 1.1754944e-38, %v2361
        %v2363 = vsel %vm2360, %v2362, %v2358
        %v2364 = vmul.f32 %v2286, %v2363
        %v2365 = vmul.f32 %v2287, %v2363
        %2366 = vmatpush.xpose.msra.mxu0 0.0
        %2367 = vmatpush.xpose.msra.mxu0 0.0
        %2368 = vmatpush.xpose.msra.mxu0 0.0
        %2369 = vmatpush.xpose.msra.mxu0 0.0
        %2370 = vmatpush.xpose.msra.mxu0 0.0
        %2371 = vmatpush.xpose.msra.mxu0 0.0
        %2372 = vmatpush.xpose.msra.mxu0 0.0
        %2373 = vmatpush.xpose.msra.mxu0 0.0
        %2374 = vmatpush.xpose.msra.mxu0 0.0
        %2375 = vmatpush.xpose.msra.mxu0 0.0
        %2376 = vmatpush.xpose.msra.mxu0 0.0
        %2377 = vmatpush.xpose.msra.mxu0 0.0
        %2378 = vmatpush.xpose.msra.mxu0 0.0
        %2379 = vmatpush.xpose.msra.mxu0 0.0
        %2380 = vmatpush.xpose.msra.mxu0 0.0
        %v2381 = vand.u32 %v2364, 4294901760
        %2382 = vmatpush.xpose.msra.mxu0 %v2381
        %v2383 = vand.u32 %v2330, 4294901760
        %v2384 = vsub.f32 %v2330, %v2383
        %v2385 = vand.u32 %v2384, 4294901760
        %v2386 = vsub.f32 %v2384, %v2385
        %v2387 = vand.u32 %v2386, 4294901760
        %2388 = vmatmul.f32.gmra.mxu0 %v2387
        %v2389 = vpop.f32.mrf.mxu0
        %v2390 = vadd.f32 0.0, %v2389
        %2391 = vdwg.mxu0
        %2392 = vmatpush.xpose.msra.mxu0 0.0
        %2393 = vmatpush.xpose.msra.mxu0 0.0
        %2394 = vmatpush.xpose.msra.mxu0 0.0
        %2395 = vmatpush.xpose.msra.mxu0 0.0
        %2396 = vmatpush.xpose.msra.mxu0 0.0
        %2397 = vmatpush.xpose.msra.mxu0 0.0
        %2398 = vmatpush.xpose.msra.mxu0 0.0
        %2399 = vmatpush.xpose.msra.mxu0 0.0
        %2400 = vmatpush.xpose.msra.mxu0 0.0
        %2401 = vmatpush.xpose.msra.mxu0 0.0
        %2402 = vmatpush.xpose.msra.mxu0 0.0
        %2403 = vmatpush.xpose.msra.mxu0 0.0
        %2404 = vmatpush.xpose.msra.mxu0 0.0
        %2405 = vmatpush.xpose.msra.mxu0 0.0
        %2406 = vmatpush.xpose.msra.mxu0 0.0
        %v2407 = vand.u32 %v2364, 4294901760
        %v2408 = vsub.f32 %v2364, %v2407
        %v2409 = vand.u32 %v2408, 4294901760
        %v2410 = vsub.f32 %v2408, %v2409
        %v2411 = vand.u32 %v2410, 4294901760
        %2412 = vmatpush.xpose.msra.mxu0 %v2411
        %v2413 = vand.u32 %v2330, 4294901760
        %2414 = vmatmul.f32.gmra.mxu0 %v2413
        %v2415 = vpop.f32.mrf.mxu0
        %v2416 = vadd.f32 %v2390, %v2415
        %2417 = vdwg.mxu0
        %2418 = vmatpush.xpose.msra.mxu0 0.0
        %2419 = vmatpush.xpose.msra.mxu0 0.0
        %2420 = vmatpush.xpose.msra.mxu0 0.0
        %2421 = vmatpush.xpose.msra.mxu0 0.0
        %2422 = vmatpush.xpose.msra.mxu0 0.0
        %2423 = vmatpush.xpose.msra.mxu0 0.0
        %2424 = vmatpush.xpose.msra.mxu0 0.0
        %2425 = vmatpush.xpose.msra.mxu0 0.0
        %2426 = vmatpush.xpose.msra.mxu0 0.0
        %2427 = vmatpush.xpose.msra.mxu0 0.0
        %2428 = vmatpush.xpose.msra.mxu0 0.0
        %2429 = vmatpush.xpose.msra.mxu0 0.0
        %2430 = vmatpush.xpose.msra.mxu0 0.0
        %2431 = vmatpush.xpose.msra.mxu0 0.0
        %2432 = vmatpush.xpose.msra.mxu0 0.0
        %v2433 = vand.u32 %v2364, 4294901760
        %v2434 = vsub.f32 %v2364, %v2433
        %2435 = vmatpush.xpose.msra.mxu0 %v2434
        %v2436 = vand.u32 %v2330, 4294901760
        %v2437 = vsub.f32 %v2330, %v2436
        %2438 = vmatmul.f32.gmra.mxu0 %v2437
        %v2439 = vpop.f32.mrf.mxu0
        %v2440 = vadd.f32 %v2416, %v2439
        %2441 = vdwg.mxu0
        %2442 = vmatpush.xpose.msra.mxu0 0.0
        %2443 = vmatpush.xpose.msra.mxu0 0.0
        %2444 = vmatpush.xpose.msra.mxu0 0.0
        %2445 = vmatpush.xpose.msra.mxu0 0.0
        %2446 = vmatpush.xpose.msra.mxu0 0.0
        %2447 = vmatpush.xpose.msra.mxu0 0.0
        %2448 = vmatpush.xpose.msra.mxu0 0.0
        %2449 = vmatpush.xpose.msra.mxu0 0.0
        %2450 = vmatpush.xpose.msra.mxu0 0.0
        %2451 = vmatpush.xpose.msra.mxu0 0.0
        %2452 = vmatpush.xpose.msra.mxu0 0.0
        %2453 = vmatpush.xpose.msra.mxu0 0.0
        %2454 = vmatpush.xpose.msra.mxu0 0.0
        %2455 = vmatpush.xpose.msra.mxu0 0.0
        %2456 = vmatpush.xpose.msra.mxu0 0.0
        %v2457 = vand.u32 %v2364, 4294901760
        %2458 = vmatpush.xpose.msra.mxu0 %v2457
        %v2459 = vand.u32 %v2330, 4294901760
        %v2460 = vsub.f32 %v2330, %v2459
        %v2461 = vand.u32 %v2460, 4294901760
        %2462 = vmatmul.f32.gmra.mxu0 %v2461
        %v2463 = vpop.f32.mrf.mxu0
        %v2464 = vadd.f32 %v2440, %v2463
        %2465 = vdwg.mxu0
        %2466 = vmatpush.xpose.msra.mxu0 0.0
        %2467 = vmatpush.xpose.msra.mxu0 0.0
        %2468 = vmatpush.xpose.msra.mxu0 0.0
        %2469 = vmatpush.xpose.msra.mxu0 0.0
        %2470 = vmatpush.xpose.msra.mxu0 0.0
        %2471 = vmatpush.xpose.msra.mxu0 0.0
        %2472 = vmatpush.xpose.msra.mxu0 0.0
        %2473 = vmatpush.xpose.msra.mxu0 0.0
        %2474 = vmatpush.xpose.msra.mxu0 0.0
        %2475 = vmatpush.xpose.msra.mxu0 0.0
        %2476 = vmatpush.xpose.msra.mxu0 0.0
        %2477 = vmatpush.xpose.msra.mxu0 0.0
        %2478 = vmatpush.xpose.msra.mxu0 0.0
        %2479 = vmatpush.xpose.msra.mxu0 0.0
        %2480 = vmatpush.xpose.msra.mxu0 0.0
        %v2481 = vand.u32 %v2364, 4294901760
        %v2482 = vsub.f32 %v2364, %v2481
        %v2483 = vand.u32 %v2482, 4294901760
        %2484 = vmatpush.xpose.msra.mxu0 %v2483
        %v2485 = vand.u32 %v2330, 4294901760
        %2486 = vmatmul.f32.gmra.mxu0 %v2485
        %v2487 = vpop.f32.mrf.mxu0
        %v2488 = vadd.f32 %v2464, %v2487
        %2489 = vdwg.mxu0
        %2490 = vmatpush.xpose.msra.mxu0 0.0
        %2491 = vmatpush.xpose.msra.mxu0 0.0
        %2492 = vmatpush.xpose.msra.mxu0 0.0
        %2493 = vmatpush.xpose.msra.mxu0 0.0
        %2494 = vmatpush.xpose.msra.mxu0 0.0
        %2495 = vmatpush.xpose.msra.mxu0 0.0
        %2496 = vmatpush.xpose.msra.mxu0 0.0
        %2497 = vmatpush.xpose.msra.mxu0 0.0
        %2498 = vmatpush.xpose.msra.mxu0 0.0
        %2499 = vmatpush.xpose.msra.mxu0 0.0
        %2500 = vmatpush.xpose.msra.mxu0 0.0
        %2501 = vmatpush.xpose.msra.mxu0 0.0
        %2502 = vmatpush.xpose.msra.mxu0 0.0
        %2503 = vmatpush.xpose.msra.mxu0 0.0
        %2504 = vmatpush.xpose.msra.mxu0 0.0
        %v2505 = vand.u32 %v2364, 4294901760
        %2506 = vmatpush.xpose.msra.mxu0 %v2505
        %v2507 = vand.u32 %v2330, 4294901760
        %2508 = vmatmul.f32.gmra.mxu0 %v2507
        %v2509 = vpop.f32.mrf.mxu0
        %v2510 = vadd.f32 %v2488, %v2509
        %2511 = vdwg.mxu0
        %2512 = vmatpush.xpose.msra.mxu0 0.0
        %2513 = vmatpush.xpose.msra.mxu0 0.0
        %2514 = vmatpush.xpose.msra.mxu0 0.0
        %2515 = vmatpush.xpose.msra.mxu0 0.0
        %2516 = vmatpush.xpose.msra.mxu0 0.0
        %2517 = vmatpush.xpose.msra.mxu0 0.0
        %2518 = vmatpush.xpose.msra.mxu0 0.0
        %2519 = vmatpush.xpose.msra.mxu0 0.0
        %2520 = vmatpush.xpose.msra.mxu0 0.0
        %2521 = vmatpush.xpose.msra.mxu0 0.0
        %2522 = vmatpush.xpose.msra.mxu0 0.0
        %2523 = vmatpush.xpose.msra.mxu0 0.0
        %2524 = vmatpush.xpose.msra.mxu0 0.0
        %2525 = vmatpush.xpose.msra.mxu0 0.0
        %2526 = vmatpush.xpose.msra.mxu0 0.0
        %v2527 = vand.u32 %v2365, 4294901760
        %2528 = vmatpush.xpose.msra.mxu0 %v2527
        %v2529 = vand.u32 %v2331, 4294901760
        %v2530 = vsub.f32 %v2331, %v2529
        %v2531 = vand.u32 %v2530, 4294901760
        %v2532 = vsub.f32 %v2530, %v2531
        %v2533 = vand.u32 %v2532, 4294901760
        %2534 = vmatmul.f32.gmra.mxu0 %v2533
        %v2535 = vpop.f32.mrf.mxu0
        %v2536 = vadd.f32 %v2510, %v2535
        %2537 = vdwg.mxu0
        %2538 = vmatpush.xpose.msra.mxu0 0.0
        %2539 = vmatpush.xpose.msra.mxu0 0.0
        %2540 = vmatpush.xpose.msra.mxu0 0.0
        %2541 = vmatpush.xpose.msra.mxu0 0.0
        %2542 = vmatpush.xpose.msra.mxu0 0.0
        %2543 = vmatpush.xpose.msra.mxu0 0.0
        %2544 = vmatpush.xpose.msra.mxu0 0.0
        %2545 = vmatpush.xpose.msra.mxu0 0.0
        %2546 = vmatpush.xpose.msra.mxu0 0.0
        %2547 = vmatpush.xpose.msra.mxu0 0.0
        %2548 = vmatpush.xpose.msra.mxu0 0.0
        %2549 = vmatpush.xpose.msra.mxu0 0.0
        %2550 = vmatpush.xpose.msra.mxu0 0.0
        %2551 = vmatpush.xpose.msra.mxu0 0.0
        %2552 = vmatpush.xpose.msra.mxu0 0.0
        %v2553 = vand.u32 %v2365, 4294901760
        %v2554 = vsub.f32 %v2365, %v2553
        %v2555 = vand.u32 %v2554, 4294901760
        %v2556 = vsub.f32 %v2554, %v2555
        %v2557 = vand.u32 %v2556, 4294901760
        %2558 = vmatpush.xpose.msra.mxu0 %v2557
        %v2559 = vand.u32 %v2331, 4294901760
        %2560 = vmatmul.f32.gmra.mxu0 %v2559
        %v2561 = vpop.f32.mrf.mxu0
        %v2562 = vadd.f32 %v2536, %v2561
        %2563 = vdwg.mxu0
        %2564 = vmatpush.xpose.msra.mxu0 0.0
        %2565 = vmatpush.xpose.msra.mxu0 0.0
        %2566 = vmatpush.xpose.msra.mxu0 0.0
        %2567 = vmatpush.xpose.msra.mxu0 0.0
        %2568 = vmatpush.xpose.msra.mxu0 0.0
        %2569 = vmatpush.xpose.msra.mxu0 0.0
        %2570 = vmatpush.xpose.msra.mxu0 0.0
        %2571 = vmatpush.xpose.msra.mxu0 0.0
        %2572 = vmatpush.xpose.msra.mxu0 0.0
        %2573 = vmatpush.xpose.msra.mxu0 0.0
        %2574 = vmatpush.xpose.msra.mxu0 0.0
        %2575 = vmatpush.xpose.msra.mxu0 0.0
        %2576 = vmatpush.xpose.msra.mxu0 0.0
        %2577 = vmatpush.xpose.msra.mxu0 0.0
        %2578 = vmatpush.xpose.msra.mxu0 0.0
        %v2579 = vand.u32 %v2365, 4294901760
        %v2580 = vsub.f32 %v2365, %v2579
        %2581 = vmatpush.xpose.msra.mxu0 %v2580
        %v2582 = vand.u32 %v2331, 4294901760
        %v2583 = vsub.f32 %v2331, %v2582
        %2584 = vmatmul.f32.gmra.mxu0 %v2583
        %v2585 = vpop.f32.mrf.mxu0
        %v2586 = vadd.f32 %v2562, %v2585
        %2587 = vdwg.mxu0
        %2588 = vmatpush.xpose.msra.mxu0 0.0
        %2589 = vmatpush.xpose.msra.mxu0 0.0
        %2590 = vmatpush.xpose.msra.mxu0 0.0
        %2591 = vmatpush.xpose.msra.mxu0 0.0
        %2592 = vmatpush.xpose.msra.mxu0 0.0
        %2593 = vmatpush.xpose.msra.mxu0 0.0
        %2594 = vmatpush.xpose.msra.mxu0 0.0
        %2595 = vmatpush.xpose.msra.mxu0 0.0
        %2596 = vmatpush.xpose.msra.mxu0 0.0
        %2597 = vmatpush.xpose.msra.mxu0 0.0
        %2598 = vmatpush.xpose.msra.mxu0 0.0
        %2599 = vmatpush.xpose.msra.mxu0 0.0
        %2600 = vmatpush.xpose.msra.mxu0 0.0
        %2601 = vmatpush.xpose.msra.mxu0 0.0
        %2602 = vmatpush.xpose.msra.mxu0 0.0
        %v2603 = vand.u32 %v2365, 4294901760
        %2604 = vmatpush.xpose.msra.mxu0 %v2603
        %v2605 = vand.u32 %v2331, 4294901760
        %v2606 = vsub.f32 %v2331, %v2605
        %v2607 = vand.u32 %v2606, 4294901760
        %2608 = vmatmul.f32.gmra.mxu0 %v2607
        %v2609 = vpop.f32.mrf.mxu0
        %v2610 = vadd.f32 %v2586, %v2609
        %2611 = vdwg.mxu0
        %2612 = vmatpush.xpose.msra.mxu0 0.0
        %2613 = vmatpush.xpose.msra.mxu0 0.0
        %2614 = vmatpush.xpose.msra.mxu0 0.0
        %2615 = vmatpush.xpose.msra.mxu0 0.0
        %2616 = vmatpush.xpose.msra.mxu0 0.0
        %2617 = vmatpush.xpose.msra.mxu0 0.0
        %2618 = vmatpush.xpose.msra.mxu0 0.0
        %2619 = vmatpush.xpose.msra.mxu0 0.0
        %2620 = vmatpush.xpose.msra.mxu0 0.0
        %2621 = vmatpush.xpose.msra.mxu0 0.0
        %2622 = vmatpush.xpose.msra.mxu0 0.0
        %2623 = vmatpush.xpose.msra.mxu0 0.0
        %2624 = vmatpush.xpose.msra.mxu0 0.0
        %2625 = vmatpush.xpose.msra.mxu0 0.0
        %2626 = vmatpush.xpose.msra.mxu0 0.0
        %v2627 = vand.u32 %v2365, 4294901760
        %v2628 = vsub.f32 %v2365, %v2627
        %v2629 = vand.u32 %v2628, 4294901760
        %2630 = vmatpush.xpose.msra.mxu0 %v2629
        %v2631 = vand.u32 %v2331, 4294901760
        %2632 = vmatmul.f32.gmra.mxu0 %v2631
        %v2633 = vpop.f32.mrf.mxu0
        %v2634 = vadd.f32 %v2610, %v2633
        %2635 = vdwg.mxu0
        %2636 = vmatpush.xpose.msra.mxu0 0.0
        %2637 = vmatpush.xpose.msra.mxu0 0.0
        %2638 = vmatpush.xpose.msra.mxu0 0.0
        %2639 = vmatpush.xpose.msra.mxu0 0.0
        %2640 = vmatpush.xpose.msra.mxu0 0.0
        %2641 = vmatpush.xpose.msra.mxu0 0.0
        %2642 = vmatpush.xpose.msra.mxu0 0.0
        %2643 = vmatpush.xpose.msra.mxu0 0.0
        %2644 = vmatpush.xpose.msra.mxu0 0.0
        %2645 = vmatpush.xpose.msra.mxu0 0.0
        %2646 = vmatpush.xpose.msra.mxu0 0.0
        %2647 = vmatpush.xpose.msra.mxu0 0.0
        %2648 = vmatpush.xpose.msra.mxu0 0.0
        %2649 = vmatpush.xpose.msra.mxu0 0.0
        %2650 = vmatpush.xpose.msra.mxu0 0.0
        %v2651 = vand.u32 %v2365, 4294901760
        %2652 = vmatpush.xpose.msra.mxu0 %v2651
        %v2653 = vand.u32 %v2331, 4294901760
        %2654 = vmatmul.f32.gmra.mxu0 %v2653
        %v2655 = vpop.f32.mrf.mxu0
        %v2656 = vadd.f32 %v2634, %v2655
        %2657 = vdwg.mxu0
        %v2658 = vld [vmem:[%s6] sm:$0x1]
        %v2660 = vperm.slane %v2658, 0
        %2661 = vset.pattern.permute.xlu0 0
        %2662 = vperm.xlu0 %2661, %v2660
        %v2663 = vpop.permute.xlu0 %2662
        %v2665 = vmul.f32 %v2656, %v2663
        %vm2666 = vcmask 64512
        %v2667 = vsel %vm2666, %v2665, -inf
        %2668 = vmax.xlane.f32.xlu0 %v2667
        %v2669 = vpop.xlane.xlu0 %2668
        %v2670 = vsub.f32 %v2665, %v2669
        %v2671 = vmul.f32 %v2670, 1.442695
        %v2672 = vpow.pop %v2671
        %v2673 = vsel %vm2666, %v2672, 0.0
        %2674 = vadd.xlane.f32.xlu0 %v2673
        %v2675 = vpop.xlane.xlu0 %2674
        %v2676 = vrcp.pop %v2675
        %v2677 = vmul.f32 %v2675, %v2676
        %v2678 = vsub.f32 1.0, %v2677
        %v2679 = vmul.f32 %v2676, %v2678
        %v2680 = vadd.f32 %v2676, %v2679
        %vm2681 = vweird.f32 %v2675
        %vm2682 = vweird.f32 %v2676
        %vm2683 = vmor %vm2681, %vm2682
        %v2684 = vsel %vm2683, %v2676, %v2680
        %v2685 = vand.u32 2147483647, %v2675
        %vm2686 = vcmp.eq.f32.partialorder %v2685, 8.507059e+37
        %v2687 = vand.u32 %v2675, 2147483648
        %v2688 = vor.u32 1.1754944e-38, %v2687
        %v2689 = vsel %vm2686, %v2688, %v2684
        %v2690 = vmul.f32 %v2672, %v2689
        %v2692 = vsel %vm2666, %v2690, 0
        %2694 = vmatpush.msra.mxu0 0.0
        %2695 = vmatpush.msra.mxu0 0.0
        %2696 = vmatpush.msra.mxu0 0.0
        %2697 = vmatpush.msra.mxu0 0.0
        %2698 = vmatpush.msra.mxu0 0.0
        %2699 = vmatpush.msra.mxu0 0.0
        %2700 = vmatpush.msra.mxu0 0.0
        %2701 = vmatpush.msra.mxu0 0.0
        %2702 = vmatpush.msra.mxu0 0.0
        %2703 = vmatpush.msra.mxu0 0.0
        %2704 = vmatpush.msra.mxu0 0.0
        %2705 = vmatpush.msra.mxu0 0.0
        %2706 = vmatpush.msra.mxu0 0.0
        %2707 = vmatpush.msra.mxu0 0.0
        %2708 = vmatpush.msra.mxu0 0.0
        %v2709 = vand.u32 %v2290, 4294901760
        %2710 = vmatpush.msra.mxu0 %v2709
        %v2711 = vand.u32 %v2692, 4294901760
        %v2712 = vsub.f32 %v2692, %v2711
        %v2713 = vand.u32 %v2712, 4294901760
        %v2714 = vsub.f32 %v2712, %v2713
        %v2715 = vand.u32 %v2714, 4294901760
        %2716 = vmatmul.f32.gmra.mxu0 %v2715
        %v2717 = vpop.f32.mrf.mxu0
        %v2718 = vadd.f32 0.0, %v2717
        %2719 = vdwg.mxu0
        %2720 = vmatpush.msra.mxu0 0.0
        %2721 = vmatpush.msra.mxu0 0.0
        %2722 = vmatpush.msra.mxu0 0.0
        %2723 = vmatpush.msra.mxu0 0.0
        %2724 = vmatpush.msra.mxu0 0.0
        %2725 = vmatpush.msra.mxu0 0.0
        %2726 = vmatpush.msra.mxu0 0.0
        %2727 = vmatpush.msra.mxu0 0.0
        %2728 = vmatpush.msra.mxu0 0.0
        %2729 = vmatpush.msra.mxu0 0.0
        %2730 = vmatpush.msra.mxu0 0.0
        %2731 = vmatpush.msra.mxu0 0.0
        %2732 = vmatpush.msra.mxu0 0.0
        %2733 = vmatpush.msra.mxu0 0.0
        %2734 = vmatpush.msra.mxu0 0.0
        %v2735 = vand.u32 %v2290, 4294901760
        %v2736 = vsub.f32 %v2290, %v2735
        %v2737 = vand.u32 %v2736, 4294901760
        %v2738 = vsub.f32 %v2736, %v2737
        %v2739 = vand.u32 %v2738, 4294901760
        %2740 = vmatpush.msra.mxu0 %v2739
        %v2741 = vand.u32 %v2692, 4294901760
        %2742 = vmatmul.f32.gmra.mxu0 %v2741
        %v2743 = vpop.f32.mrf.mxu0
        %v2744 = vadd.f32 %v2718, %v2743
        %2745 = vdwg.mxu0
        %2746 = vmatpush.msra.mxu0 0.0
        %2747 = vmatpush.msra.mxu0 0.0
        %2748 = vmatpush.msra.mxu0 0.0
        %2749 = vmatpush.msra.mxu0 0.0
        %2750 = vmatpush.msra.mxu0 0.0
        %2751 = vmatpush.msra.mxu0 0.0
        %2752 = vmatpush.msra.mxu0 0.0
        %2753 = vmatpush.msra.mxu0 0.0
        %2754 = vmatpush.msra.mxu0 0.0
        %2755 = vmatpush.msra.mxu0 0.0
        %2756 = vmatpush.msra.mxu0 0.0
        %2757 = vmatpush.msra.mxu0 0.0
        %2758 = vmatpush.msra.mxu0 0.0
        %2759 = vmatpush.msra.mxu0 0.0
        %2760 = vmatpush.msra.mxu0 0.0
        %v2761 = vand.u32 %v2290, 4294901760
        %v2762 = vsub.f32 %v2290, %v2761
        %2763 = vmatpush.msra.mxu0 %v2762
        %v2764 = vand.u32 %v2692, 4294901760
        %v2765 = vsub.f32 %v2692, %v2764
        %2766 = vmatmul.f32.gmra.mxu0 %v2765
        %v2767 = vpop.f32.mrf.mxu0
        %v2768 = vadd.f32 %v2744, %v2767
        %2769 = vdwg.mxu0
        %2770 = vmatpush.msra.mxu0 0.0
        %2771 = vmatpush.msra.mxu0 0.0
        %2772 = vmatpush.msra.mxu0 0.0
        %2773 = vmatpush.msra.mxu0 0.0
        %2774 = vmatpush.msra.mxu0 0.0
        %2775 = vmatpush.msra.mxu0 0.0
        %2776 = vmatpush.msra.mxu0 0.0
        %2777 = vmatpush.msra.mxu0 0.0
        %2778 = vmatpush.msra.mxu0 0.0
        %2779 = vmatpush.msra.mxu0 0.0
        %2780 = vmatpush.msra.mxu0 0.0
        %2781 = vmatpush.msra.mxu0 0.0
        %2782 = vmatpush.msra.mxu0 0.0
        %2783 = vmatpush.msra.mxu0 0.0
        %2784 = vmatpush.msra.mxu0 0.0
        %v2785 = vand.u32 %v2290, 4294901760
        %2786 = vmatpush.msra.mxu0 %v2785
        %v2787 = vand.u32 %v2692, 4294901760
        %v2788 = vsub.f32 %v2692, %v2787
        %v2789 = vand.u32 %v2788, 4294901760
        %2790 = vmatmul.f32.gmra.mxu0 %v2789
        %v2791 = vpop.f32.mrf.mxu0
        %v2792 = vadd.f32 %v2768, %v2791
        %2793 = vdwg.mxu0
        %2794 = vmatpush.msra.mxu0 0.0
        %2795 = vmatpush.msra.mxu0 0.0
        %2796 = vmatpush.msra.mxu0 0.0
        %2797 = vmatpush.msra.mxu0 0.0
        %2798 = vmatpush.msra.mxu0 0.0
        %2799 = vmatpush.msra.mxu0 0.0
        %2800 = vmatpush.msra.mxu0 0.0
        %2801 = vmatpush.msra.mxu0 0.0
        %2802 = vmatpush.msra.mxu0 0.0
        %2803 = vmatpush.msra.mxu0 0.0
        %2804 = vmatpush.msra.mxu0 0.0
        %2805 = vmatpush.msra.mxu0 0.0
        %2806 = vmatpush.msra.mxu0 0.0
        %2807 = vmatpush.msra.mxu0 0.0
        %2808 = vmatpush.msra.mxu0 0.0
        %v2809 = vand.u32 %v2290, 4294901760
        %v2810 = vsub.f32 %v2290, %v2809
        %v2811 = vand.u32 %v2810, 4294901760
        %2812 = vmatpush.msra.mxu0 %v2811
        %v2813 = vand.u32 %v2692, 4294901760
        %2814 = vmatmul.f32.gmra.mxu0 %v2813
        %v2815 = vpop.f32.mrf.mxu0
        %v2816 = vadd.f32 %v2792, %v2815
        %2817 = vdwg.mxu0
        %2818 = vmatpush.msra.mxu0 0.0
        %2819 = vmatpush.msra.mxu0 0.0
        %2820 = vmatpush.msra.mxu0 0.0
        %2821 = vmatpush.msra.mxu0 0.0
        %2822 = vmatpush.msra.mxu0 0.0
        %2823 = vmatpush.msra.mxu0 0.0
        %2824 = vmatpush.msra.mxu0 0.0
        %2825 = vmatpush.msra.mxu0 0.0
        %2826 = vmatpush.msra.mxu0 0.0
        %2827 = vmatpush.msra.mxu0 0.0
        %2828 = vmatpush.msra.mxu0 0.0
        %2829 = vmatpush.msra.mxu0 0.0
        %2830 = vmatpush.msra.mxu0 0.0
        %2831 = vmatpush.msra.mxu0 0.0
        %2832 = vmatpush.msra.mxu0 0.0
        %v2833 = vand.u32 %v2290, 4294901760
        %2834 = vmatpush.msra.mxu0 %v2833
        %v2835 = vand.u32 %v2692, 4294901760
        %2836 = vmatmul.f32.gmra.mxu0 %v2835
        %v2837 = vpop.f32.mrf.mxu0
        %v2838 = vadd.f32 %v2816, %v2837
        %2839 = vdwg.mxu0
        %2840 = vmatpush.msra.mxu0 0.0
        %2841 = vmatpush.msra.mxu0 0.0
        %2842 = vmatpush.msra.mxu0 0.0
        %2843 = vmatpush.msra.mxu0 0.0
        %2844 = vmatpush.msra.mxu0 0.0
        %2845 = vmatpush.msra.mxu0 0.0
        %2846 = vmatpush.msra.mxu0 0.0
        %2847 = vmatpush.msra.mxu0 0.0
        %2848 = vmatpush.msra.mxu0 0.0
        %2849 = vmatpush.msra.mxu0 0.0
        %2850 = vmatpush.msra.mxu0 0.0
        %2851 = vmatpush.msra.mxu0 0.0
        %2852 = vmatpush.msra.mxu0 0.0
        %2853 = vmatpush.msra.mxu0 0.0
        %2854 = vmatpush.msra.mxu0 0.0
        %v2855 = vand.u32 %v2291, 4294901760
        %2856 = vmatpush.msra.mxu0 %v2855
        %v2857 = vand.u32 %v2692, 4294901760
        %v2858 = vsub.f32 %v2692, %v2857
        %v2859 = vand.u32 %v2858, 4294901760
        %v2860 = vsub.f32 %v2858, %v2859
        %v2861 = vand.u32 %v2860, 4294901760
        %2862 = vmatmul.f32.gmra.mxu0 %v2861
        %v2863 = vpop.f32.mrf.mxu0
        %v2864 = vadd.f32 0.0, %v2863
        %2865 = vdwg.mxu0
        %2866 = vmatpush.msra.mxu0 0.0
        %2867 = vmatpush.msra.mxu0 0.0
        %2868 = vmatpush.msra.mxu0 0.0
        %2869 = vmatpush.msra.mxu0 0.0
        %2870 = vmatpush.msra.mxu0 0.0
        %2871 = vmatpush.msra.mxu0 0.0
        %2872 = vmatpush.msra.mxu0 0.0
        %2873 = vmatpush.msra.mxu0 0.0
        %2874 = vmatpush.msra.mxu0 0.0
        %2875 = vmatpush.msra.mxu0 0.0
        %2876 = vmatpush.msra.mxu0 0.0
        %2877 = vmatpush.msra.mxu0 0.0
        %2878 = vmatpush.msra.mxu0 0.0
        %2879 = vmatpush.msra.mxu0 0.0
        %2880 = vmatpush.msra.mxu0 0.0
        %v2881 = vand.u32 %v2291, 4294901760
        %v2882 = vsub.f32 %v2291, %v2881
        %v2883 = vand.u32 %v2882, 4294901760
        %v2884 = vsub.f32 %v2882, %v2883
        %v2885 = vand.u32 %v2884, 4294901760
        %2886 = vmatpush.msra.mxu0 %v2885
        %v2887 = vand.u32 %v2692, 4294901760
        %2888 = vmatmul.f32.gmra.mxu0 %v2887
        %v2889 = vpop.f32.mrf.mxu0
        %v2890 = vadd.f32 %v2864, %v2889
        %2891 = vdwg.mxu0
        %2892 = vmatpush.msra.mxu0 0.0
        %2893 = vmatpush.msra.mxu0 0.0
        %2894 = vmatpush.msra.mxu0 0.0
        %2895 = vmatpush.msra.mxu0 0.0
        %2896 = vmatpush.msra.mxu0 0.0
        %2897 = vmatpush.msra.mxu0 0.0
        %2898 = vmatpush.msra.mxu0 0.0
        %2899 = vmatpush.msra.mxu0 0.0
        %2900 = vmatpush.msra.mxu0 0.0
        %2901 = vmatpush.msra.mxu0 0.0
        %2902 = vmatpush.msra.mxu0 0.0
        %2903 = vmatpush.msra.mxu0 0.0
        %2904 = vmatpush.msra.mxu0 0.0
        %2905 = vmatpush.msra.mxu0 0.0
        %2906 = vmatpush.msra.mxu0 0.0
        %v2907 = vand.u32 %v2291, 4294901760
        %v2908 = vsub.f32 %v2291, %v2907
        %2909 = vmatpush.msra.mxu0 %v2908
        %v2910 = vand.u32 %v2692, 4294901760
        %v2911 = vsub.f32 %v2692, %v2910
        %2912 = vmatmul.f32.gmra.mxu0 %v2911
        %v2913 = vpop.f32.mrf.mxu0
        %v2914 = vadd.f32 %v2890, %v2913
        %2915 = vdwg.mxu0
        %2916 = vmatpush.msra.mxu0 0.0
        %2917 = vmatpush.msra.mxu0 0.0
        %2918 = vmatpush.msra.mxu0 0.0
        %2919 = vmatpush.msra.mxu0 0.0
        %2920 = vmatpush.msra.mxu0 0.0
        %2921 = vmatpush.msra.mxu0 0.0
        %2922 = vmatpush.msra.mxu0 0.0
        %2923 = vmatpush.msra.mxu0 0.0
        %2924 = vmatpush.msra.mxu0 0.0
        %2925 = vmatpush.msra.mxu0 0.0
        %2926 = vmatpush.msra.mxu0 0.0
        %2927 = vmatpush.msra.mxu0 0.0
        %2928 = vmatpush.msra.mxu0 0.0
        %2929 = vmatpush.msra.mxu0 0.0
        %2930 = vmatpush.msra.mxu0 0.0
        %v2931 = vand.u32 %v2291, 4294901760
        %2932 = vmatpush.msra.mxu0 %v2931
        %v2933 = vand.u32 %v2692, 4294901760
        %v2934 = vsub.f32 %v2692, %v2933
        %v2935 = vand.u32 %v2934, 4294901760
        %2936 = vmatmul.f32.gmra.mxu0 %v2935
        %v2937 = vpop.f32.mrf.mxu0
        %v2938 = vadd.f32 %v2914, %v2937
        %2939 = vdwg.mxu0
        %2940 = vmatpush.msra.mxu0 0.0
        %2941 = vmatpush.msra.mxu0 0.0
        %2942 = vmatpush.msra.mxu0 0.0
        %2943 = vmatpush.msra.mxu0 0.0
        %2944 = vmatpush.msra.mxu0 0.0
        %2945 = vmatpush.msra.mxu0 0.0
        %2946 = vmatpush.msra.mxu0 0.0
        %2947 = vmatpush.msra.mxu0 0.0
        %2948 = vmatpush.msra.mxu0 0.0
        %2949 = vmatpush.msra.mxu0 0.0
        %2950 = vmatpush.msra.mxu0 0.0
        %2951 = vmatpush.msra.mxu0 0.0
        %2952 = vmatpush.msra.mxu0 0.0
        %2953 = vmatpush.msra.mxu0 0.0
        %2954 = vmatpush.msra.mxu0 0.0
        %v2955 = vand.u32 %v2291, 4294901760
        %v2956 = vsub.f32 %v2291, %v2955
        %v2957 = vand.u32 %v2956, 4294901760
        %2958 = vmatpush.msra.mxu0 %v2957
        %v2959 = vand.u32 %v2692, 4294901760
        %2960 = vmatmul.f32.gmra.mxu0 %v2959
        %v2961 = vpop.f32.mrf.mxu0
        %v2962 = vadd.f32 %v2938, %v2961
        %2963 = vdwg.mxu0
        %2964 = vmatpush.msra.mxu0 0.0
        %2965 = vmatpush.msra.mxu0 0.0
        %2966 = vmatpush.msra.mxu0 0.0
        %2967 = vmatpush.msra.mxu0 0.0
        %2968 = vmatpush.msra.mxu0 0.0
        %2969 = vmatpush.msra.mxu0 0.0
        %2970 = vmatpush.msra.mxu0 0.0
        %2971 = vmatpush.msra.mxu0 0.0
        %2972 = vmatpush.msra.mxu0 0.0
        %2973 = vmatpush.msra.mxu0 0.0
        %2974 = vmatpush.msra.mxu0 0.0
        %2975 = vmatpush.msra.mxu0 0.0
        %2976 = vmatpush.msra.mxu0 0.0
        %2977 = vmatpush.msra.mxu0 0.0
        %2978 = vmatpush.msra.mxu0 0.0
        %v2979 = vand.u32 %v2291, 4294901760
        %2980 = vmatpush.msra.mxu0 %v2979
        %v2981 = vand.u32 %v2692, 4294901760
        %2982 = vmatmul.f32.gmra.mxu0 %v2981
        %v2983 = vpop.f32.mrf.mxu0
        %v2984 = vadd.f32 %v2962, %v2983
        %2985 = vdwg.mxu0
        %v2986 = vmul.f32 %v2296, %v2296
        %v2987 = vmul.f32 %v2297, %v2297
        %v2988 = vadd.f32 %v2986, %v2987
        %2989 = vadd.xlane.f32.xlu0 %v2988
        %v2990 = vpop.xlane.xlu0 %2989
        %v2991 = vrsqrt.pop %v2990
        %v2992 = vmul.f32 %v2991, %v2990
        %v2993 = vmul.f32 %v2992, %v2991
        %v2994 = vmul.f32 0.5, %v2993
        %v2995 = vsub.f32 1.5, %v2994
        %v2996 = vmul.f32 %v2991, %v2995
        %v2997 = vmul.f32 %v2990, %v2996
        %vm2998 = vcmp.eq.f32.partialorder %v2990, inf
        %v2999 = vsel %vm2998, %v2990, %v2997
        %vm3000 = vcmp.eq.f32.partialorder %v2990, 0.0
        %v3001 = vand.u32 %v2990, 2147483648
        %v3002 = vsel %vm3000, %v3001, %v2999
        %v3003 = vmax.f32 %v3002, 1e-12
        %v3004 = vrcp.pop %v3003
        %v3005 = vmul.f32 %v3003, %v3004
        %v3006 = vsub.f32 1.0, %v3005
        %v3007 = vmul.f32 %v3004, %v3006
        %v3008 = vadd.f32 %v3004, %v3007
        %vm3009 = vweird.f32 %v3003
        %vm3010 = vweird.f32 %v3004
        %vm3011 = vmor %vm3009, %vm3010
        %v3012 = vsel %vm3011, %v3004, %v3008
        %v3013 = vand.u32 2147483647, %v3003
        %vm3014 = vcmp.eq.f32.partialorder %v3013, 8.507059e+37
        %v3015 = vand.u32 %v3003, 2147483648
        %v3016 = vor.u32 1.1754944e-38, %v3015
        %v3017 = vsel %vm3014, %v3016, %v3012
        %v3018 = vmul.f32 %v2296, %v3017
        %v3019 = vmul.f32 %v2297, %v3017
        %v3020 = vmul.f32 %v2288, %v2288
        %v3021 = vmul.f32 %v2289, %v2289
        %v3022 = vadd.f32 %v3020, %v3021
        %3023 = vadd.xlane.f32.xlu0 %v3022
        %v3024 = vpop.xlane.xlu0 %3023
        %v3025 = vrsqrt.pop %v3024
        %v3026 = vmul.f32 %v3025, %v3024
        %v3027 = vmul.f32 %v3026, %v3025
        %v3028 = vmul.f32 0.5, %v3027
        %v3029 = vsub.f32 1.5, %v3028
        %v3030 = vmul.f32 %v3025, %v3029
        %v3031 = vmul.f32 %v3024, %v3030
        %vm3032 = vcmp.eq.f32.partialorder %v3024, inf
        %v3033 = vsel %vm3032, %v3024, %v3031
        %vm3034 = vcmp.eq.f32.partialorder %v3024, 0.0
        %v3035 = vand.u32 %v3024, 2147483648
        %v3036 = vsel %vm3034, %v3035, %v3033
        %v3037 = vmax.f32 %v3036, 1e-12
        %v3038 = vrcp.pop %v3037
        %v3039 = vmul.f32 %v3037, %v3038
        %v3040 = vsub.f32 1.0, %v3039
        %v3041 = vmul.f32 %v3038, %v3040
        %v3042 = vadd.f32 %v3038, %v3041
        %vm3043 = vweird.f32 %v3037
        %vm3044 = vweird.f32 %v3038
        %vm3045 = vmor %vm3043, %vm3044
        %v3046 = vsel %vm3045, %v3038, %v3042
        %v3047 = vand.u32 2147483647, %v3037
        %vm3048 = vcmp.eq.f32.partialorder %v3047, 8.507059e+37
        %v3049 = vand.u32 %v3037, 2147483648
        %v3050 = vor.u32 1.1754944e-38, %v3049
        %v3051 = vsel %vm3048, %v3050, %v3046
        %v3052 = vmul.f32 %v2288, %v3051
        %v3053 = vmul.f32 %v2289, %v3051
        %3054 = vmatpush.xpose.msra.mxu0 0.0
        %3055 = vmatpush.xpose.msra.mxu0 0.0
        %3056 = vmatpush.xpose.msra.mxu0 0.0
        %3057 = vmatpush.xpose.msra.mxu0 0.0
        %3058 = vmatpush.xpose.msra.mxu0 0.0
        %3059 = vmatpush.xpose.msra.mxu0 0.0
        %3060 = vmatpush.xpose.msra.mxu0 0.0
        %3061 = vmatpush.xpose.msra.mxu0 0.0
        %3062 = vmatpush.xpose.msra.mxu0 0.0
        %3063 = vmatpush.xpose.msra.mxu0 0.0
        %3064 = vmatpush.xpose.msra.mxu0 0.0
        %3065 = vmatpush.xpose.msra.mxu0 0.0
        %3066 = vmatpush.xpose.msra.mxu0 0.0
        %3067 = vmatpush.xpose.msra.mxu0 0.0
        %3068 = vmatpush.xpose.msra.mxu0 0.0
        %v3069 = vand.u32 %v3052, 4294901760
        %3070 = vmatpush.xpose.msra.mxu0 %v3069
        %v3071 = vand.u32 %v3018, 4294901760
        %v3072 = vsub.f32 %v3018, %v3071
        %v3073 = vand.u32 %v3072, 4294901760
        %v3074 = vsub.f32 %v3072, %v3073
        %v3075 = vand.u32 %v3074, 4294901760
        %3076 = vmatmul.f32.gmra.mxu0 %v3075
        %v3077 = vpop.f32.mrf.mxu0
        %v3078 = vadd.f32 0.0, %v3077
        %3079 = vdwg.mxu0
        %3080 = vmatpush.xpose.msra.mxu0 0.0
        %3081 = vmatpush.xpose.msra.mxu0 0.0
        %3082 = vmatpush.xpose.msra.mxu0 0.0
        %3083 = vmatpush.xpose.msra.mxu0 0.0
        %3084 = vmatpush.xpose.msra.mxu0 0.0
        %3085 = vmatpush.xpose.msra.mxu0 0.0
        %3086 = vmatpush.xpose.msra.mxu0 0.0
        %3087 = vmatpush.xpose.msra.mxu0 0.0
        %3088 = vmatpush.xpose.msra.mxu0 0.0
        %3089 = vmatpush.xpose.msra.mxu0 0.0
        %3090 = vmatpush.xpose.msra.mxu0 0.0
        %3091 = vmatpush.xpose.msra.mxu0 0.0
        %3092 = vmatpush.xpose.msra.mxu0 0.0
        %3093 = vmatpush.xpose.msra.mxu0 0.0
        %3094 = vmatpush.xpose.msra.mxu0 0.0
        %v3095 = vand.u32 %v3052, 4294901760
        %v3096 = vsub.f32 %v3052, %v3095
        %v3097 = vand.u32 %v3096, 4294901760
        %v3098 = vsub.f32 %v3096, %v3097
        %v3099 = vand.u32 %v3098, 4294901760
        %3100 = vmatpush.xpose.msra.mxu0 %v3099
        %v3101 = vand.u32 %v3018, 4294901760
        %3102 = vmatmul.f32.gmra.mxu0 %v3101
        %v3103 = vpop.f32.mrf.mxu0
        %v3104 = vadd.f32 %v3078, %v3103
        %3105 = vdwg.mxu0
        %3106 = vmatpush.xpose.msra.mxu0 0.0
        %3107 = vmatpush.xpose.msra.mxu0 0.0
        %3108 = vmatpush.xpose.msra.mxu0 0.0
        %3109 = vmatpush.xpose.msra.mxu0 0.0
        %3110 = vmatpush.xpose.msra.mxu0 0.0
        %3111 = vmatpush.xpose.msra.mxu0 0.0
        %3112 = vmatpush.xpose.msra.mxu0 0.0
        %3113 = vmatpush.xpose.msra.mxu0 0.0
        %3114 = vmatpush.xpose.msra.mxu0 0.0
        %3115 = vmatpush.xpose.msra.mxu0 0.0
        %3116 = vmatpush.xpose.msra.mxu0 0.0
        %3117 = vmatpush.xpose.msra.mxu0 0.0
        %3118 = vmatpush.xpose.msra.mxu0 0.0
        %3119 = vmatpush.xpose.msra.mxu0 0.0
        %3120 = vmatpush.xpose.msra.mxu0 0.0
        %v3121 = vand.u32 %v3052, 4294901760
        %v3122 = vsub.f32 %v3052, %v3121
        %3123 = vmatpush.xpose.msra.mxu0 %v3122
        %v3124 = vand.u32 %v3018, 4294901760
        %v3125 = vsub.f32 %v3018, %v3124
        %3126 = vmatmul.f32.gmra.mxu0 %v3125
        %v3127 = vpop.f32.mrf.mxu0
        %v3128 = vadd.f32 %v3104, %v3127
        %3129 = vdwg.mxu0
        %3130 = vmatpush.xpose.msra.mxu0 0.0
        %3131 = vmatpush.xpose.msra.mxu0 0.0
        %3132 = vmatpush.xpose.msra.mxu0 0.0
        %3133 = vmatpush.xpose.msra.mxu0 0.0
        %3134 = vmatpush.xpose.msra.mxu0 0.0
        %3135 = vmatpush.xpose.msra.mxu0 0.0
        %3136 = vmatpush.xpose.msra.mxu0 0.0
        %3137 = vmatpush.xpose.msra.mxu0 0.0
        %3138 = vmatpush.xpose.msra.mxu0 0.0
        %3139 = vmatpush.xpose.msra.mxu0 0.0
        %3140 = vmatpush.xpose.msra.mxu0 0.0
        %3141 = vmatpush.xpose.msra.mxu0 0.0
        %3142 = vmatpush.xpose.msra.mxu0 0.0
        %3143 = vmatpush.xpose.msra.mxu0 0.0
        %3144 = vmatpush.xpose.msra.mxu0 0.0
        %v3145 = vand.u32 %v3052, 4294901760
        %3146 = vmatpush.xpose.msra.mxu0 %v3145
        %v3147 = vand.u32 %v3018, 4294901760
        %v3148 = vsub.f32 %v3018, %v3147
        %v3149 = vand.u32 %v3148, 4294901760
        %3150 = vmatmul.f32.gmra.mxu0 %v3149
        %v3151 = vpop.f32.mrf.mxu0
        %v3152 = vadd.f32 %v3128, %v3151
        %3153 = vdwg.mxu0
        %3154 = vmatpush.xpose.msra.mxu0 0.0
        %3155 = vmatpush.xpose.msra.mxu0 0.0
        %3156 = vmatpush.xpose.msra.mxu0 0.0
        %3157 = vmatpush.xpose.msra.mxu0 0.0
        %3158 = vmatpush.xpose.msra.mxu0 0.0
        %3159 = vmatpush.xpose.msra.mxu0 0.0
        %3160 = vmatpush.xpose.msra.mxu0 0.0
        %3161 = vmatpush.xpose.msra.mxu0 0.0
        %3162 = vmatpush.xpose.msra.mxu0 0.0
        %3163 = vmatpush.xpose.msra.mxu0 0.0
        %3164 = vmatpush.xpose.msra.mxu0 0.0
        %3165 = vmatpush.xpose.msra.mxu0 0.0
        %3166 = vmatpush.xpose.msra.mxu0 0.0
        %3167 = vmatpush.xpose.msra.mxu0 0.0
        %3168 = vmatpush.xpose.msra.mxu0 0.0
        %v3169 = vand.u32 %v3052, 4294901760
        %v3170 = vsub.f32 %v3052, %v3169
        %v3171 = vand.u32 %v3170, 4294901760
        %3172 = vmatpush.xpose.msra.mxu0 %v3171
        %v3173 = vand.u32 %v3018, 4294901760
        %3174 = vmatmul.f32.gmra.mxu0 %v3173
        %v3175 = vpop.f32.mrf.mxu0
        %v3176 = vadd.f32 %v3152, %v3175
        %3177 = vdwg.mxu0
        %3178 = vmatpush.xpose.msra.mxu0 0.0
        %3179 = vmatpush.xpose.msra.mxu0 0.0
        %3180 = vmatpush.xpose.msra.mxu0 0.0
        %3181 = vmatpush.xpose.msra.mxu0 0.0
        %3182 = vmatpush.xpose.msra.mxu0 0.0
        %3183 = vmatpush.xpose.msra.mxu0 0.0
        %3184 = vmatpush.xpose.msra.mxu0 0.0
        %3185 = vmatpush.xpose.msra.mxu0 0.0
        %3186 = vmatpush.xpose.msra.mxu0 0.0
        %3187 = vmatpush.xpose.msra.mxu0 0.0
        %3188 = vmatpush.xpose.msra.mxu0 0.0
        %3189 = vmatpush.xpose.msra.mxu0 0.0
        %3190 = vmatpush.xpose.msra.mxu0 0.0
        %3191 = vmatpush.xpose.msra.mxu0 0.0
        %3192 = vmatpush.xpose.msra.mxu0 0.0
        %v3193 = vand.u32 %v3052, 4294901760
        %3194 = vmatpush.xpose.msra.mxu0 %v3193
        %v3195 = vand.u32 %v3018, 4294901760
        %3196 = vmatmul.f32.gmra.mxu0 %v3195
        %v3197 = vpop.f32.mrf.mxu0
        %v3198 = vadd.f32 %v3176, %v3197
        %3199 = vdwg.mxu0
        %3200 = vmatpush.xpose.msra.mxu0 0.0
        %3201 = vmatpush.xpose.msra.mxu0 0.0
        %3202 = vmatpush.xpose.msra.mxu0 0.0
        %3203 = vmatpush.xpose.msra.mxu0 0.0
        %3204 = vmatpush.xpose.msra.mxu0 0.0
        %3205 = vmatpush.xpose.msra.mxu0 0.0
        %3206 = vmatpush.xpose.msra.mxu0 0.0
        %3207 = vmatpush.xpose.msra.mxu0 0.0
        %3208 = vmatpush.xpose.msra.mxu0 0.0
        %3209 = vmatpush.xpose.msra.mxu0 0.0
        %3210 = vmatpush.xpose.msra.mxu0 0.0
        %3211 = vmatpush.xpose.msra.mxu0 0.0
        %3212 = vmatpush.xpose.msra.mxu0 0.0
        %3213 = vmatpush.xpose.msra.mxu0 0.0
        %3214 = vmatpush.xpose.msra.mxu0 0.0
        %v3215 = vand.u32 %v3053, 4294901760
        %3216 = vmatpush.xpose.msra.mxu0 %v3215
        %v3217 = vand.u32 %v3019, 4294901760
        %v3218 = vsub.f32 %v3019, %v3217
        %v3219 = vand.u32 %v3218, 4294901760
        %v3220 = vsub.f32 %v3218, %v3219
        %v3221 = vand.u32 %v3220, 4294901760
        %3222 = vmatmul.f32.gmra.mxu0 %v3221
        %v3223 = vpop.f32.mrf.mxu0
        %v3224 = vadd.f32 %v3198, %v3223
        %3225 = vdwg.mxu0
        %3226 = vmatpush.xpose.msra.mxu0 0.0
        %3227 = vmatpush.xpose.msra.mxu0 0.0
        %3228 = vmatpush.xpose.msra.mxu0 0.0
        %3229 = vmatpush.xpose.msra.mxu0 0.0
        %3230 = vmatpush.xpose.msra.mxu0 0.0
        %3231 = vmatpush.xpose.msra.mxu0 0.0
        %3232 = vmatpush.xpose.msra.mxu0 0.0
        %3233 = vmatpush.xpose.msra.mxu0 0.0
        %3234 = vmatpush.xpose.msra.mxu0 0.0
        %3235 = vmatpush.xpose.msra.mxu0 0.0
        %3236 = vmatpush.xpose.msra.mxu0 0.0
        %3237 = vmatpush.xpose.msra.mxu0 0.0
        %3238 = vmatpush.xpose.msra.mxu0 0.0
        %3239 = vmatpush.xpose.msra.mxu0 0.0
        %3240 = vmatpush.xpose.msra.mxu0 0.0
        %v3241 = vand.u32 %v3053, 4294901760
        %v3242 = vsub.f32 %v3053, %v3241
        %v3243 = vand.u32 %v3242, 4294901760
        %v3244 = vsub.f32 %v3242, %v3243
        %v3245 = vand.u32 %v3244, 4294901760
        %3246 = vmatpush.xpose.msra.mxu0 %v3245
        %v3247 = vand.u32 %v3019, 4294901760
        %3248 = vmatmul.f32.gmra.mxu0 %v3247
        %v3249 = vpop.f32.mrf.mxu0
        %v3250 = vadd.f32 %v3224, %v3249
        %3251 = vdwg.mxu0
        %3252 = vmatpush.xpose.msra.mxu0 0.0
        %3253 = vmatpush.xpose.msra.mxu0 0.0
        %3254 = vmatpush.xpose.msra.mxu0 0.0
        %3255 = vmatpush.xpose.msra.mxu0 0.0
        %3256 = vmatpush.xpose.msra.mxu0 0.0
        %3257 = vmatpush.xpose.msra.mxu0 0.0
        %3258 = vmatpush.xpose.msra.mxu0 0.0
        %3259 = vmatpush.xpose.msra.mxu0 0.0
        %3260 = vmatpush.xpose.msra.mxu0 0.0
        %3261 = vmatpush.xpose.msra.mxu0 0.0
        %3262 = vmatpush.xpose.msra.mxu0 0.0
        %3263 = vmatpush.xpose.msra.mxu0 0.0
        %3264 = vmatpush.xpose.msra.mxu0 0.0
        %3265 = vmatpush.xpose.msra.mxu0 0.0
        %3266 = vmatpush.xpose.msra.mxu0 0.0
        %v3267 = vand.u32 %v3053, 4294901760
        %v3268 = vsub.f32 %v3053, %v3267
        %3269 = vmatpush.xpose.msra.mxu0 %v3268
        %v3270 = vand.u32 %v3019, 4294901760
        %v3271 = vsub.f32 %v3019, %v3270
        %3272 = vmatmul.f32.gmra.mxu0 %v3271
        %v3273 = vpop.f32.mrf.mxu0
        %v3274 = vadd.f32 %v3250, %v3273
        %3275 = vdwg.mxu0
        %3276 = vmatpush.xpose.msra.mxu0 0.0
        %3277 = vmatpush.xpose.msra.mxu0 0.0
        %3278 = vmatpush.xpose.msra.mxu0 0.0
        %3279 = vmatpush.xpose.msra.mxu0 0.0
        %3280 = vmatpush.xpose.msra.mxu0 0.0
        %3281 = vmatpush.xpose.msra.mxu0 0.0
        %3282 = vmatpush.xpose.msra.mxu0 0.0
        %3283 = vmatpush.xpose.msra.mxu0 0.0
        %3284 = vmatpush.xpose.msra.mxu0 0.0
        %3285 = vmatpush.xpose.msra.mxu0 0.0
        %3286 = vmatpush.xpose.msra.mxu0 0.0
        %3287 = vmatpush.xpose.msra.mxu0 0.0
        %3288 = vmatpush.xpose.msra.mxu0 0.0
        %3289 = vmatpush.xpose.msra.mxu0 0.0
        %3290 = vmatpush.xpose.msra.mxu0 0.0
        %v3291 = vand.u32 %v3053, 4294901760
        %3292 = vmatpush.xpose.msra.mxu0 %v3291
        %v3293 = vand.u32 %v3019, 4294901760
        %v3294 = vsub.f32 %v3019, %v3293
        %v3295 = vand.u32 %v3294, 4294901760
        %3296 = vmatmul.f32.gmra.mxu0 %v3295
        %v3297 = vpop.f32.mrf.mxu0
        %v3298 = vadd.f32 %v3274, %v3297
        %3299 = vdwg.mxu0
        %3300 = vmatpush.xpose.msra.mxu0 0.0
        %3301 = vmatpush.xpose.msra.mxu0 0.0
        %3302 = vmatpush.xpose.msra.mxu0 0.0
        %3303 = vmatpush.xpose.msra.mxu0 0.0
        %3304 = vmatpush.xpose.msra.mxu0 0.0
        %3305 = vmatpush.xpose.msra.mxu0 0.0
        %3306 = vmatpush.xpose.msra.mxu0 0.0
        %3307 = vmatpush.xpose.msra.mxu0 0.0
        %3308 = vmatpush.xpose.msra.mxu0 0.0
        %3309 = vmatpush.xpose.msra.mxu0 0.0
        %3310 = vmatpush.xpose.msra.mxu0 0.0
        %3311 = vmatpush.xpose.msra.mxu0 0.0
        %3312 = vmatpush.xpose.msra.mxu0 0.0
        %3313 = vmatpush.xpose.msra.mxu0 0.0
        %3314 = vmatpush.xpose.msra.mxu0 0.0
        %v3315 = vand.u32 %v3053, 4294901760
        %v3316 = vsub.f32 %v3053, %v3315
        %v3317 = vand.u32 %v3316, 4294901760
        %3318 = vmatpush.xpose.msra.mxu0 %v3317
        %v3319 = vand.u32 %v3019, 4294901760
        %3320 = vmatmul.f32.gmra.mxu0 %v3319
        %v3321 = vpop.f32.mrf.mxu0
        %v3322 = vadd.f32 %v3298, %v3321
        %3323 = vdwg.mxu0
        %3324 = vmatpush.xpose.msra.mxu0 0.0
        %3325 = vmatpush.xpose.msra.mxu0 0.0
        %3326 = vmatpush.xpose.msra.mxu0 0.0
        %3327 = vmatpush.xpose.msra.mxu0 0.0
        %3328 = vmatpush.xpose.msra.mxu0 0.0
        %3329 = vmatpush.xpose.msra.mxu0 0.0
        %3330 = vmatpush.xpose.msra.mxu0 0.0
        %3331 = vmatpush.xpose.msra.mxu0 0.0
        %3332 = vmatpush.xpose.msra.mxu0 0.0
        %3333 = vmatpush.xpose.msra.mxu0 0.0
        %3334 = vmatpush.xpose.msra.mxu0 0.0
        %3335 = vmatpush.xpose.msra.mxu0 0.0
        %3336 = vmatpush.xpose.msra.mxu0 0.0
        %3337 = vmatpush.xpose.msra.mxu0 0.0
        %3338 = vmatpush.xpose.msra.mxu0 0.0
        %v3339 = vand.u32 %v3053, 4294901760
        %3340 = vmatpush.xpose.msra.mxu0 %v3339
        %v3341 = vand.u32 %v3019, 4294901760
        %3342 = vmatmul.f32.gmra.mxu0 %v3341
        %v3343 = vpop.f32.mrf.mxu0
        %v3344 = vadd.f32 %v3322, %v3343
        %3345 = vdwg.mxu0
        %s3346 = scalar_lea.vmem %s6, 1
        %v3347 = vld [vmem:[%s3346] sm:$0x1]
        %v3349 = vperm.slane %v3347, 0
        %3350 = vset.pattern.permute.xlu0 0
        %3351 = vperm.xlu0 %3350, %v3349
        %v3352 = vpop.permute.xlu0 %3351
        %v3354 = vmul.f32 %v3344, %v3352
        %v3355 = vsel %vm2666, %v3354, -inf
        %3356 = vmax.xlane.f32.xlu0 %v3355
        %v3357 = vpop.xlane.xlu0 %3356
        %v3358 = vsub.f32 %v3354, %v3357
        %v3359 = vmul.f32 %v3358, 1.442695
        %v3360 = vpow.pop %v3359
        %v3361 = vsel %vm2666, %v3360, 0.0
        %3362 = vadd.xlane.f32.xlu0 %v3361
        %v3363 = vpop.xlane.xlu0 %3362
        %v3364 = vrcp.pop %v3363
        %v3365 = vmul.f32 %v3363, %v3364
        %v3366 = vsub.f32 1.0, %v3365
        %v3367 = vmul.f32 %v3364, %v3366
        %v3368 = vadd.f32 %v3364, %v3367
        %vm3369 = vweird.f32 %v3363
        %vm3370 = vweird.f32 %v3364
        %vm3371 = vmor %vm3369, %vm3370
        %v3372 = vsel %vm3371, %v3364, %v3368
        %v3373 = vand.u32 2147483647, %v3363
        %vm3374 = vcmp.eq.f32.partialorder %v3373, 8.507059e+37
        %v3375 = vand.u32 %v3363, 2147483648
        %v3376 = vor.u32 1.1754944e-38, %v3375
        %v3377 = vsel %vm3374, %v3376, %v3372
        %v3378 = vmul.f32 %v3360, %v3377
        %v3380 = vsel %vm2666, %v3378, 0
        %3382 = vmatpush.msra.mxu0 0.0
        %3383 = vmatpush.msra.mxu0 0.0
        %3384 = vmatpush.msra.mxu0 0.0
        %3385 = vmatpush.msra.mxu0 0.0
        %3386 = vmatpush.msra.mxu0 0.0
        %3387 = vmatpush.msra.mxu0 0.0
        %3388 = vmatpush.msra.mxu0 0.0
        %3389 = vmatpush.msra.mxu0 0.0
        %3390 = vmatpush.msra.mxu0 0.0
        %3391 = vmatpush.msra.mxu0 0.0
        %3392 = vmatpush.msra.mxu0 0.0
        %3393 = vmatpush.msra.mxu0 0.0
        %3394 = vmatpush.msra.mxu0 0.0
        %3395 = vmatpush.msra.mxu0 0.0
        %3396 = vmatpush.msra.mxu0 0.0
        %v3397 = vand.u32 %v2292, 4294901760
        %3398 = vmatpush.msra.mxu0 %v3397
        %v3399 = vand.u32 %v3380, 4294901760
        %v3400 = vsub.f32 %v3380, %v3399
        %v3401 = vand.u32 %v3400, 4294901760
        %v3402 = vsub.f32 %v3400, %v3401
        %v3403 = vand.u32 %v3402, 4294901760
        %3404 = vmatmul.f32.gmra.mxu0 %v3403
        %v3405 = vpop.f32.mrf.mxu0
        %v3406 = vadd.f32 0.0, %v3405
        %3407 = vdwg.mxu0
        %3408 = vmatpush.msra.mxu0 0.0
        %3409 = vmatpush.msra.mxu0 0.0
        %3410 = vmatpush.msra.mxu0 0.0
        %3411 = vmatpush.msra.mxu0 0.0
        %3412 = vmatpush.msra.mxu0 0.0
        %3413 = vmatpush.msra.mxu0 0.0
        %3414 = vmatpush.msra.mxu0 0.0
        %3415 = vmatpush.msra.mxu0 0.0
        %3416 = vmatpush.msra.mxu0 0.0
        %3417 = vmatpush.msra.mxu0 0.0
        %3418 = vmatpush.msra.mxu0 0.0
        %3419 = vmatpush.msra.mxu0 0.0
        %3420 = vmatpush.msra.mxu0 0.0
        %3421 = vmatpush.msra.mxu0 0.0
        %3422 = vmatpush.msra.mxu0 0.0
        %v3423 = vand.u32 %v2292, 4294901760
        %v3424 = vsub.f32 %v2292, %v3423
        %v3425 = vand.u32 %v3424, 4294901760
        %v3426 = vsub.f32 %v3424, %v3425
        %v3427 = vand.u32 %v3426, 4294901760
        %3428 = vmatpush.msra.mxu0 %v3427
        %v3429 = vand.u32 %v3380, 4294901760
        %3430 = vmatmul.f32.gmra.mxu0 %v3429
        %v3431 = vpop.f32.mrf.mxu0
        %v3432 = vadd.f32 %v3406, %v3431
        %3433 = vdwg.mxu0
        %3434 = vmatpush.msra.mxu0 0.0
        %3435 = vmatpush.msra.mxu0 0.0
        %3436 = vmatpush.msra.mxu0 0.0
        %3437 = vmatpush.msra.mxu0 0.0
        %3438 = vmatpush.msra.mxu0 0.0
        %3439 = vmatpush.msra.mxu0 0.0
        %3440 = vmatpush.msra.mxu0 0.0
        %3441 = vmatpush.msra.mxu0 0.0
        %3442 = vmatpush.msra.mxu0 0.0
        %3443 = vmatpush.msra.mxu0 0.0
        %3444 = vmatpush.msra.mxu0 0.0
        %3445 = vmatpush.msra.mxu0 0.0
        %3446 = vmatpush.msra.mxu0 0.0
        %3447 = vmatpush.msra.mxu0 0.0
        %3448 = vmatpush.msra.mxu0 0.0
        %v3449 = vand.u32 %v2292, 4294901760
        %v3450 = vsub.f32 %v2292, %v3449
        %3451 = vmatpush.msra.mxu0 %v3450
        %v3452 = vand.u32 %v3380, 4294901760
        %v3453 = vsub.f32 %v3380, %v3452
        %3454 = vmatmul.f32.gmra.mxu0 %v3453
        %v3455 = vpop.f32.mrf.mxu0
        %v3456 = vadd.f32 %v3432, %v3455
        %3457 = vdwg.mxu0
        %3458 = vmatpush.msra.mxu0 0.0
        %3459 = vmatpush.msra.mxu0 0.0
        %3460 = vmatpush.msra.mxu0 0.0
        %3461 = vmatpush.msra.mxu0 0.0
        %3462 = vmatpush.msra.mxu0 0.0
        %3463 = vmatpush.msra.mxu0 0.0
        %3464 = vmatpush.msra.mxu0 0.0
        %3465 = vmatpush.msra.mxu0 0.0
        %3466 = vmatpush.msra.mxu0 0.0
        %3467 = vmatpush.msra.mxu0 0.0
        %3468 = vmatpush.msra.mxu0 0.0
        %3469 = vmatpush.msra.mxu0 0.0
        %3470 = vmatpush.msra.mxu0 0.0
        %3471 = vmatpush.msra.mxu0 0.0
        %3472 = vmatpush.msra.mxu0 0.0
        %v3473 = vand.u32 %v2292, 4294901760
        %3474 = vmatpush.msra.mxu0 %v3473
        %v3475 = vand.u32 %v3380, 4294901760
        %v3476 = vsub.f32 %v3380, %v3475
        %v3477 = vand.u32 %v3476, 4294901760
        %3478 = vmatmul.f32.gmra.mxu0 %v3477
        %v3479 = vpop.f32.mrf.mxu0
        %v3480 = vadd.f32 %v3456, %v3479
        %3481 = vdwg.mxu0
        %3482 = vmatpush.msra.mxu0 0.0
        %3483 = vmatpush.msra.mxu0 0.0
        %3484 = vmatpush.msra.mxu0 0.0
        %3485 = vmatpush.msra.mxu0 0.0
        %3486 = vmatpush.msra.mxu0 0.0
        %3487 = vmatpush.msra.mxu0 0.0
        %3488 = vmatpush.msra.mxu0 0.0
        %3489 = vmatpush.msra.mxu0 0.0
        %3490 = vmatpush.msra.mxu0 0.0
        %3491 = vmatpush.msra.mxu0 0.0
        %3492 = vmatpush.msra.mxu0 0.0
        %3493 = vmatpush.msra.mxu0 0.0
        %3494 = vmatpush.msra.mxu0 0.0
        %3495 = vmatpush.msra.mxu0 0.0
        %3496 = vmatpush.msra.mxu0 0.0
        %v3497 = vand.u32 %v2292, 4294901760
        %v3498 = vsub.f32 %v2292, %v3497
        %v3499 = vand.u32 %v3498, 4294901760
        %3500 = vmatpush.msra.mxu0 %v3499
        %v3501 = vand.u32 %v3380, 4294901760
        %3502 = vmatmul.f32.gmra.mxu0 %v3501
        %v3503 = vpop.f32.mrf.mxu0
        %v3504 = vadd.f32 %v3480, %v3503
        %3505 = vdwg.mxu0
        %3506 = vmatpush.msra.mxu0 0.0
        %3507 = vmatpush.msra.mxu0 0.0
        %3508 = vmatpush.msra.mxu0 0.0
        %3509 = vmatpush.msra.mxu0 0.0
        %3510 = vmatpush.msra.mxu0 0.0
        %3511 = vmatpush.msra.mxu0 0.0
        %3512 = vmatpush.msra.mxu0 0.0
        %3513 = vmatpush.msra.mxu0 0.0
        %3514 = vmatpush.msra.mxu0 0.0
        %3515 = vmatpush.msra.mxu0 0.0
        %3516 = vmatpush.msra.mxu0 0.0
        %3517 = vmatpush.msra.mxu0 0.0
        %3518 = vmatpush.msra.mxu0 0.0
        %3519 = vmatpush.msra.mxu0 0.0
        %3520 = vmatpush.msra.mxu0 0.0
        %v3521 = vand.u32 %v2292, 4294901760
        %3522 = vmatpush.msra.mxu0 %v3521
        %v3523 = vand.u32 %v3380, 4294901760
        %3524 = vmatmul.f32.gmra.mxu0 %v3523
        %v3525 = vpop.f32.mrf.mxu0
        %v3526 = vadd.f32 %v3504, %v3525
        %3527 = vdwg.mxu0
        %3528 = vmatpush.msra.mxu0 0.0
        %3529 = vmatpush.msra.mxu0 0.0
        %3530 = vmatpush.msra.mxu0 0.0
        %3531 = vmatpush.msra.mxu0 0.0
        %3532 = vmatpush.msra.mxu0 0.0
        %3533 = vmatpush.msra.mxu0 0.0
        %3534 = vmatpush.msra.mxu0 0.0
        %3535 = vmatpush.msra.mxu0 0.0
        %3536 = vmatpush.msra.mxu0 0.0
        %3537 = vmatpush.msra.mxu0 0.0
        %3538 = vmatpush.msra.mxu0 0.0
        %3539 = vmatpush.msra.mxu0 0.0
        %3540 = vmatpush.msra.mxu0 0.0
        %3541 = vmatpush.msra.mxu0 0.0
        %3542 = vmatpush.msra.mxu0 0.0
        %v3543 = vand.u32 %v2293, 4294901760
        %3544 = vmatpush.msra.mxu0 %v3543
        %v3545 = vand.u32 %v3380, 4294901760
        %v3546 = vsub.f32 %v3380, %v3545
        %v3547 = vand.u32 %v3546, 4294901760
        %v3548 = vsub.f32 %v3546, %v3547
        %v3549 = vand.u32 %v3548, 4294901760
        %3550 = vmatmul.f32.gmra.mxu0 %v3549
        %v3551 = vpop.f32.mrf.mxu0
        %v3552 = vadd.f32 0.0, %v3551
        %3553 = vdwg.mxu0
        %3554 = vmatpush.msra.mxu0 0.0
        %3555 = vmatpush.msra.mxu0 0.0
        %3556 = vmatpush.msra.mxu0 0.0
        %3557 = vmatpush.msra.mxu0 0.0
        %3558 = vmatpush.msra.mxu0 0.0
        %3559 = vmatpush.msra.mxu0 0.0
        %3560 = vmatpush.msra.mxu0 0.0
        %3561 = vmatpush.msra.mxu0 0.0
        %3562 = vmatpush.msra.mxu0 0.0
        %3563 = vmatpush.msra.mxu0 0.0
        %3564 = vmatpush.msra.mxu0 0.0
        %3565 = vmatpush.msra.mxu0 0.0
        %3566 = vmatpush.msra.mxu0 0.0
        %3567 = vmatpush.msra.mxu0 0.0
        %3568 = vmatpush.msra.mxu0 0.0
        %v3569 = vand.u32 %v2293, 4294901760
        %v3570 = vsub.f32 %v2293, %v3569
        %v3571 = vand.u32 %v3570, 4294901760
        %v3572 = vsub.f32 %v3570, %v3571
        %v3573 = vand.u32 %v3572, 4294901760
        %3574 = vmatpush.msra.mxu0 %v3573
        %v3575 = vand.u32 %v3380, 4294901760
        %3576 = vmatmul.f32.gmra.mxu0 %v3575
        %v3577 = vpop.f32.mrf.mxu0
        %v3578 = vadd.f32 %v3552, %v3577
        %3579 = vdwg.mxu0
        %3580 = vmatpush.msra.mxu0 0.0
        %3581 = vmatpush.msra.mxu0 0.0
        %3582 = vmatpush.msra.mxu0 0.0
        %3583 = vmatpush.msra.mxu0 0.0
        %3584 = vmatpush.msra.mxu0 0.0
        %3585 = vmatpush.msra.mxu0 0.0
        %3586 = vmatpush.msra.mxu0 0.0
        %3587 = vmatpush.msra.mxu0 0.0
        %3588 = vmatpush.msra.mxu0 0.0
        %3589 = vmatpush.msra.mxu0 0.0
        %3590 = vmatpush.msra.mxu0 0.0
        %3591 = vmatpush.msra.mxu0 0.0
        %3592 = vmatpush.msra.mxu0 0.0
        %3593 = vmatpush.msra.mxu0 0.0
        %3594 = vmatpush.msra.mxu0 0.0
        %v3595 = vand.u32 %v2293, 4294901760
        %v3596 = vsub.f32 %v2293, %v3595
        %3597 = vmatpush.msra.mxu0 %v3596
        %v3598 = vand.u32 %v3380, 4294901760
        %v3599 = vsub.f32 %v3380, %v3598
        %3600 = vmatmul.f32.gmra.mxu0 %v3599
        %v3601 = vpop.f32.mrf.mxu0
        %v3602 = vadd.f32 %v3578, %v3601
        %3603 = vdwg.mxu0
        %3604 = vmatpush.msra.mxu0 0.0
        %3605 = vmatpush.msra.mxu0 0.0
        %3606 = vmatpush.msra.mxu0 0.0
        %3607 = vmatpush.msra.mxu0 0.0
        %3608 = vmatpush.msra.mxu0 0.0
        %3609 = vmatpush.msra.mxu0 0.0
        %3610 = vmatpush.msra.mxu0 0.0
        %3611 = vmatpush.msra.mxu0 0.0
        %3612 = vmatpush.msra.mxu0 0.0
        %3613 = vmatpush.msra.mxu0 0.0
        %3614 = vmatpush.msra.mxu0 0.0
        %3615 = vmatpush.msra.mxu0 0.0
        %3616 = vmatpush.msra.mxu0 0.0
        %3617 = vmatpush.msra.mxu0 0.0
        %3618 = vmatpush.msra.mxu0 0.0
        %v3619 = vand.u32 %v2293, 4294901760
        %3620 = vmatpush.msra.mxu0 %v3619
        %v3621 = vand.u32 %v3380, 4294901760
        %v3622 = vsub.f32 %v3380, %v3621
        %v3623 = vand.u32 %v3622, 4294901760
        %3624 = vmatmul.f32.gmra.mxu0 %v3623
        %v3625 = vpop.f32.mrf.mxu0
        %v3626 = vadd.f32 %v3602, %v3625
        %3627 = vdwg.mxu0
        %3628 = vmatpush.msra.mxu0 0.0
        %3629 = vmatpush.msra.mxu0 0.0
        %3630 = vmatpush.msra.mxu0 0.0
        %3631 = vmatpush.msra.mxu0 0.0
        %3632 = vmatpush.msra.mxu0 0.0
        %3633 = vmatpush.msra.mxu0 0.0
        %3634 = vmatpush.msra.mxu0 0.0
        %3635 = vmatpush.msra.mxu0 0.0
        %3636 = vmatpush.msra.mxu0 0.0
        %3637 = vmatpush.msra.mxu0 0.0
        %3638 = vmatpush.msra.mxu0 0.0
        %3639 = vmatpush.msra.mxu0 0.0
        %3640 = vmatpush.msra.mxu0 0.0
        %3641 = vmatpush.msra.mxu0 0.0
        %3642 = vmatpush.msra.mxu0 0.0
        %v3643 = vand.u32 %v2293, 4294901760
        %v3644 = vsub.f32 %v2293, %v3643
        %v3645 = vand.u32 %v3644, 4294901760
        %3646 = vmatpush.msra.mxu0 %v3645
        %v3647 = vand.u32 %v3380, 4294901760
        %3648 = vmatmul.f32.gmra.mxu0 %v3647
        %v3649 = vpop.f32.mrf.mxu0
        %v3650 = vadd.f32 %v3626, %v3649
        %3651 = vdwg.mxu0
        %3652 = vmatpush.msra.mxu0 0.0
        %3653 = vmatpush.msra.mxu0 0.0
        %3654 = vmatpush.msra.mxu0 0.0
        %3655 = vmatpush.msra.mxu0 0.0
        %3656 = vmatpush.msra.mxu0 0.0
        %3657 = vmatpush.msra.mxu0 0.0
        %3658 = vmatpush.msra.mxu0 0.0
        %3659 = vmatpush.msra.mxu0 0.0
        %3660 = vmatpush.msra.mxu0 0.0
        %3661 = vmatpush.msra.mxu0 0.0
        %3662 = vmatpush.msra.mxu0 0.0
        %3663 = vmatpush.msra.mxu0 0.0
        %3664 = vmatpush.msra.mxu0 0.0
        %3665 = vmatpush.msra.mxu0 0.0
        %3666 = vmatpush.msra.mxu0 0.0
        %v3667 = vand.u32 %v2293, 4294901760
        %3668 = vmatpush.msra.mxu0 %v3667
        %v3669 = vand.u32 %v3380, 4294901760
        %3670 = vmatmul.f32.gmra.mxu0 %v3669
        %v3671 = vpop.f32.mrf.mxu0
        %v3672 = vadd.f32 %v3650, %v3671
        %3673 = vdwg.mxu0
        %v3674 = vld [vmem:[%s7] sm:$0xff]
        %v3675 = vld [vmem:[%s7 + $0x8] sm:$0xff]
        %v3676 = vld [vmem:[%s8] sm:$0xff]
        %v3677 = vld [vmem:[%s8 + $0x8] sm:$0xff]
        %3679 = vset.pattern.permute.xlu0 0
        %3680 = vperm.xlu0 %3679, %v3676
        %v3681 = vpop.permute.xlu0 %3680
        %3684 = vset.pattern.permute.xlu0 0
        %3685 = vperm.xlu0 %3684, %v3677
        %v3686 = vpop.permute.xlu0 %3685
        %v3689 = vsel %vm1255, %v3674, 0
        %v3692 = vsel %vm1255, %v3675, 0
        %3694 = vmatpush.msra.mxu0 0.0
        %3695 = vmatpush.msra.mxu0 0.0
        %3696 = vmatpush.msra.mxu0 0.0
        %3697 = vmatpush.msra.mxu0 0.0
        %3698 = vmatpush.msra.mxu0 0.0
        %3699 = vmatpush.msra.mxu0 0.0
        %3700 = vmatpush.msra.mxu0 0.0
        %3701 = vmatpush.msra.mxu0 0.0
        %3702 = vmatpush.msra.mxu0 0.0
        %3703 = vmatpush.msra.mxu0 0.0
        %3704 = vmatpush.msra.mxu0 0.0
        %3705 = vmatpush.msra.mxu0 0.0
        %3706 = vmatpush.msra.mxu0 0.0
        %3707 = vmatpush.msra.mxu0 0.0
        %v3708 = vand.u32 %v3526, 4294901760
        %3709 = vmatpush.msra.mxu0 %v3708
        %v3710 = vand.u32 %v2838, 4294901760
        %3711 = vmatpush.msra.mxu0 %v3710
        %v3712 = vand.u32 %v3689, 4294901760
        %v3713 = vsub.f32 %v3689, %v3712
        %v3714 = vand.u32 %v3713, 4294901760
        %v3715 = vsub.f32 %v3713, %v3714
        %v3716 = vand.u32 %v3715, 4294901760
        %3717 = vmatmul.f32.gmra.mxu0 %v3716
        %v3718 = vpop.f32.mrf.mxu0
        %v3719 = vadd.f32 %v3681, %v3718
        %v3720 = vand.u32 %v3692, 4294901760
        %v3721 = vsub.f32 %v3692, %v3720
        %v3722 = vand.u32 %v3721, 4294901760
        %v3723 = vsub.f32 %v3721, %v3722
        %v3724 = vand.u32 %v3723, 4294901760
        %3725 = vmatmul.f32.gmra.mxu0 %v3724
        %v3726 = vpop.f32.mrf.mxu0
        %v3727 = vadd.f32 %v3686, %v3726
        %3728 = vdwg.mxu0
        %3729 = vmatpush.msra.mxu0 0.0
        %3730 = vmatpush.msra.mxu0 0.0
        %3731 = vmatpush.msra.mxu0 0.0
        %3732 = vmatpush.msra.mxu0 0.0
        %3733 = vmatpush.msra.mxu0 0.0
        %3734 = vmatpush.msra.mxu0 0.0
        %3735 = vmatpush.msra.mxu0 0.0
        %3736 = vmatpush.msra.mxu0 0.0
        %3737 = vmatpush.msra.mxu0 0.0
        %3738 = vmatpush.msra.mxu0 0.0
        %3739 = vmatpush.msra.mxu0 0.0
        %3740 = vmatpush.msra.mxu0 0.0
        %3741 = vmatpush.msra.mxu0 0.0
        %3742 = vmatpush.msra.mxu0 0.0
        %v3743 = vand.u32 %v3526, 4294901760
        %v3744 = vsub.f32 %v3526, %v3743
        %v3745 = vand.u32 %v3744, 4294901760
        %v3746 = vsub.f32 %v3744, %v3745
        %v3747 = vand.u32 %v3746, 4294901760
        %3748 = vmatpush.msra.mxu0 %v3747
        %v3749 = vand.u32 %v2838, 4294901760
        %v3750 = vsub.f32 %v2838, %v3749
        %v3751 = vand.u32 %v3750, 4294901760
        %v3752 = vsub.f32 %v3750, %v3751
        %v3753 = vand.u32 %v3752, 4294901760
        %3754 = vmatpush.msra.mxu0 %v3753
        %v3755 = vand.u32 %v3689, 4294901760
        %3756 = vmatmul.f32.gmra.mxu0 %v3755
        %v3757 = vpop.f32.mrf.mxu0
        %v3758 = vadd.f32 %v3719, %v3757
        %v3759 = vand.u32 %v3692, 4294901760
        %3760 = vmatmul.f32.gmra.mxu0 %v3759
        %v3761 = vpop.f32.mrf.mxu0
        %v3762 = vadd.f32 %v3727, %v3761
        %3763 = vdwg.mxu0
        %3764 = vmatpush.msra.mxu0 0.0
        %3765 = vmatpush.msra.mxu0 0.0
        %3766 = vmatpush.msra.mxu0 0.0
        %3767 = vmatpush.msra.mxu0 0.0
        %3768 = vmatpush.msra.mxu0 0.0
        %3769 = vmatpush.msra.mxu0 0.0
        %3770 = vmatpush.msra.mxu0 0.0
        %3771 = vmatpush.msra.mxu0 0.0
        %3772 = vmatpush.msra.mxu0 0.0
        %3773 = vmatpush.msra.mxu0 0.0
        %3774 = vmatpush.msra.mxu0 0.0
        %3775 = vmatpush.msra.mxu0 0.0
        %3776 = vmatpush.msra.mxu0 0.0
        %3777 = vmatpush.msra.mxu0 0.0
        %v3778 = vand.u32 %v3526, 4294901760
        %v3779 = vsub.f32 %v3526, %v3778
        %3780 = vmatpush.msra.mxu0 %v3779
        %v3781 = vand.u32 %v2838, 4294901760
        %v3782 = vsub.f32 %v2838, %v3781
        %3783 = vmatpush.msra.mxu0 %v3782
        %v3784 = vand.u32 %v3689, 4294901760
        %v3785 = vsub.f32 %v3689, %v3784
        %3786 = vmatmul.f32.gmra.mxu0 %v3785
        %v3787 = vpop.f32.mrf.mxu0
        %v3788 = vadd.f32 %v3758, %v3787
        %v3789 = vand.u32 %v3692, 4294901760
        %v3790 = vsub.f32 %v3692, %v3789
        %3791 = vmatmul.f32.gmra.mxu0 %v3790
        %v3792 = vpop.f32.mrf.mxu0
        %v3793 = vadd.f32 %v3762, %v3792
        %3794 = vdwg.mxu0
        %3795 = vmatpush.msra.mxu0 0.0
        %3796 = vmatpush.msra.mxu0 0.0
        %3797 = vmatpush.msra.mxu0 0.0
        %3798 = vmatpush.msra.mxu0 0.0
        %3799 = vmatpush.msra.mxu0 0.0
        %3800 = vmatpush.msra.mxu0 0.0
        %3801 = vmatpush.msra.mxu0 0.0
        %3802 = vmatpush.msra.mxu0 0.0
        %3803 = vmatpush.msra.mxu0 0.0
        %3804 = vmatpush.msra.mxu0 0.0
        %3805 = vmatpush.msra.mxu0 0.0
        %3806 = vmatpush.msra.mxu0 0.0
        %3807 = vmatpush.msra.mxu0 0.0
        %3808 = vmatpush.msra.mxu0 0.0
        %v3809 = vand.u32 %v3526, 4294901760
        %3810 = vmatpush.msra.mxu0 %v3809
        %v3811 = vand.u32 %v2838, 4294901760
        %3812 = vmatpush.msra.mxu0 %v3811
        %v3813 = vand.u32 %v3689, 4294901760
        %v3814 = vsub.f32 %v3689, %v3813
        %v3815 = vand.u32 %v3814, 4294901760
        %3816 = vmatmul.f32.gmra.mxu0 %v3815
        %v3817 = vpop.f32.mrf.mxu0
        %v3818 = vadd.f32 %v3788, %v3817
        %v3819 = vand.u32 %v3692, 4294901760
        %v3820 = vsub.f32 %v3692, %v3819
        %v3821 = vand.u32 %v3820, 4294901760
        %3822 = vmatmul.f32.gmra.mxu0 %v3821
        %v3823 = vpop.f32.mrf.mxu0
        %v3824 = vadd.f32 %v3793, %v3823
        %3825 = vdwg.mxu0
        %3826 = vmatpush.msra.mxu0 0.0
        %3827 = vmatpush.msra.mxu0 0.0
        %3828 = vmatpush.msra.mxu0 0.0
        %3829 = vmatpush.msra.mxu0 0.0
        %3830 = vmatpush.msra.mxu0 0.0
        %3831 = vmatpush.msra.mxu0 0.0
        %3832 = vmatpush.msra.mxu0 0.0
        %3833 = vmatpush.msra.mxu0 0.0
        %3834 = vmatpush.msra.mxu0 0.0
        %3835 = vmatpush.msra.mxu0 0.0
        %3836 = vmatpush.msra.mxu0 0.0
        %3837 = vmatpush.msra.mxu0 0.0
        %3838 = vmatpush.msra.mxu0 0.0
        %3839 = vmatpush.msra.mxu0 0.0
        %v3840 = vand.u32 %v3526, 4294901760
        %v3841 = vsub.f32 %v3526, %v3840
        %v3842 = vand.u32 %v3841, 4294901760
        %3843 = vmatpush.msra.mxu0 %v3842
        %v3844 = vand.u32 %v2838, 4294901760
        %v3845 = vsub.f32 %v2838, %v3844
        %v3846 = vand.u32 %v3845, 4294901760
        %3847 = vmatpush.msra.mxu0 %v3846
        %v3848 = vand.u32 %v3689, 4294901760
        %3849 = vmatmul.f32.gmra.mxu0 %v3848
        %v3850 = vpop.f32.mrf.mxu0
        %v3851 = vadd.f32 %v3818, %v3850
        %v3852 = vand.u32 %v3692, 4294901760
        %3853 = vmatmul.f32.gmra.mxu0 %v3852
        %v3854 = vpop.f32.mrf.mxu0
        %v3855 = vadd.f32 %v3824, %v3854
        %3856 = vdwg.mxu0
        %3857 = vmatpush.msra.mxu0 0.0
        %3858 = vmatpush.msra.mxu0 0.0
        %3859 = vmatpush.msra.mxu0 0.0
        %3860 = vmatpush.msra.mxu0 0.0
        %3861 = vmatpush.msra.mxu0 0.0
        %3862 = vmatpush.msra.mxu0 0.0
        %3863 = vmatpush.msra.mxu0 0.0
        %3864 = vmatpush.msra.mxu0 0.0
        %3865 = vmatpush.msra.mxu0 0.0
        %3866 = vmatpush.msra.mxu0 0.0
        %3867 = vmatpush.msra.mxu0 0.0
        %3868 = vmatpush.msra.mxu0 0.0
        %3869 = vmatpush.msra.mxu0 0.0
        %3870 = vmatpush.msra.mxu0 0.0
        %v3871 = vand.u32 %v3526, 4294901760
        %3872 = vmatpush.msra.mxu0 %v3871
        %v3873 = vand.u32 %v2838, 4294901760
        %3874 = vmatpush.msra.mxu0 %v3873
        %v3875 = vand.u32 %v3689, 4294901760
        %3876 = vmatmul.f32.gmra.mxu0 %v3875
        %v3877 = vpop.f32.mrf.mxu0
        %v3878 = vadd.f32 %v3851, %v3877
        %v3879 = vand.u32 %v3692, 4294901760
        %3880 = vmatmul.f32.gmra.mxu0 %v3879
        %v3881 = vpop.f32.mrf.mxu0
        %v3882 = vadd.f32 %v3855, %v3881
        %3883 = vdwg.mxu0
        %3884 = vmatpush.msra.mxu0 0.0
        %3885 = vmatpush.msra.mxu0 0.0
        %3886 = vmatpush.msra.mxu0 0.0
        %3887 = vmatpush.msra.mxu0 0.0
        %3888 = vmatpush.msra.mxu0 0.0
        %3889 = vmatpush.msra.mxu0 0.0
        %3890 = vmatpush.msra.mxu0 0.0
        %3891 = vmatpush.msra.mxu0 0.0
        %3892 = vmatpush.msra.mxu0 0.0
        %3893 = vmatpush.msra.mxu0 0.0
        %3894 = vmatpush.msra.mxu0 0.0
        %3895 = vmatpush.msra.mxu0 0.0
        %3896 = vmatpush.msra.mxu0 0.0
        %3897 = vmatpush.msra.mxu0 0.0
        %v3898 = vand.u32 %v3672, 4294901760
        %3899 = vmatpush.msra.mxu0 %v3898
        %v3900 = vand.u32 %v2984, 4294901760
        %3901 = vmatpush.msra.mxu0 %v3900
        %v3902 = vand.u32 %v3689, 4294901760
        %v3903 = vsub.f32 %v3689, %v3902
        %v3904 = vand.u32 %v3903, 4294901760
        %v3905 = vsub.f32 %v3903, %v3904
        %v3906 = vand.u32 %v3905, 4294901760
        %3907 = vmatmul.f32.gmra.mxu0 %v3906
        %v3908 = vpop.f32.mrf.mxu0
        %v3909 = vadd.f32 %v3681, %v3908
        %v3910 = vand.u32 %v3692, 4294901760
        %v3911 = vsub.f32 %v3692, %v3910
        %v3912 = vand.u32 %v3911, 4294901760
        %v3913 = vsub.f32 %v3911, %v3912
        %v3914 = vand.u32 %v3913, 4294901760
        %3915 = vmatmul.f32.gmra.mxu0 %v3914
        %v3916 = vpop.f32.mrf.mxu0
        %v3917 = vadd.f32 %v3686, %v3916
        %3918 = vdwg.mxu0
        %3919 = vmatpush.msra.mxu0 0.0
        %3920 = vmatpush.msra.mxu0 0.0
        %3921 = vmatpush.msra.mxu0 0.0
        %3922 = vmatpush.msra.mxu0 0.0
        %3923 = vmatpush.msra.mxu0 0.0
        %3924 = vmatpush.msra.mxu0 0.0
        %3925 = vmatpush.msra.mxu0 0.0
        %3926 = vmatpush.msra.mxu0 0.0
        %3927 = vmatpush.msra.mxu0 0.0
        %3928 = vmatpush.msra.mxu0 0.0
        %3929 = vmatpush.msra.mxu0 0.0
        %3930 = vmatpush.msra.mxu0 0.0
        %3931 = vmatpush.msra.mxu0 0.0
        %3932 = vmatpush.msra.mxu0 0.0
        %v3933 = vand.u32 %v3672, 4294901760
        %v3934 = vsub.f32 %v3672, %v3933
        %v3935 = vand.u32 %v3934, 4294901760
        %v3936 = vsub.f32 %v3934, %v3935
        %v3937 = vand.u32 %v3936, 4294901760
        %3938 = vmatpush.msra.mxu0 %v3937
        %v3939 = vand.u32 %v2984, 4294901760
        %v3940 = vsub.f32 %v2984, %v3939
        %v3941 = vand.u32 %v3940, 4294901760
        %v3942 = vsub.f32 %v3940, %v3941
        %v3943 = vand.u32 %v3942, 4294901760
        %3944 = vmatpush.msra.mxu0 %v3943
        %v3945 = vand.u32 %v3689, 4294901760
        %3946 = vmatmul.f32.gmra.mxu0 %v3945
        %v3947 = vpop.f32.mrf.mxu0
        %v3948 = vadd.f32 %v3909, %v3947
        %v3949 = vand.u32 %v3692, 4294901760
        %3950 = vmatmul.f32.gmra.mxu0 %v3949
        %v3951 = vpop.f32.mrf.mxu0
        %v3952 = vadd.f32 %v3917, %v3951
        %3953 = vdwg.mxu0
        %3954 = vmatpush.msra.mxu0 0.0
        %3955 = vmatpush.msra.mxu0 0.0
        %3956 = vmatpush.msra.mxu0 0.0
        %3957 = vmatpush.msra.mxu0 0.0
        %3958 = vmatpush.msra.mxu0 0.0
        %3959 = vmatpush.msra.mxu0 0.0
        %3960 = vmatpush.msra.mxu0 0.0
        %3961 = vmatpush.msra.mxu0 0.0
        %3962 = vmatpush.msra.mxu0 0.0
        %3963 = vmatpush.msra.mxu0 0.0
        %3964 = vmatpush.msra.mxu0 0.0
        %3965 = vmatpush.msra.mxu0 0.0
        %3966 = vmatpush.msra.mxu0 0.0
        %3967 = vmatpush.msra.mxu0 0.0
        %v3968 = vand.u32 %v3672, 4294901760
        %v3969 = vsub.f32 %v3672, %v3968
        %3970 = vmatpush.msra.mxu0 %v3969
        %v3971 = vand.u32 %v2984, 4294901760
        %v3972 = vsub.f32 %v2984, %v3971
        %3973 = vmatpush.msra.mxu0 %v3972
        %v3974 = vand.u32 %v3689, 4294901760
        %v3975 = vsub.f32 %v3689, %v3974
        %3976 = vmatmul.f32.gmra.mxu0 %v3975
        %v3977 = vpop.f32.mrf.mxu0
        %v3978 = vadd.f32 %v3948, %v3977
        %v3979 = vand.u32 %v3692, 4294901760
        %v3980 = vsub.f32 %v3692, %v3979
        %3981 = vmatmul.f32.gmra.mxu0 %v3980
        %v3982 = vpop.f32.mrf.mxu0
        %v3983 = vadd.f32 %v3952, %v3982
        %3984 = vdwg.mxu0
        %3985 = vmatpush.msra.mxu0 0.0
        %3986 = vmatpush.msra.mxu0 0.0
        %3987 = vmatpush.msra.mxu0 0.0
        %3988 = vmatpush.msra.mxu0 0.0
        %3989 = vmatpush.msra.mxu0 0.0
        %3990 = vmatpush.msra.mxu0 0.0
        %3991 = vmatpush.msra.mxu0 0.0
        %3992 = vmatpush.msra.mxu0 0.0
        %3993 = vmatpush.msra.mxu0 0.0
        %3994 = vmatpush.msra.mxu0 0.0
        %3995 = vmatpush.msra.mxu0 0.0
        %3996 = vmatpush.msra.mxu0 0.0
        %3997 = vmatpush.msra.mxu0 0.0
        %3998 = vmatpush.msra.mxu0 0.0
        %v3999 = vand.u32 %v3672, 4294901760
        %4000 = vmatpush.msra.mxu0 %v3999
        %v4001 = vand.u32 %v2984, 4294901760
        %4002 = vmatpush.msra.mxu0 %v4001
        %v4003 = vand.u32 %v3689, 4294901760
        %v4004 = vsub.f32 %v3689, %v4003
        %v4005 = vand.u32 %v4004, 4294901760
        %4006 = vmatmul.f32.gmra.mxu0 %v4005
        %v4007 = vpop.f32.mrf.mxu0
        %v4008 = vadd.f32 %v3978, %v4007
        %v4009 = vand.u32 %v3692, 4294901760
        %v4010 = vsub.f32 %v3692, %v4009
        %v4011 = vand.u32 %v4010, 4294901760
        %4012 = vmatmul.f32.gmra.mxu0 %v4011
        %v4013 = vpop.f32.mrf.mxu0
        %v4014 = vadd.f32 %v3983, %v4013
        %4015 = vdwg.mxu0
        %4016 = vmatpush.msra.mxu0 0.0
        %4017 = vmatpush.msra.mxu0 0.0
        %4018 = vmatpush.msra.mxu0 0.0
        %4019 = vmatpush.msra.mxu0 0.0
        %4020 = vmatpush.msra.mxu0 0.0
        %4021 = vmatpush.msra.mxu0 0.0
        %4022 = vmatpush.msra.mxu0 0.0
        %4023 = vmatpush.msra.mxu0 0.0
        %4024 = vmatpush.msra.mxu0 0.0
        %4025 = vmatpush.msra.mxu0 0.0
        %4026 = vmatpush.msra.mxu0 0.0
        %4027 = vmatpush.msra.mxu0 0.0
        %4028 = vmatpush.msra.mxu0 0.0
        %4029 = vmatpush.msra.mxu0 0.0
        %v4030 = vand.u32 %v3672, 4294901760
        %v4031 = vsub.f32 %v3672, %v4030
        %v4032 = vand.u32 %v4031, 4294901760
        %4033 = vmatpush.msra.mxu0 %v4032
        %v4034 = vand.u32 %v2984, 4294901760
        %v4035 = vsub.f32 %v2984, %v4034
        %v4036 = vand.u32 %v4035, 4294901760
        %4037 = vmatpush.msra.mxu0 %v4036
        %v4038 = vand.u32 %v3689, 4294901760
        %4039 = vmatmul.f32.gmra.mxu0 %v4038
        %v4040 = vpop.f32.mrf.mxu0
        %v4041 = vadd.f32 %v4008, %v4040
        %v4042 = vand.u32 %v3692, 4294901760
        %4043 = vmatmul.f32.gmra.mxu0 %v4042
        %v4044 = vpop.f32.mrf.mxu0
        %v4045 = vadd.f32 %v4014, %v4044
        %4046 = vdwg.mxu0
        %4047 = vmatpush.msra.mxu0 0.0
        %4048 = vmatpush.msra.mxu0 0.0
        %4049 = vmatpush.msra.mxu0 0.0
        %4050 = vmatpush.msra.mxu0 0.0
        %4051 = vmatpush.msra.mxu0 0.0
        %4052 = vmatpush.msra.mxu0 0.0
        %4053 = vmatpush.msra.mxu0 0.0
        %4054 = vmatpush.msra.mxu0 0.0
        %4055 = vmatpush.msra.mxu0 0.0
        %4056 = vmatpush.msra.mxu0 0.0
        %4057 = vmatpush.msra.mxu0 0.0
        %4058 = vmatpush.msra.mxu0 0.0
        %4059 = vmatpush.msra.mxu0 0.0
        %4060 = vmatpush.msra.mxu0 0.0
        %v4061 = vand.u32 %v3672, 4294901760
        %4062 = vmatpush.msra.mxu0 %v4061
        %v4063 = vand.u32 %v2984, 4294901760
        %4064 = vmatpush.msra.mxu0 %v4063
        %v4065 = vand.u32 %v3689, 4294901760
        %4066 = vmatmul.f32.gmra.mxu0 %v4065
        %v4067 = vpop.f32.mrf.mxu0
        %v4068 = vadd.f32 %v4041, %v4067
        %v4069 = vand.u32 %v3692, 4294901760
        %4070 = vmatmul.f32.gmra.mxu0 %v4069
        %v4071 = vpop.f32.mrf.mxu0
        %v4072 = vadd.f32 %v4045, %v4071
        %4073 = vdwg.mxu0
        %4074 = vst [vmem:[%s325] sm:$0xff] %v3878
        %4075 = vst [vmem:[%s325 + $0x8] sm:$0xff] %v4068
        %4076 = vst [vmem:[%s325 + $0x10] sm:$0xff] %v3882
        %4077 = vst [vmem:[%s325 + $0x18] sm:$0xff] %v4072
        %s4078 = sand.u32 %s225, 1
        %s4079 = scalar_lea.sflag [#allocation3], %s4078
        %s4080 = sand.u32 %s225, 1
        %s4081 = smul.addr %s4080, 32
        %s4082 = scalar_lea.vmem [#allocation2], %s4081
        // Predicated region
        $region57: #{tpu_custom_call.1} parent=55 // pred_check
          %p4083 = pneg %p235
        $region58: #{tpu_custom_call.1} parent=55 // pred_check_branch
          %4085 = sbr.rel (%p4083) target = $region60
        $region59: #{tpu_custom_call.1} parent=55 // pred_region
          %4087 = vsyncadd %s4079, 0
          %s4088 = smul.addr %s23, 4
          %s4089 = smul.addr %s4088, 8
          %s4090 = scalar_lea.hbm %s9, %s4089
          %s4091 = sshll.u32 %s4082, 4
          %s4092 = int_to_ptr.vmem [resolvable:$true] %s4091
          %s4093 = sshll.u32 %s4090, 4
          %s4094 = int_to_ptr.hbm [resolvable:$true] %s4093
          %4099 = dma.vmem_to_hbm [thread:$0]  %s4092, 512, %s4094, %s4079, 256, 256, 16
        $region60: #{tpu_custom_call.1} parent=55 // pred_fallthru
          _
      $region56: #{tpu_custom_call.1} parent=5 // pred_fallthru
        _
      %p4100 = scmp.le.s32.totalorder 2, %s18
      // Predicated region
      $region61: #{tpu_custom_call.1} parent=5 // pred_check
        %p4101 = pneg %p4100
      $region62: #{tpu_custom_call.1} parent=5 // pred_check_branch
        %4103 = sbr.rel (%p4101) target = $region64
      $region63: #{tpu_custom_call.1} parent=5 // pred_region
        %s4104 = ssub.s32 %s18, 2
        // Predicated region
        $region65: #{tpu_custom_call.1} parent=63 // pred_check
          %p4105 = pneg %p241
        $region66: #{tpu_custom_call.1} parent=63 // pred_check_branch
          %4107 = sbr.rel (%p4105) target = $region68
        $region67: #{tpu_custom_call.1} parent=63 // pred_region
          %s4108 = sand.u32 %s226, 1
          %s4109 = scalar_lea.sflag [#allocation3], %s4108
          %s4110 = sand.u32 %s226, 1
          %s4111 = smul.addr %s4110, 32
          %s4112 = scalar_lea.vmem [#allocation2], %s4111
          %4114 = dma.done %s4109, 512
        $region68: #{tpu_custom_call.1} parent=63 // pred_fallthru
          _
      $region64: #{tpu_custom_call.1} parent=5 // pred_fallthru
        _
    $region6: #{tpu_custom_call.1} parent=1 // loop_footer
      %s22 = sadd.s32 1, %s18
    $region7: #{tpu_custom_call.1} parent=1 // loop_footer_branch
      %17 = sbr.rel target = $region3
    $region8: #{tpu_custom_call.1} parent=1 // loop_exit
      _
    %4115 = vsyncpa [#allocation3], 1
    %s4116 = scalar_lea.sflag [#allocation3], 1
    %4117 = vsyncpa %s4116, 1

</llo_original>
